<compile_context>
chip_gen: v6e
topology: v6e:2x2x1
jax: 0.10.0
libtpu: 0.0.40
codegen_flags: <defaults>
</compile_context>

<pallas_src>
import math
import functools

import jax
import jax.numpy as jnp
from jax.experimental import pallas as pl
from jax.experimental.pallas import tpu as pltpu

LN_EPS = 1e-5  # torch.nn.LayerNorm default


def _layer_norm(z, g, b):
    mu = jnp.mean(z, axis=-1, keepdims=True)
    var = jnp.mean(jnp.square(z - mu), axis=-1, keepdims=True)
    return (z - mu) * jax.lax.rsqrt(var + LN_EPS) * g + b


def encoder_kernel(x_ref, pe_ref,
                   wqkv_ref, bqkv_ref, wo_ref, bo_ref,
                   g1_ref, be1_ref, w1_ref, b1_ref, w2_ref, b2_ref,
                   g2_ref, be2_ref,
                   o_ref, *, n_heads):
    layer = pl.program_id(1)

    # Layer 0: initialise the resident output block (used as the layer-to-layer
    # activation carry) with x + positional encoding.
    @pl.when(layer == 0)
    def _():
        o_ref[...] = x_ref[...] + pe_ref[...]

    bn, L, D = o_ref.shape
    H = n_heads
    E = D // H
    M = bn * L
    scale = 1.0 / math.sqrt(E)          # FullAttention softmax_temp default

    wqkv = wqkv_ref[0]                  # [D, 3D]; bf16 in the fast path
    wdt = wqkv.dtype                    # matmul input dtype (bf16 or f32)

    h = o_ref[...].reshape(M, D)        # [M, D] f32 activations entering layer

    # Fused QKV projection: one [M, D] @ [D, 3D] MXU pass, f32 accumulation.
    qkv = jnp.dot(h.astype(wdt), wqkv,
                  preferred_element_type=jnp.float32) + bqkv_ref[0]   # [M, 3D]
    qkv3 = qkv.reshape(bn, L, 3 * D)    # single reshape to the head layout

    # Multi-head attention: heads looped (see header), batch dim batched per
    # einsum.  Scores / softmax / AV kept in f32 (tiny compute, better
    # accuracy); head outputs concatenated once for a single K=128 Wo matmul.
    heads = []
    for hd in range(H):
        q_h = qkv3[:, :, 0 * D + hd * E: 0 * D + (hd + 1) * E]   # [bn, L, E]
        k_h = qkv3[:, :, 1 * D + hd * E: 1 * D + (hd + 1) * E]
        v_h = qkv3[:, :, 2 * D + hd * E: 2 * D + (hd + 1) * E]
        s = jnp.einsum('nle,nme->nlm', q_h, k_h,
                       preferred_element_type=jnp.float32) * scale   # [bn, L, L]
        s = s - jnp.max(s, axis=-1, keepdims=True)
        p = jnp.exp(s)
        p = p / jnp.sum(p, axis=-1, keepdims=True)   # exact softmax normalise
        heads.append(jnp.einsum('nlm,nme->nle', p, v_h,
                                preferred_element_type=jnp.float32))  # [bn,L,E]

    o_cat = jnp.concatenate(heads, axis=-1).reshape(M, D)            # [M, D]
    attn = jnp.dot(o_cat.astype(wdt), wo_ref[0],
                   preferred_element_type=jnp.float32) + bo_ref[0]

    # Residual + norm1 + feed-forward (relu) + residual + norm2 (post-norm).
    x1 = h + attn
    x2 = _layer_norm(x1, g1_ref[0], be1_ref[0])
    y = jnp.dot(x2.astype(wdt), w1_ref[0],
                preferred_element_type=jnp.float32) + b1_ref[0]
    y = jnp.maximum(y, 0.0)
    y = jnp.dot(y.astype(wdt), w2_ref[0],
                preferred_element_type=jnp.float32) + b2_ref[0]
    out = _layer_norm(x2 + y, g2_ref[0], be2_ref[0])

    o_ref[...] = out.reshape(bn, L, D).astype(o_ref.dtype)


PARAM_KEYS = ("wqkv", "bqkv", "wo", "bo",
              "g1", "be1", "w1", "b1", "w2", "b2", "g2", "be2")
WEIGHT_KEYS = frozenset({"wqkv", "wo", "w1", "w2"})   # streamed, bf16-castable


def encoder_forward(x, params, n_heads, *, batch_block=None,
                    compute_dtype=jnp.bfloat16):
    """Full encoder (all layers) in one pallas_call.

    batch_block=None processes the whole batch per grid step.  Keep it None:
    splitting the batch re-streams every per-layer weight block (weights are
    indexed only by the layer axis) in a weight-DMA-bound regime and shrinks
    the MXU sublane fill; on v7x, sharding across the two TensorCores would
    additionally need CORE_PARALLEL semantics and only pays once the kernel is
    compute-bound with M >= 256 per core.

    compute_dtype is the dtype of the streamed weight matrices and of the
    weight-matmul inputs (accumulation is always f32).  bfloat16 halves the
    per-layer weight HBM traffic and runs the MXU at native rate; pass
    jnp.float32 for a bit-accurate numerical check.
    """
    N, L, D = x.shape
    n_layers = params["wqkv"].shape[0]
    bn = N if batch_block is None else batch_block
    assert N % bn == 0 and D % n_heads == 0

    pe = positional_encoding_1d(L, D).astype(x.dtype)
    # Cast weights ONCE here so the HBM copies streamed per layer are already
    # in compute_dtype; biases / LN params stay f32 (negligible bytes).
    plist = [params[k].astype(compute_dtype) if k in WEIGHT_KEYS else params[k]
             for k in PARAM_KEYS]

    in_specs = [pl.BlockSpec((bn, L, D), lambda b, l: (b, 0, 0)),   # x (layer 0 only)
                pl.BlockSpec((L, D), lambda b, l: (0, 0))]          # PE (resident)
    for p in plist:                                                  # per-layer params
        in_specs.append(pl.BlockSpec((1,) + p.shape[1:], lambda b, l: (l, 0, 0)))

    # NOTE: at realistic D/F the double-buffered per-layer weights are the VMEM
    # budget to watch (v7x has 64 MiB physical); tile the FFN over F or set
    # pltpu.CompilerParams(vmem_limit_bytes=...) before scaling up.
    return pl.pallas_call(
        functools.partial(encoder_kernel, n_heads=n_heads),
        out_shape=jax.ShapeDtypeStruct((N, L, D), x.dtype),
        grid=(N // bn, n_layers),
        in_specs=in_specs,
        out_specs=pl.BlockSpec((bn, L, D), lambda b, l: (b, 0, 0)),
        compiler_params=pltpu.CompilerParams(
            dimension_semantics=("parallel", "arbitrary")),
    )(x, pe, *plist)


def positional_encoding_1d(length, d_model, temp=10000.0):
    if d_model % 2 != 0:
        raise ValueError("d_model must be even")
    pos = jnp.arange(length, dtype=jnp.float32)[:, None]
    div = jnp.exp(jnp.arange(0, d_model, 2, dtype=jnp.float32) *
                  (-math.log(temp) / d_model))
    pe = jnp.zeros((length, d_model), jnp.float32)
    pe = pe.at[:, 0::2].set(jnp.sin(pos * div))
    pe = pe.at[:, 1::2].set(jnp.cos(pos * div))
    return pe


def init_encoder_params(key, n_layers, d_model, d_ff):
    D, F = d_model, d_ff
    sd = 0.02

    def w(k, *shape):
        return jax.random.normal(k, shape, jnp.float32) * sd

    ks = jax.random.split(key, 8)
    return dict(
        wqkv=w(ks[0], n_layers, D, 3 * D),       # [Wq | Wk | Wv], x @ W layout
        bqkv=w(ks[1], n_layers, 1, 3 * D),
        wo=w(ks[2], n_layers, D, D),
        bo=w(ks[3], n_layers, 1, D),
        g1=jnp.ones((n_layers, 1, D), jnp.float32),
        be1=jnp.zeros((n_layers, 1, D), jnp.float32),
        w1=w(ks[4], n_layers, D, F),
        b1=w(ks[5], n_layers, 1, F),
        w2=w(ks[6], n_layers, F, D),
        b2=w(ks[7], n_layers, 1, D),
        g2=jnp.ones((n_layers, 1, D), jnp.float32),
        be2=jnp.zeros((n_layers, 1, D), jnp.float32),
    )


def encoder_reference(x, params, n_heads):
    """Pure-JAX f32 reference with identical semantics (for a sanity check)."""
    N, L, D = x.shape
    E = D // n_heads
    n_layers = params["wqkv"].shape[0]
    with jax.default_matmul_precision("highest"):
        h = x + positional_encoding_1d(L, D)[None]
        for l in range(n_layers):
            hf = h.reshape(N * L, D)
            qkv = hf @ params["wqkv"][l] + params["bqkv"][l]
            q = qkv[:, :D].reshape(N, L, n_heads, E)
            k = qkv[:, D:2 * D].reshape(N, L, n_heads, E)
            v = qkv[:, 2 * D:].reshape(N, L, n_heads, E)
            s = jnp.einsum("nlhe,nmhe->nhlm", q, k) / math.sqrt(E)
            p = jax.nn.softmax(s, axis=-1)
            o = jnp.einsum("nhlm,nmhe->nlhe", p, v).reshape(N * L, D)
            attn = o @ params["wo"][l] + params["bo"][l]
            x2 = _layer_norm(hf + attn, params["g1"][l], params["be1"][l])
            y = jnp.maximum(x2 @ params["w1"][l] + params["b1"][l], 0.0)
            y = y @ params["w2"][l] + params["b2"][l]
            h = _layer_norm(x2 + y, params["g2"][l],
                            params["be2"][l]).reshape(N, L, D)
    return h


if __name__ == "__main__":
    # Small, TPU-friendly shapes consistent with the module's conventions:
    # batch N=2, seq L=16, d_model D=128, heads H=4 (head dim 32), d_ff=256,
    # n_layers=2.
    N, L, D, H, F, N_LAYERS = 2, 16, 128, 4, 256, 2

    key = jax.random.PRNGKey(0)
    kx, kp = jax.random.split(key)
    x = jax.random.normal(kx, (N, L, D), jnp.float32)
    params = init_encoder_params(kp, N_LAYERS, D, F)

    # Fast path: bf16 weights / matmul inputs, f32 accumulation.
    out = jax.block_until_ready(encoder_forward(x, params, H))
    assert out.shape == (N, L, D)

    ref = encoder_reference(x, params, H)

    # Tight correctness check: identical kernel with full-f32 weights (catches
    # layout/indexing bugs that a loose tolerance would mask).
    out_f32 = jax.block_until_ready(
        encoder_forward(x, params, H, compute_dtype=jnp.float32))
    err_f32 = float(jnp.max(jnp.abs(out_f32 - ref)))
    assert err_f32 < 1e-3, f"f32 kernel mismatch vs reference: {err_f32}"

    # Loose check on the bf16-weight fast path (bf16 rounding of weights and
    # matmul inputs, f32 accumulation, two layers of compounding).
    err_bf16 = float(jnp.max(jnp.abs(out - ref)))
    assert err_bf16 < 5e-2, f"bf16 kernel mismatch vs reference: {err_bf16}"

    print("KERNEL_OK")
</pallas_src>

<mosaic_0001>
module attributes {stable_mosaic.version = 11 : i64} {
  func.func @encoder_kernel(%arg0: i32, %arg1: i32, %arg2: memref<2x16x128xf32, #tpu.memory_space<vmem>>, %arg3: memref<16x128xf32, #tpu.memory_space<vmem>>, %arg4: memref<1x128x384xbf16, #tpu.memory_space<vmem>>, %arg5: memref<1x1x384xf32, #tpu.memory_space<vmem>>, %arg6: memref<1x128x128xbf16, #tpu.memory_space<vmem>>, %arg7: memref<1x1x128xf32, #tpu.memory_space<vmem>>, %arg8: memref<1x1x128xf32, #tpu.memory_space<vmem>>, %arg9: memref<1x1x128xf32, #tpu.memory_space<vmem>>, %arg10: memref<1x128x256xbf16, #tpu.memory_space<vmem>>, %arg11: memref<1x1x256xf32, #tpu.memory_space<vmem>>, %arg12: memref<1x256x128xbf16, #tpu.memory_space<vmem>>, %arg13: memref<1x1x128xf32, #tpu.memory_space<vmem>>, %arg14: memref<1x1x128xf32, #tpu.memory_space<vmem>>, %arg15: memref<1x1x128xf32, #tpu.memory_space<vmem>>, %arg16: memref<2x16x128xf32, #tpu.memory_space<vmem>>) attributes {dimension_semantics = [#tpu.dimension_semantics<parallel>, #tpu.dimension_semantics<arbitrary>], iteration_bounds = array<i64: 1, 2>, scalar_prefetch = 0 : i64, scratch_operands = 0 : i64, tpu.core_type = #tpu.core_type<tc>, window_params = [{transform_indices = @transform_0, window_bounds = array<i64: 2, 16, 128>}, {pipeline_mode = #tpu.pipeline_mode<synchronous>, transform_indices = @transform_1, window_bounds = array<i64: 16, 128>}, {transform_indices = @transform_2, window_bounds = array<i64: 1, 128, 384>}, {transform_indices = @transform_3, window_bounds = array<i64: 1, 1, 384>}, {transform_indices = @transform_4, window_bounds = array<i64: 1, 128, 128>}, {transform_indices = @transform_5, window_bounds = array<i64: 1, 1, 128>}, {transform_indices = @transform_6, window_bounds = array<i64: 1, 1, 128>}, {transform_indices = @transform_7, window_bounds = array<i64: 1, 1, 128>}, {transform_indices = @transform_8, window_bounds = array<i64: 1, 128, 256>}, {transform_indices = @transform_9, window_bounds = array<i64: 1, 1, 256>}, {transform_indices = @transform_10, window_bounds = array<i64: 1, 256, 128>}, {transform_indices = @transform_11, window_bounds = array<i64: 1, 1, 128>}, {transform_indices = @transform_12, window_bounds = array<i64: 1, 1, 128>}, {transform_indices = @transform_13, window_bounds = array<i64: 1, 1, 128>}, {transform_indices = @transform_14, window_bounds = array<i64: 2, 16, 128>}]} {
    %c0_i32 = arith.constant 0 : i32
    %0 = arith.cmpi eq, %arg1, %c0_i32 : i32
    %1 = arith.extui %0 : i1 to i32
    %c0_i32_0 = arith.constant 0 : i32
    %2 = arith.cmpi ne, %1, %c0_i32_0 : i32
    scf.if %2 {
      %c0_76 = arith.constant 0 : index
      %c0_77 = arith.constant 0 : index
      %c0_78 = arith.constant 0 : index
      %162 = vector.load %arg2[%c0_76, %c0_77, %c0_78] : memref<2x16x128xf32, #tpu.memory_space<vmem>>, vector<2x16x128xf32>
      %c0_79 = arith.constant 0 : index
      %c0_80 = arith.constant 0 : index
      %163 = vector.load %arg3[%c0_79, %c0_80] : memref<16x128xf32, #tpu.memory_space<vmem>>, vector<16x128xf32>
      %164 = vector.shape_cast %163 : vector<16x128xf32> to vector<1x16x128xf32>
      %165 = vector.broadcast %164 : vector<1x16x128xf32> to vector<2x16x128xf32>
      %166 = arith.addf %162, %165 : vector<2x16x128xf32>
      %c0_81 = arith.constant 0 : index
      %c0_82 = arith.constant 0 : index
      %c0_83 = arith.constant 0 : index
      %167 = vector.load %arg16[%c0_81, %c0_82, %c0_83] : memref<2x16x128xf32, #tpu.memory_space<vmem>>, vector<2x16x128xf32>
      tpu.vector_store %arg16[%c0_81, %c0_82, %c0_83], %166 {strides = array<i32>} : memref<2x16x128xf32, #tpu.memory_space<vmem>>, vector<2x16x128xf32>,
    } else {
    }
    %c0 = arith.constant 0 : index
    %c0_1 = arith.constant 0 : index
    %c0_2 = arith.constant 0 : index
    %3 = vector.load %arg4[%c0, %c0_1, %c0_2] : memref<1x128x384xbf16, #tpu.memory_space<vmem>>, vector<1x128x384xbf16>
    %4 = vector.shape_cast %3 : vector<1x128x384xbf16> to vector<128x384xbf16>
    %c0_3 = arith.constant 0 : index
    %c0_4 = arith.constant 0 : index
    %c0_5 = arith.constant 0 : index
    %5 = vector.load %arg16[%c0_3, %c0_4, %c0_5] : memref<2x16x128xf32, #tpu.memory_space<vmem>>, vector<2x16x128xf32>
    %6 = vector.shape_cast %5 : vector<2x16x128xf32> to vector<32x128xf32>
    %7 = arith.truncf %6 : vector<32x128xf32> to vector<32x128xbf16>
    %cst = arith.constant dense<0.000000e+00> : vector<32x384xf32>
    %8 = tpu.matmul %7, %4, %cst {dimension_numbers = #tpu.dot_dimension_numbers<[1], [0], [0], [1], [0, 0, 1, 1], [], []>} : vector<32x128xbf16>, vector<128x384xbf16>, vector<32x384xf32> -> vector<32x384xf32>
    %c0_6 = arith.constant 0 : index
    %c0_7 = arith.constant 0 : index
    %c0_8 = arith.constant 0 : index
    %9 = vector.load %arg5[%c0_6, %c0_7, %c0_8] : memref<1x1x384xf32, #tpu.memory_space<vmem>>, vector<1x1x384xf32>
    %10 = vector.shape_cast %9 : vector<1x1x384xf32> to vector<1x384xf32>
    %11 = vector.broadcast %10 : vector<1x384xf32> to vector<32x384xf32>
    %12 = arith.addf %8, %11 : vector<32x384xf32>
    %13 = vector.shape_cast %12 : vector<32x384xf32> to vector<2x16x384xf32>
    %14 = vector.extract_strided_slice %13 {offsets = [0, 0, 0], sizes = [2, 16, 32], strides = [1, 1, 1]} : vector<2x16x384xf32> to vector<2x16x32xf32>
    %15 = vector.extract_strided_slice %13 {offsets = [0, 0, 128], sizes = [2, 16, 32], strides = [1, 1, 1]} : vector<2x16x384xf32> to vector<2x16x32xf32>
    %16 = vector.extract_strided_slice %13 {offsets = [0, 0, 256], sizes = [2, 16, 32], strides = [1, 1, 1]} : vector<2x16x384xf32> to vector<2x16x32xf32>
    "tpu.trace_start"() <{level = 10 : i32, message = "nle,nme->nlm"}> : () -> ()
    %cst_9 = arith.constant dense<0.000000e+00> : vector<2x16x16xf32>
    %17 = tpu.matmul %14, %15, %cst_9 {dimension_numbers = #tpu.dot_dimension_numbers<[2], [2], [1], [1], [0, 0, 0, 1, 1, 1], [0], [0]>} : vector<2x16x32xf32>, vector<2x16x32xf32>, vector<2x16x16xf32> -> vector<2x16x16xf32>
    "tpu.trace_stop"() : () -> ()
    %cst_10 = arith.constant 0.176776692 : f32
    %18 = vector.broadcast %cst_10 : f32 to vector<2x16x16xf32>
    %19 = arith.mulf %17, %18 : vector<2x16x16xf32>
    %cst_11 = arith.constant dense<0xFF800000> : vector<2x16xf32>
    %20 = vector.multi_reduction <maximumf>, %19, %cst_11 [2] : vector<2x16x16xf32> to vector<2x16xf32>
    %21 = vector.shape_cast %20 : vector<2x16xf32> to vector<2x16x1xf32>
    %22 = vector.broadcast %21 : vector<2x16x1xf32> to vector<2x16x16xf32>
    %23 = arith.subf %19, %22 : vector<2x16x16xf32>
    %24 = math.exp %23 : vector<2x16x16xf32>
    %cst_12 = arith.constant dense<0.000000e+00> : vector<2x16xf32>
    %25 = vector.multi_reduction <add>, %24, %cst_12 [2] : vector<2x16x16xf32> to vector<2x16xf32>
    %26 = vector.shape_cast %25 : vector<2x16xf32> to vector<2x16x1xf32>
    %27 = vector.broadcast %26 : vector<2x16x1xf32> to vector<2x16x16xf32>
    %28 = arith.divf %24, %27 : vector<2x16x16xf32>
    "tpu.trace_start"() <{level = 10 : i32, message = "nlm,nme->nle"}> : () -> ()
    %cst_13 = arith.constant dense<0.000000e+00> : vector<2x16x32xf32>
    %29 = tpu.matmul %28, %16, %cst_13 {dimension_numbers = #tpu.dot_dimension_numbers<[2], [1], [1], [2], [0, 0, 0, 1, 1, 2], [0], [0]>} : vector<2x16x16xf32>, vector<2x16x32xf32>, vector<2x16x32xf32> -> vector<2x16x32xf32>
    "tpu.trace_stop"() : () -> ()
    %30 = vector.extract_strided_slice %13 {offsets = [0, 0, 32], sizes = [2, 16, 32], strides = [1, 1, 1]} : vector<2x16x384xf32> to vector<2x16x32xf32>
    %31 = vector.extract_strided_slice %13 {offsets = [0, 0, 160], sizes = [2, 16, 32], strides = [1, 1, 1]} : vector<2x16x384xf32> to vector<2x16x32xf32>
    %32 = vector.extract_strided_slice %13 {offsets = [0, 0, 288], sizes = [2, 16, 32], strides = [1, 1, 1]} : vector<2x16x384xf32> to vector<2x16x32xf32>
    "tpu.trace_start"() <{level = 10 : i32, message = "nle,nme->nlm"}> : () -> ()
    %cst_14 = arith.constant dense<0.000000e+00> : vector<2x16x16xf32>
    %33 = tpu.matmul %30, %31, %cst_14 {dimension_numbers = #tpu.dot_dimension_numbers<[2], [2], [1], [1], [0, 0, 0, 1, 1, 1], [0], [0]>} : vector<2x16x32xf32>, vector<2x16x32xf32>, vector<2x16x16xf32> -> vector<2x16x16xf32>
    "tpu.trace_stop"() : () -> ()
    %cst_15 = arith.constant 0.176776692 : f32
    %34 = vector.broadcast %cst_15 : f32 to vector<2x16x16xf32>
    %35 = arith.mulf %33, %34 : vector<2x16x16xf32>
    %cst_16 = arith.constant dense<0xFF800000> : vector<2x16xf32>
    %36 = vector.multi_reduction <maximumf>, %35, %cst_16 [2] : vector<2x16x16xf32> to vector<2x16xf32>
    %37 = vector.shape_cast %36 : vector<2x16xf32> to vector<2x16x1xf32>
    %38 = vector.broadcast %37 : vector<2x16x1xf32> to vector<2x16x16xf32>
    %39 = arith.subf %35, %38 : vector<2x16x16xf32>
    %40 = math.exp %39 : vector<2x16x16xf32>
    %cst_17 = arith.constant dense<0.000000e+00> : vector<2x16xf32>
    %41 = vector.multi_reduction <add>, %40, %cst_17 [2] : vector<2x16x16xf32> to vector<2x16xf32>
    %42 = vector.shape_cast %41 : vector<2x16xf32> to vector<2x16x1xf32>
    %43 = vector.broadcast %42 : vector<2x16x1xf32> to vector<2x16x16xf32>
    %44 = arith.divf %40, %43 : vector<2x16x16xf32>
    "tpu.trace_start"() <{level = 10 : i32, message = "nlm,nme->nle"}> : () -> ()
    %cst_18 = arith.constant dense<0.000000e+00> : vector<2x16x32xf32>
    %45 = tpu.matmul %44, %32, %cst_18 {dimension_numbers = #tpu.dot_dimension_numbers<[2], [1], [1], [2], [0, 0, 0, 1, 1, 2], [0], [0]>} : vector<2x16x16xf32>, vector<2x16x32xf32>, vector<2x16x32xf32> -> vector<2x16x32xf32>
    "tpu.trace_stop"() : () -> ()
    %46 = vector.extract_strided_slice %13 {offsets = [0, 0, 64], sizes = [2, 16, 32], strides = [1, 1, 1]} : vector<2x16x384xf32> to vector<2x16x32xf32>
    %47 = vector.extract_strided_slice %13 {offsets = [0, 0, 192], sizes = [2, 16, 32], strides = [1, 1, 1]} : vector<2x16x384xf32> to vector<2x16x32xf32>
    %48 = vector.extract_strided_slice %13 {offsets = [0, 0, 320], sizes = [2, 16, 32], strides = [1, 1, 1]} : vector<2x16x384xf32> to vector<2x16x32xf32>
    "tpu.trace_start"() <{level = 10 : i32, message = "nle,nme->nlm"}> : () -> ()
    %cst_19 = arith.constant dense<0.000000e+00> : vector<2x16x16xf32>
    %49 = tpu.matmul %46, %47, %cst_19 {dimension_numbers = #tpu.dot_dimension_numbers<[2], [2], [1], [1], [0, 0, 0, 1, 1, 1], [0], [0]>} : vector<2x16x32xf32>, vector<2x16x32xf32>, vector<2x16x16xf32> -> vector<2x16x16xf32>
    "tpu.trace_stop"() : () -> ()
    %cst_20 = arith.constant 0.176776692 : f32
    %50 = vector.broadcast %cst_20 : f32 to vector<2x16x16xf32>
    %51 = arith.mulf %49, %50 : vector<2x16x16xf32>
    %cst_21 = arith.constant dense<0xFF800000> : vector<2x16xf32>
    %52 = vector.multi_reduction <maximumf>, %51, %cst_21 [2] : vector<2x16x16xf32> to vector<2x16xf32>
    %53 = vector.shape_cast %52 : vector<2x16xf32> to vector<2x16x1xf32>
    %54 = vector.broadcast %53 : vector<2x16x1xf32> to vector<2x16x16xf32>
    %55 = arith.subf %51, %54 : vector<2x16x16xf32>
    %56 = math.exp %55 : vector<2x16x16xf32>
    %cst_22 = arith.constant dense<0.000000e+00> : vector<2x16xf32>
    %57 = vector.multi_reduction <add>, %56, %cst_22 [2] : vector<2x16x16xf32> to vector<2x16xf32>
    %58 = vector.shape_cast %57 : vector<2x16xf32> to vector<2x16x1xf32>
    %59 = vector.broadcast %58 : vector<2x16x1xf32> to vector<2x16x16xf32>
    %60 = arith.divf %56, %59 : vector<2x16x16xf32>
    "tpu.trace_start"() <{level = 10 : i32, message = "nlm,nme->nle"}> : () -> ()
    %cst_23 = arith.constant dense<0.000000e+00> : vector<2x16x32xf32>
    %61 = tpu.matmul %60, %48, %cst_23 {dimension_numbers = #tpu.dot_dimension_numbers<[2], [1], [1], [2], [0, 0, 0, 1, 1, 2], [0], [0]>} : vector<2x16x16xf32>, vector<2x16x32xf32>, vector<2x16x32xf32> -> vector<2x16x32xf32>
    "tpu.trace_stop"() : () -> ()
    %62 = vector.extract_strided_slice %13 {offsets = [0, 0, 96], sizes = [2, 16, 32], strides = [1, 1, 1]} : vector<2x16x384xf32> to vector<2x16x32xf32>
    %63 = vector.extract_strided_slice %13 {offsets = [0, 0, 224], sizes = [2, 16, 32], strides = [1, 1, 1]} : vector<2x16x384xf32> to vector<2x16x32xf32>
    %64 = vector.extract_strided_slice %13 {offsets = [0, 0, 352], sizes = [2, 16, 32], strides = [1, 1, 1]} : vector<2x16x384xf32> to vector<2x16x32xf32>
    "tpu.trace_start"() <{level = 10 : i32, message = "nle,nme->nlm"}> : () -> ()
    %cst_24 = arith.constant dense<0.000000e+00> : vector<2x16x16xf32>
    %65 = tpu.matmul %62, %63, %cst_24 {dimension_numbers = #tpu.dot_dimension_numbers<[2], [2], [1], [1], [0, 0, 0, 1, 1, 1], [0], [0]>} : vector<2x16x32xf32>, vector<2x16x32xf32>, vector<2x16x16xf32> -> vector<2x16x16xf32>
    "tpu.trace_stop"() : () -> ()
    %cst_25 = arith.constant 0.176776692 : f32
    %66 = vector.broadcast %cst_25 : f32 to vector<2x16x16xf32>
    %67 = arith.mulf %65, %66 : vector<2x16x16xf32>
    %cst_26 = arith.constant dense<0xFF800000> : vector<2x16xf32>
    %68 = vector.multi_reduction <maximumf>, %67, %cst_26 [2] : vector<2x16x16xf32> to vector<2x16xf32>
    %69 = vector.shape_cast %68 : vector<2x16xf32> to vector<2x16x1xf32>
    %70 = vector.broadcast %69 : vector<2x16x1xf32> to vector<2x16x16xf32>
    %71 = arith.subf %67, %70 : vector<2x16x16xf32>
    %72 = math.exp %71 : vector<2x16x16xf32>
    %cst_27 = arith.constant dense<0.000000e+00> : vector<2x16xf32>
    %73 = vector.multi_reduction <add>, %72, %cst_27 [2] : vector<2x16x16xf32> to vector<2x16xf32>
    %74 = vector.shape_cast %73 : vector<2x16xf32> to vector<2x16x1xf32>
    %75 = vector.broadcast %74 : vector<2x16x1xf32> to vector<2x16x16xf32>
    %76 = arith.divf %72, %75 : vector<2x16x16xf32>
    "tpu.trace_start"() <{level = 10 : i32, message = "nlm,nme->nle"}> : () -> ()
    %cst_28 = arith.constant dense<0.000000e+00> : vector<2x16x32xf32>
    %77 = tpu.matmul %76, %64, %cst_28 {dimension_numbers = #tpu.dot_dimension_numbers<[2], [1], [1], [2], [0, 0, 0, 1, 1, 2], [0], [0]>} : vector<2x16x16xf32>, vector<2x16x32xf32>, vector<2x16x32xf32> -> vector<2x16x32xf32>
    "tpu.trace_stop"() : () -> ()
    %78 = tpu.concatenate %29, %45, %61, %77 in 2 : vector<2x16x32xf32>, vector<2x16x32xf32>, vector<2x16x32xf32>, vector<2x16x32xf32> -> vector<2x16x128xf32>
    %79 = vector.shape_cast %78 : vector<2x16x128xf32> to vector<32x128xf32>
    %80 = arith.truncf %79 : vector<32x128xf32> to vector<32x128xbf16>
    %c0_29 = arith.constant 0 : index
    %c0_30 = arith.constant 0 : index
    %c0_31 = arith.constant 0 : index
    %81 = vector.load %arg6[%c0_29, %c0_30, %c0_31] : memref<1x128x128xbf16, #tpu.memory_space<vmem>>, vector<1x128x128xbf16>
    %82 = vector.shape_cast %81 : vector<1x128x128xbf16> to vector<128x128xbf16>
    %cst_32 = arith.constant dense<0.000000e+00> : vector<32x128xf32>
    %83 = tpu.matmul %80, %82, %cst_32 {dimension_numbers = #tpu.dot_dimension_numbers<[1], [0], [0], [1], [0, 0, 1, 1], [], []>} : vector<32x128xbf16>, vector<128x128xbf16>, vector<32x128xf32> -> vector<32x128xf32>
    %c0_33 = arith.constant 0 : index
    %c0_34 = arith.constant 0 : index
    %c0_35 = arith.constant 0 : index
    %84 = vector.load %arg7[%c0_33, %c0_34, %c0_35] : memref<1x1x128xf32, #tpu.memory_space<vmem>>, vector<1x1x128xf32>
    %85 = vector.shape_cast %84 : vector<1x1x128xf32> to vector<1x128xf32>
    %86 = vector.broadcast %85 : vector<1x128xf32> to vector<32x128xf32>
    %87 = arith.addf %83, %86 : vector<32x128xf32>
    %88 = arith.addf %6, %87 : vector<32x128xf32>
    %c0_36 = arith.constant 0 : index
    %c0_37 = arith.constant 0 : index
    %c0_38 = arith.constant 0 : index
    %89 = vector.load %arg8[%c0_36, %c0_37, %c0_38] : memref<1x1x128xf32, #tpu.memory_space<vmem>>, vector<1x1x128xf32>
    %90 = vector.shape_cast %89 : vector<1x1x128xf32> to vector<1x128xf32>
    %c0_39 = arith.constant 0 : index
    %c0_40 = arith.constant 0 : index
    %c0_41 = arith.constant 0 : index
    %91 = vector.load %arg9[%c0_39, %c0_40, %c0_41] : memref<1x1x128xf32, #tpu.memory_space<vmem>>, vector<1x1x128xf32>
    %92 = vector.shape_cast %91 : vector<1x1x128xf32> to vector<1x128xf32>
    %cst_42 = arith.constant dense<0.000000e+00> : vector<32xf32>
    %93 = vector.multi_reduction <add>, %88, %cst_42 [1] : vector<32x128xf32> to vector<32xf32>
    %94 = vector.shape_cast %93 : vector<32xf32> to vector<32x1xf32>
    %cst_43 = arith.constant 1.280000e+02 : f32
    %95 = vector.broadcast %cst_43 : f32 to vector<32x1xf32>
    %96 = arith.divf %94, %95 : vector<32x1xf32>
    %97 = vector.broadcast %96 : vector<32x1xf32> to vector<32x128xf32>
    %98 = arith.subf %88, %97 : vector<32x128xf32>
    %99 = arith.mulf %98, %98 : vector<32x128xf32>
    %cst_44 = arith.constant dense<0.000000e+00> : vector<32xf32>
    %100 = vector.multi_reduction <add>, %99, %cst_44 [1] : vector<32x128xf32> to vector<32xf32>
    %101 = vector.shape_cast %100 : vector<32xf32> to vector<32x1xf32>
    %cst_45 = arith.constant 1.280000e+02 : f32
    %102 = vector.broadcast %cst_45 : f32 to vector<32x1xf32>
    %103 = arith.divf %101, %102 : vector<32x1xf32>
    %104 = vector.broadcast %96 : vector<32x1xf32> to vector<32x128xf32>
    %105 = arith.subf %88, %104 : vector<32x128xf32>
    %cst_46 = arith.constant 9.99999974E-6 : f32
    %106 = vector.broadcast %cst_46 : f32 to vector<32x1xf32>
    %107 = arith.addf %103, %106 : vector<32x1xf32>
    %108 = math.rsqrt %107 : vector<32x1xf32>
    %109 = vector.broadcast %108 : vector<32x1xf32> to vector<32x128xf32>
    %110 = arith.mulf %105, %109 : vector<32x128xf32>
    %111 = vector.broadcast %90 : vector<1x128xf32> to vector<32x128xf32>
    %112 = arith.mulf %110, %111 : vector<32x128xf32>
    %113 = vector.broadcast %92 : vector<1x128xf32> to vector<32x128xf32>
    %114 = arith.addf %112, %113 : vector<32x128xf32>
    %115 = arith.truncf %114 : vector<32x128xf32> to vector<32x128xbf16>
    %c0_47 = arith.constant 0 : index
    %c0_48 = arith.constant 0 : index
    %c0_49 = arith.constant 0 : index
    %116 = vector.load %arg10[%c0_47, %c0_48, %c0_49] : memref<1x128x256xbf16, #tpu.memory_space<vmem>>, vector<1x128x256xbf16>
    %117 = vector.shape_cast %116 : vector<1x128x256xbf16> to vector<128x256xbf16>
    %cst_50 = arith.constant dense<0.000000e+00> : vector<32x256xf32>
    %118 = tpu.matmul %115, %117, %cst_50 {dimension_numbers = #tpu.dot_dimension_numbers<[1], [0], [0], [1], [0, 0, 1, 1], [], []>} : vector<32x128xbf16>, vector<128x256xbf16>, vector<32x256xf32> -> vector<32x256xf32>
    %c0_51 = arith.constant 0 : index
    %c0_52 = arith.constant 0 : index
    %c0_53 = arith.constant 0 : index
    %119 = vector.load %arg11[%c0_51, %c0_52, %c0_53] : memref<1x1x256xf32, #tpu.memory_space<vmem>>, vector<1x1x256xf32>
    %120 = vector.shape_cast %119 : vector<1x1x256xf32> to vector<1x256xf32>
    %121 = vector.broadcast %120 : vector<1x256xf32> to vector<32x256xf32>
    %122 = arith.addf %118, %121 : vector<32x256xf32>
    %cst_54 = arith.constant 0.000000e+00 : f32
    %123 = vector.broadcast %cst_54 : f32 to vector<32x256xf32>
    %124 = arith.maximumf %122, %123 : vector<32x256xf32>
    %125 = arith.truncf %124 : vector<32x256xf32> to vector<32x256xbf16>
    %c0_55 = arith.constant 0 : index
    %c0_56 = arith.constant 0 : index
    %c0_57 = arith.constant 0 : index
    %126 = vector.load %arg12[%c0_55, %c0_56, %c0_57] : memref<1x256x128xbf16, #tpu.memory_space<vmem>>, vector<1x256x128xbf16>
    %127 = vector.shape_cast %126 : vector<1x256x128xbf16> to vector<256x128xbf16>
    %cst_58 = arith.constant dense<0.000000e+00> : vector<32x128xf32>
    %128 = tpu.matmul %125, %127, %cst_58 {dimension_numbers = #tpu.dot_dimension_numbers<[1], [0], [0], [1], [0, 0, 1, 1], [], []>} : vector<32x256xbf16>, vector<256x128xbf16>, vector<32x128xf32> -> vector<32x128xf32>
    %c0_59 = arith.constant 0 : index
    %c0_60 = arith.constant 0 : index
    %c0_61 = arith.constant 0 : index
    %129 = vector.load %arg13[%c0_59, %c0_60, %c0_61] : memref<1x1x128xf32, #tpu.memory_space<vmem>>, vector<1x1x128xf32>
    %130 = vector.shape_cast %129 : vector<1x1x128xf32> to vector<1x128xf32>
    %131 = vector.broadcast %130 : vector<1x128xf32> to vector<32x128xf32>
    %132 = arith.addf %128, %131 : vector<32x128xf32>
    %133 = arith.addf %114, %132 : vector<32x128xf32>
    %c0_62 = arith.constant 0 : index
    %c0_63 = arith.constant 0 : index
    %c0_64 = arith.constant 0 : index
    %134 = vector.load %arg14[%c0_62, %c0_63, %c0_64] : memref<1x1x128xf32, #tpu.memory_space<vmem>>, vector<1x1x128xf32>
    %135 = vector.shape_cast %134 : vector<1x1x128xf32> to vector<1x128xf32>
    %c0_65 = arith.constant 0 : index
    %c0_66 = arith.constant 0 : index
    %c0_67 = arith.constant 0 : index
    %136 = vector.load %arg15[%c0_65, %c0_66, %c0_67] : memref<1x1x128xf32, #tpu.memory_space<vmem>>, vector<1x1x128xf32>
    %137 = vector.shape_cast %136 : vector<1x1x128xf32> to vector<1x128xf32>
    %cst_68 = arith.constant dense<0.000000e+00> : vector<32xf32>
    %138 = vector.multi_reduction <add>, %133, %cst_68 [1] : vector<32x128xf32> to vector<32xf32>
    %139 = vector.shape_cast %138 : vector<32xf32> to vector<32x1xf32>
    %cst_69 = arith.constant 1.280000e+02 : f32
    %140 = vector.broadcast %cst_69 : f32 to vector<32x1xf32>
    %141 = arith.divf %139, %140 : vector<32x1xf32>
    %142 = vector.broadcast %141 : vector<32x1xf32> to vector<32x128xf32>
    %143 = arith.subf %133, %142 : vector<32x128xf32>
    %144 = arith.mulf %143, %143 : vector<32x128xf32>
    %cst_70 = arith.constant dense<0.000000e+00> : vector<32xf32>
    %145 = vector.multi_reduction <add>, %144, %cst_70 [1] : vector<32x128xf32> to vector<32xf32>
    %146 = vector.shape_cast %145 : vector<32xf32> to vector<32x1xf32>
    %cst_71 = arith.constant 1.280000e+02 : f32
    %147 = vector.broadcast %cst_71 : f32 to vector<32x1xf32>
    %148 = arith.divf %146, %147 : vector<32x1xf32>
    %149 = vector.broadcast %141 : vector<32x1xf32> to vector<32x128xf32>
    %150 = arith.subf %133, %149 : vector<32x128xf32>
    %cst_72 = arith.constant 9.99999974E-6 : f32
    %151 = vector.broadcast %cst_72 : f32 to vector<32x1xf32>
    %152 = arith.addf %148, %151 : vector<32x1xf32>
    %153 = math.rsqrt %152 : vector<32x1xf32>
    %154 = vector.broadcast %153 : vector<32x1xf32> to vector<32x128xf32>
    %155 = arith.mulf %150, %154 : vector<32x128xf32>
    %156 = vector.broadcast %135 : vector<1x128xf32> to vector<32x128xf32>
    %157 = arith.mulf %155, %156 : vector<32x128xf32>
    %158 = vector.broadcast %137 : vector<1x128xf32> to vector<32x128xf32>
    %159 = arith.addf %157, %158 : vector<32x128xf32>
    %160 = vector.shape_cast %159 : vector<32x128xf32> to vector<2x16x128xf32>
    %c0_73 = arith.constant 0 : index
    %c0_74 = arith.constant 0 : index
    %c0_75 = arith.constant 0 : index
    %161 = vector.load %arg16[%c0_73, %c0_74, %c0_75] : memref<2x16x128xf32, #tpu.memory_space<vmem>>, vector<2x16x128xf32>
    tpu.vector_store %arg16[%c0_73, %c0_74, %c0_75], %160 {strides = array<i32>} : memref<2x16x128xf32, #tpu.memory_space<vmem>>, vector<2x16x128xf32>,
    return
  }
  func.func @transform_0(%arg0: i32, %arg1: i32) -> (i32, i32, i32) {
    %c0_i32 = arith.constant 0 : i32
    %c0_i32_0 = arith.constant 0 : i32
    %c0_i32_1 = arith.constant 0 : i32
    return %arg0, %c0_i32, %c0_i32_0 : i32, i32, i32
  }
  func.func @transform_1(%arg0: i32, %arg1: i32) -> (i32, i32) {
    %c0_i32 = arith.constant 0 : i32
    %c0_i32_0 = arith.constant 0 : i32
    %c0_i32_1 = arith.constant 0 : i32
    return %c0_i32, %c0_i32_0 : i32, i32
  }
  func.func @transform_2(%arg0: i32, %arg1: i32) -> (i32, i32, i32) {
    %c0_i32 = arith.constant 0 : i32
    %c0_i32_0 = arith.constant 0 : i32
    %c0_i32_1 = arith.constant 0 : i32
    return %arg1, %c0_i32, %c0_i32_0 : i32, i32, i32
  }
  func.func @transform_3(%arg0: i32, %arg1: i32) -> (i32, i32, i32) {
    %c0_i32 = arith.constant 0 : i32
    %c0_i32_0 = arith.constant 0 : i32
    %c0_i32_1 = arith.constant 0 : i32
    return %arg1, %c0_i32, %c0_i32_0 : i32, i32, i32
  }
  func.func @transform_4(%arg0: i32, %arg1: i32) -> (i32, i32, i32) {
    %c0_i32 = arith.constant 0 : i32
    %c0_i32_0 = arith.constant 0 : i32
    %c0_i32_1 = arith.constant 0 : i32
    return %arg1, %c0_i32, %c0_i32_0 : i32, i32, i32
  }
  func.func @transform_5(%arg0: i32, %arg1: i32) -> (i32, i32, i32) {
    %c0_i32 = arith.constant 0 : i32
    %c0_i32_0 = arith.constant 0 : i32
    %c0_i32_1 = arith.constant 0 : i32
    return %arg1, %c0_i32, %c0_i32_0 : i32, i32, i32
  }
  func.func @transform_6(%arg0: i32, %arg1: i32) -> (i32, i32, i32) {
    %c0_i32 = arith.constant 0 : i32
    %c0_i32_0 = arith.constant 0 : i32
    %c0_i32_1 = arith.constant 0 : i32
    return %arg1, %c0_i32, %c0_i32_0 : i32, i32, i32
  }
  func.func @transform_7(%arg0: i32, %arg1: i32) -> (i32, i32, i32) {
    %c0_i32 = arith.constant 0 : i32
    %c0_i32_0 = arith.constant 0 : i32
    %c0_i32_1 = arith.constant 0 : i32
    return %arg1, %c0_i32, %c0_i32_0 : i32, i32, i32
  }
  func.func @transform_8(%arg0: i32, %arg1: i32) -> (i32, i32, i32) {
    %c0_i32 = arith.constant 0 : i32
    %c0_i32_0 = arith.constant 0 : i32
    %c0_i32_1 = arith.constant 0 : i32
    return %arg1, %c0_i32, %c0_i32_0 : i32, i32, i32
  }
  func.func @transform_9(%arg0: i32, %arg1: i32) -> (i32, i32, i32) {
    %c0_i32 = arith.constant 0 : i32
    %c0_i32_0 = arith.constant 0 : i32
    %c0_i32_1 = arith.constant 0 : i32
    return %arg1, %c0_i32, %c0_i32_0 : i32, i32, i32
  }
  func.func @transform_10(%arg0: i32, %arg1: i32) -> (i32, i32, i32) {
    %c0_i32 = arith.constant 0 : i32
    %c0_i32_0 = arith.constant 0 : i32
    %c0_i32_1 = arith.constant 0 : i32
    return %arg1, %c0_i32, %c0_i32_0 : i32, i32, i32
  }
  func.func @transform_11(%arg0: i32, %arg1: i32) -> (i32, i32, i32) {
    %c0_i32 = arith.constant 0 : i32
    %c0_i32_0 = arith.constant 0 : i32
    %c0_i32_1 = arith.constant 0 : i32
    return %arg1, %c0_i32, %c0_i32_0 : i32, i32, i32
  }
  func.func @transform_12(%arg0: i32, %arg1: i32) -> (i32, i32, i32) {
    %c0_i32 = arith.constant 0 : i32
    %c0_i32_0 = arith.constant 0 : i32
    %c0_i32_1 = arith.constant 0 : i32
    return %arg1, %c0_i32, %c0_i32_0 : i32, i32, i32
  }
  func.func @transform_13(%arg0: i32, %arg1: i32) -> (i32, i32, i32) {
    %c0_i32 = arith.constant 0 : i32
    %c0_i32_0 = arith.constant 0 : i32
    %c0_i32_1 = arith.constant 0 : i32
    return %arg1, %c0_i32, %c0_i32_0 : i32, i32, i32
  }
  func.func @transform_14(%arg0: i32, %arg1: i32) -> (i32, i32, i32) {
    %c0_i32 = arith.constant 0 : i32
    %c0_i32_0 = arith.constant 0 : i32
    %c0_i32_1 = arith.constant 0 : i32
    return %arg0, %c0_i32, %c0_i32_0 : i32, i32, i32
  }
}

</mosaic_0001>

<llo_original>
// kernel: tpu_custom_call.1
$region0: #{tpu_custom_call.1}
  #allocation0 [shape = 'u32[]', space=smem, size = 0x4, offset = 0x4, fixed_abs, tag = 'smem constant byte address 0x4 - core index']
  #allocation1 [shape = 'u32[144,128]{1,0:T(1,128)}', space=vmem, size = 0x12000, scoped, tag = 'internal scratch']
  %s0 = inlined_call_operand.hbm [shape: f32[2,16,128], index: 0, kind: input, shape index: {}]
  %s1 = inlined_call_operand.hbm [shape: f32[16,128], index: 1, kind: input, shape index: {}]
  %s2 = inlined_call_operand.hbm [shape: bf16[2,128,384], index: 2, kind: input, shape index: {}]
  %s3 = inlined_call_operand.hbm [shape: f32[2,1,384], index: 3, kind: input, shape index: {}]
  %s4 = inlined_call_operand.hbm [shape: bf16[2,128,128], index: 4, kind: input, shape index: {}]
  %s5 = inlined_call_operand.vmem [shape: f32[2,1,128], index: 5, kind: input, shape index: {}]
  %s6 = inlined_call_operand.vmem [shape: f32[2,1,128], index: 6, kind: input, shape index: {}]
  %s7 = inlined_call_operand.vmem [shape: f32[2,1,128], index: 7, kind: input, shape index: {}]
  %s8 = inlined_call_operand.hbm [shape: bf16[2,128,256], index: 8, kind: input, shape index: {}]
  %s9 = inlined_call_operand.vmem [shape: f32[2,1,256], index: 9, kind: input, shape index: {}]
  %s10 = inlined_call_operand.hbm [shape: bf16[2,256,128], index: 10, kind: input, shape index: {}]
  %s11 = inlined_call_operand.vmem [shape: f32[2,1,128], index: 11, kind: input, shape index: {}]
  %s12 = inlined_call_operand.vmem [shape: f32[2,1,128], index: 12, kind: input, shape index: {}]
  %s13 = inlined_call_operand.vmem [shape: f32[2,1,128], index: 13, kind: input, shape index: {}]
  %s14 = inlined_call_operand.hbm [shape: f32[2,16,128], index: 14, kind: output, shape index: {}]
  %s15 = sld [smem:[#allocation0]]
  $region121: #{tpu_custom_call.1} parent=0
    _
  %s17 = ssub.s32 1, %s15
  %s18 = scalar_select 0, %s17, %s15
  $region1: #{tpu_custom_call.1} parent=0
    #allocation2 [shape = 'u8[16384]{0}', space=vmem, size = 0x4000, scoped, tag = 'input window, operand 0, single buffered']
    #allocation3 [shape = 's32[2]{0}', space=sflag, size = 0x8, scoped, tag = 'scoped memory for tpu_custom_call.1']
    #allocation4 [shape = 's32[2]{0}', space=sflag, size = 0x8, scoped, tag = 'scoped memory for tpu_custom_call.1']
    #allocation5 [shape = 'u8[8192]{0}', space=vmem, size = 0x2000, scoped, tag = 'input window, operand 1, single buffered']
    #allocation6 [shape = 's32[1]{0}', space=sflag, size = 0x4, scoped, tag = 'scoped memory for tpu_custom_call.1']
    #allocation7 [shape = 'u8[196608]{0}', space=vmem, size = 0x30000, scoped, tag = 'input window, operand 2']
    #allocation8 [shape = 'u8[3072]{0}', space=vmem, size = 0xc00, scoped, tag = 'input window, operand 3']
    #allocation9 [shape = 'u8[65536]{0}', space=vmem, size = 0x10000, scoped, tag = 'input window, operand 4']
    #allocation10 [shape = 'u8[131072]{0}', space=vmem, size = 0x20000, scoped, tag = 'input window, operand 8']
    #allocation11 [shape = 'u8[131072]{0}', space=vmem, size = 0x20000, scoped, tag = 'input window, operand 10']
    #allocation12 [shape = 'u8[16384]{0}', space=vmem, size = 0x4000, scoped, tag = 'output window, operand 0, single buffered']
    %19 = vsyncpa [#allocation3], 0
    %20 = vsyncpa [#allocation6], 0
    %21 = vsyncpa [#allocation4], 0
    loop: start=0, step=1, limit=4
    $region2: #{tpu_custom_call.1} parent=1 // loop_pre_header
      _
    $region3: #{tpu_custom_call.1} parent=1 // loop_header
      %s23 = sphi 0, %s27
      %p24 = scmp.ge.s32.totalorder %s23, 4
      %s30 = sphi 0, %s42
      %s31 = sphi 0, %s38
      %s32 = sphi 0, %s30
      %s33 = sphi 0, %s31
      %s34 = sphi 0, %s32
      %s35 = sphi 0, %s33
      %s45 = sphi 0, %s47
      %s48 = sphi 0, %s45
      %s49 = sphi 0, %s48
      %s65 = sphi 0, %s49
      %s69 = sphi 0, %s69
      %s71 = sphi 0, %s69
      %s72 = sphi 0, %s71
      %s86 = sphi 0, %s72
      %s92 = sphi 0, %s94
      %s95 = sphi 0, %s92
      %s96 = sphi 0, %s95
      %s112 = sphi 0, %s96
      %s118 = sphi 0, %s120
      %s121 = sphi 0, %s118
      %s122 = sphi 0, %s121
      %s138 = sphi 0, %s122
      %s144 = sphi 0, %s146
      %s147 = sphi 0, %s144
      %s148 = sphi 0, %s147
      %s164 = sphi 0, %s148
      %s170 = sphi 0, %s172
      %s173 = sphi 0, %s170
      %s174 = sphi 0, %s173
      %s190 = sphi 0, %s174
      %s196 = sphi 0, %s198
      %s199 = sphi 0, %s196
      %s200 = sphi 0, %s199
      %s216 = sphi 0, %s200
      %s222 = sphi 0, %s224
      %s225 = sphi 0, %s222
      %s226 = sphi 0, %s225
      %s242 = sphi 0, %s226
      %s248 = sphi 0, %s250
      %s251 = sphi 0, %s248
      %s252 = sphi 0, %s251
      %s268 = sphi 0, %s252
      %s274 = sphi 0, %s276
      %s277 = sphi 0, %s274
      %s278 = sphi 0, %s277
      %s294 = sphi 0, %s278
      %s300 = sphi 0, %s302
      %s303 = sphi 0, %s300
      %s304 = sphi 0, %s303
      %s320 = sphi 0, %s304
      %s326 = sphi 0, %s328
      %s329 = sphi 0, %s326
      %s330 = sphi 0, %s329
      %s346 = sphi 0, %s330
      %s352 = sphi 0, %s354
      %s355 = sphi 0, %s352
      %s356 = sphi 0, %s355
      %s372 = sphi 0, %s356
      %s378 = sphi 0, %s380
      %s381 = sphi 0, %s378
      %s382 = sphi 0, %s381
      %s398 = sphi 0, %s382
      %s404 = sphi 0, %s406
      %s407 = sphi 0, %s404
      %s408 = sphi 0, %s407
      %s424 = sphi 0, %s408
    $region4: #{tpu_custom_call.1} parent=1 // loop_header_branch
      %26 = sbr.rel (%p24) target = $region8
    $region5: #{tpu_custom_call.1} parent=1 // loop_body
      %s28 = ssub.s32 %s23, 1
      %s29 = ssub.s32 %s23, 2
      %s36 = sadd.s32 1, %s31
      %p37 = scmp.ge.s32.totalorder %s36, 2
      %s38 = scalar_select %p37, 0, %s36
      %s39 = sadd.s32 1, %s30
      %s40 = scalar_select %p37, %s39, %s30
      %p41 = scmp.ge.s32.totalorder %s40, 1
      %s42 = scalar_select %p41, 0, %s40
      %s43 = ssub.s32 %s30, %s42
      %p44 = scmp.eq.s32.totalorder %s43, 0
      %s46 = sadd.s32 %s45, 1
      %s47 = scalar_select %p44, %s45, %s46
      %p50 = pneg %p44
      %p51 = scmp.eq.s32.totalorder %s23, 1
      %p52 = por %p50, %p51
      %p53 = scmp.ne.s32.totalorder %s45, %s48
      %p54 = scmp.eq.s32.totalorder %s23, 0
      %p55 = por %p53, %p54
      %p56 = scmp.ne.s32.totalorder %s45, %s48
      %p57 = scmp.eq.s32.totalorder %s28, 1
      %p58 = por %p56, %p57
      %p59 = scmp.ne.s32.totalorder %s48, %s49
      %p60 = scmp.eq.s32.totalorder %s28, 0
      %p61 = por %p59, %p60
      %p62 = scmp.ne.s32.totalorder %s48, %s49
      %p63 = scmp.eq.s32.totalorder %s29, 1
      %p64 = por %p62, %p63
      %p66 = scmp.ne.s32.totalorder %s49, %s65
      %p67 = scmp.eq.s32.totalorder %s29, 0
      %p68 = por %p66, %p67
      %s70 = sadd.s32 %s69, 1
      %p73 = scmp.eq.s32.totalorder %s23, 1
      %p74 = scmp.ne.s32.totalorder %s69, %s71
      %p75 = scmp.eq.s32.totalorder %s23, 0
      %p76 = por %p74, %p75
      %p77 = scmp.ne.s32.totalorder %s69, %s71
      %p78 = scmp.eq.s32.totalorder %s28, 1
      %p79 = por %p77, %p78
      %p80 = scmp.ne.s32.totalorder %s71, %s72
      %p81 = scmp.eq.s32.totalorder %s28, 0
      %p82 = por %p80, %p81
      %p83 = scmp.ne.s32.totalorder %s71, %s72
      %p84 = scmp.eq.s32.totalorder %s29, 1
      %p85 = por %p83, %p84
      %p87 = scmp.ne.s32.totalorder %s72, %s86
      %p88 = scmp.eq.s32.totalorder %s29, 0
      %p89 = por %p87, %p88
      %s90 = ssub.s32 %s31, %s38
      %p91 = scmp.eq.s32.totalorder %s90, 0
      %s93 = sadd.s32 %s92, 1
      %s94 = scalar_select %p91, %s92, %s93
      %p97 = pneg %p91
      %p98 = scmp.eq.s32.totalorder %s23, 1
      %p99 = por %p97, %p98
      %p100 = scmp.ne.s32.totalorder %s92, %s95
      %p101 = scmp.eq.s32.totalorder %s23, 0
      %p102 = por %p100, %p101
      %p103 = scmp.ne.s32.totalorder %s92, %s95
      %p104 = scmp.eq.s32.totalorder %s28, 1
      %p105 = por %p103, %p104
      %p106 = scmp.ne.s32.totalorder %s95, %s96
      %p107 = scmp.eq.s32.totalorder %s28, 0
      %p108 = por %p106, %p107
      %p109 = scmp.ne.s32.totalorder %s95, %s96
      %p110 = scmp.eq.s32.totalorder %s29, 1
      %p111 = por %p109, %p110
      %p113 = scmp.ne.s32.totalorder %s96, %s112
      %p114 = scmp.eq.s32.totalorder %s29, 0
      %p115 = por %p113, %p114
      %s116 = ssub.s32 %s31, %s38
      %p117 = scmp.eq.s32.totalorder %s116, 0
      %s119 = sadd.s32 %s118, 1
      %s120 = scalar_select %p117, %s118, %s119
      %p123 = pneg %p117
      %p124 = scmp.eq.s32.totalorder %s23, 1
      %p125 = por %p123, %p124
      %p126 = scmp.ne.s32.totalorder %s118, %s121
      %p127 = scmp.eq.s32.totalorder %s23, 0
      %p128 = por %p126, %p127
      %p129 = scmp.ne.s32.totalorder %s118, %s121
      %p130 = scmp.eq.s32.totalorder %s28, 1
      %p131 = por %p129, %p130
      %p132 = scmp.ne.s32.totalorder %s121, %s122
      %p133 = scmp.eq.s32.totalorder %s28, 0
      %p134 = por %p132, %p133
      %p135 = scmp.ne.s32.totalorder %s121, %s122
      %p136 = scmp.eq.s32.totalorder %s29, 1
      %p137 = por %p135, %p136
      %p139 = scmp.ne.s32.totalorder %s122, %s138
      %p140 = scmp.eq.s32.totalorder %s29, 0
      %p141 = por %p139, %p140
      %s142 = ssub.s32 %s31, %s38
      %p143 = scmp.eq.s32.totalorder %s142, 0
      %s145 = sadd.s32 %s144, 1
      %s146 = scalar_select %p143, %s144, %s145
      %p149 = pneg %p143
      %p150 = scmp.eq.s32.totalorder %s23, 1
      %p151 = por %p149, %p150
      %p152 = scmp.ne.s32.totalorder %s144, %s147
      %p153 = scmp.eq.s32.totalorder %s23, 0
      %p154 = por %p152, %p153
      %p155 = scmp.ne.s32.totalorder %s144, %s147
      %p156 = scmp.eq.s32.totalorder %s28, 1
      %p157 = por %p155, %p156
      %p158 = scmp.ne.s32.totalorder %s147, %s148
      %p159 = scmp.eq.s32.totalorder %s28, 0
      %p160 = por %p158, %p159
      %p161 = scmp.ne.s32.totalorder %s147, %s148
      %p162 = scmp.eq.s32.totalorder %s29, 1
      %p163 = por %p161, %p162
      %p165 = scmp.ne.s32.totalorder %s148, %s164
      %p166 = scmp.eq.s32.totalorder %s29, 0
      %p167 = por %p165, %p166
      %s168 = ssub.s32 %s31, %s38
      %p169 = scmp.eq.s32.totalorder %s168, 0
      %s171 = sadd.s32 %s170, 1
      %s172 = scalar_select %p169, %s170, %s171
      %p175 = pneg %p169
      %p176 = scmp.eq.s32.totalorder %s23, 1
      %p177 = por %p175, %p176
      %p178 = scmp.ne.s32.totalorder %s170, %s173
      %p179 = scmp.eq.s32.totalorder %s23, 0
      %p180 = por %p178, %p179
      %p181 = scmp.ne.s32.totalorder %s170, %s173
      %p182 = scmp.eq.s32.totalorder %s28, 1
      %p183 = por %p181, %p182
      %p184 = scmp.ne.s32.totalorder %s173, %s174
      %p185 = scmp.eq.s32.totalorder %s28, 0
      %p186 = por %p184, %p185
      %p187 = scmp.ne.s32.totalorder %s173, %s174
      %p188 = scmp.eq.s32.totalorder %s29, 1
      %p189 = por %p187, %p188
      %p191 = scmp.ne.s32.totalorder %s174, %s190
      %p192 = scmp.eq.s32.totalorder %s29, 0
      %p193 = por %p191, %p192
      %s194 = ssub.s32 %s31, %s38
      %p195 = scmp.eq.s32.totalorder %s194, 0
      %s197 = sadd.s32 %s196, 1
      %s198 = scalar_select %p195, %s196, %s197
      %p201 = pneg %p195
      %p202 = scmp.eq.s32.totalorder %s23, 1
      %p203 = por %p201, %p202
      %p204 = scmp.ne.s32.totalorder %s196, %s199
      %p205 = scmp.eq.s32.totalorder %s23, 0
      %p206 = por %p204, %p205
      %p207 = scmp.ne.s32.totalorder %s196, %s199
      %p208 = scmp.eq.s32.totalorder %s28, 1
      %p209 = por %p207, %p208
      %p210 = scmp.ne.s32.totalorder %s199, %s200
      %p211 = scmp.eq.s32.totalorder %s28, 0
      %p212 = por %p210, %p211
      %p213 = scmp.ne.s32.totalorder %s199, %s200
      %p214 = scmp.eq.s32.totalorder %s29, 1
      %p215 = por %p213, %p214
      %p217 = scmp.ne.s32.totalorder %s200, %s216
      %p218 = scmp.eq.s32.totalorder %s29, 0
      %p219 = por %p217, %p218
      %s220 = ssub.s32 %s31, %s38
      %p221 = scmp.eq.s32.totalorder %s220, 0
      %s223 = sadd.s32 %s222, 1
      %s224 = scalar_select %p221, %s222, %s223
      %p227 = pneg %p221
      %p228 = scmp.eq.s32.totalorder %s23, 1
      %p229 = por %p227, %p228
      %p230 = scmp.ne.s32.totalorder %s222, %s225
      %p231 = scmp.eq.s32.totalorder %s23, 0
      %p232 = por %p230, %p231
      %p233 = scmp.ne.s32.totalorder %s222, %s225
      %p234 = scmp.eq.s32.totalorder %s28, 1
      %p235 = por %p233, %p234
      %p236 = scmp.ne.s32.totalorder %s225, %s226
      %p237 = scmp.eq.s32.totalorder %s28, 0
      %p238 = por %p236, %p237
      %p239 = scmp.ne.s32.totalorder %s225, %s226
      %p240 = scmp.eq.s32.totalorder %s29, 1
      %p241 = por %p239, %p240
      %p243 = scmp.ne.s32.totalorder %s226, %s242
      %p244 = scmp.eq.s32.totalorder %s29, 0
      %p245 = por %p243, %p244
      %s246 = ssub.s32 %s31, %s38
      %p247 = scmp.eq.s32.totalorder %s246, 0
      %s249 = sadd.s32 %s248, 1
      %s250 = scalar_select %p247, %s248, %s249
      %p253 = pneg %p247
      %p254 = scmp.eq.s32.totalorder %s23, 1
      %p255 = por %p253, %p254
      %p256 = scmp.ne.s32.totalorder %s248, %s251
      %p257 = scmp.eq.s32.totalorder %s23, 0
      %p258 = por %p256, %p257
      %p259 = scmp.ne.s32.totalorder %s248, %s251
      %p260 = scmp.eq.s32.totalorder %s28, 1
      %p261 = por %p259, %p260
      %p262 = scmp.ne.s32.totalorder %s251, %s252
      %p263 = scmp.eq.s32.totalorder %s28, 0
      %p264 = por %p262, %p263
      %p265 = scmp.ne.s32.totalorder %s251, %s252
      %p266 = scmp.eq.s32.totalorder %s29, 1
      %p267 = por %p265, %p266
      %p269 = scmp.ne.s32.totalorder %s252, %s268
      %p270 = scmp.eq.s32.totalorder %s29, 0
      %p271 = por %p269, %p270
      %s272 = ssub.s32 %s31, %s38
      %p273 = scmp.eq.s32.totalorder %s272, 0
      %s275 = sadd.s32 %s274, 1
      %s276 = scalar_select %p273, %s274, %s275
      %p279 = pneg %p273
      %p280 = scmp.eq.s32.totalorder %s23, 1
      %p281 = por %p279, %p280
      %p282 = scmp.ne.s32.totalorder %s274, %s277
      %p283 = scmp.eq.s32.totalorder %s23, 0
      %p284 = por %p282, %p283
      %p285 = scmp.ne.s32.totalorder %s274, %s277
      %p286 = scmp.eq.s32.totalorder %s28, 1
      %p287 = por %p285, %p286
      %p288 = scmp.ne.s32.totalorder %s277, %s278
      %p289 = scmp.eq.s32.totalorder %s28, 0
      %p290 = por %p288, %p289
      %p291 = scmp.ne.s32.totalorder %s277, %s278
      %p292 = scmp.eq.s32.totalorder %s29, 1
      %p293 = por %p291, %p292
      %p295 = scmp.ne.s32.totalorder %s278, %s294
      %p296 = scmp.eq.s32.totalorder %s29, 0
      %p297 = por %p295, %p296
      %s298 = ssub.s32 %s31, %s38
      %p299 = scmp.eq.s32.totalorder %s298, 0
      %s301 = sadd.s32 %s300, 1
      %s302 = scalar_select %p299, %s300, %s301
      %p305 = pneg %p299
      %p306 = scmp.eq.s32.totalorder %s23, 1
      %p307 = por %p305, %p306
      %p308 = scmp.ne.s32.totalorder %s300, %s303
      %p309 = scmp.eq.s32.totalorder %s23, 0
      %p310 = por %p308, %p309
      %p311 = scmp.ne.s32.totalorder %s300, %s303
      %p312 = scmp.eq.s32.totalorder %s28, 1
      %p313 = por %p311, %p312
      %p314 = scmp.ne.s32.totalorder %s303, %s304
      %p315 = scmp.eq.s32.totalorder %s28, 0
      %p316 = por %p314, %p315
      %p317 = scmp.ne.s32.totalorder %s303, %s304
      %p318 = scmp.eq.s32.totalorder %s29, 1
      %p319 = por %p317, %p318
      %p321 = scmp.ne.s32.totalorder %s304, %s320
      %p322 = scmp.eq.s32.totalorder %s29, 0
      %p323 = por %p321, %p322
      %s324 = ssub.s32 %s31, %s38
      %p325 = scmp.eq.s32.totalorder %s324, 0
      %s327 = sadd.s32 %s326, 1
      %s328 = scalar_select %p325, %s326, %s327
      %p331 = pneg %p325
      %p332 = scmp.eq.s32.totalorder %s23, 1
      %p333 = por %p331, %p332
      %p334 = scmp.ne.s32.totalorder %s326, %s329
      %p335 = scmp.eq.s32.totalorder %s23, 0
      %p336 = por %p334, %p335
      %p337 = scmp.ne.s32.totalorder %s326, %s329
      %p338 = scmp.eq.s32.totalorder %s28, 1
      %p339 = por %p337, %p338
      %p340 = scmp.ne.s32.totalorder %s329, %s330
      %p341 = scmp.eq.s32.totalorder %s28, 0
      %p342 = por %p340, %p341
      %p343 = scmp.ne.s32.totalorder %s329, %s330
      %p344 = scmp.eq.s32.totalorder %s29, 1
      %p345 = por %p343, %p344
      %p347 = scmp.ne.s32.totalorder %s330, %s346
      %p348 = scmp.eq.s32.totalorder %s29, 0
      %p349 = por %p347, %p348
      %s350 = ssub.s32 %s31, %s38
      %p351 = scmp.eq.s32.totalorder %s350, 0
      %s353 = sadd.s32 %s352, 1
      %s354 = scalar_select %p351, %s352, %s353
      %p357 = pneg %p351
      %p358 = scmp.eq.s32.totalorder %s23, 1
      %p359 = por %p357, %p358
      %p360 = scmp.ne.s32.totalorder %s352, %s355
      %p361 = scmp.eq.s32.totalorder %s23, 0
      %p362 = por %p360, %p361
      %p363 = scmp.ne.s32.totalorder %s352, %s355
      %p364 = scmp.eq.s32.totalorder %s28, 1
      %p365 = por %p363, %p364
      %p366 = scmp.ne.s32.totalorder %s355, %s356
      %p367 = scmp.eq.s32.totalorder %s28, 0
      %p368 = por %p366, %p367
      %p369 = scmp.ne.s32.totalorder %s355, %s356
      %p370 = scmp.eq.s32.totalorder %s29, 1
      %p371 = por %p369, %p370
      %p373 = scmp.ne.s32.totalorder %s356, %s372
      %p374 = scmp.eq.s32.totalorder %s29, 0
      %p375 = por %p373, %p374
      %s376 = ssub.s32 %s31, %s38
      %p377 = scmp.eq.s32.totalorder %s376, 0
      %s379 = sadd.s32 %s378, 1
      %s380 = scalar_select %p377, %s378, %s379
      %p383 = pneg %p377
      %p384 = scmp.eq.s32.totalorder %s23, 1
      %p385 = por %p383, %p384
      %p386 = scmp.ne.s32.totalorder %s378, %s381
      %p387 = scmp.eq.s32.totalorder %s23, 0
      %p388 = por %p386, %p387
      %p389 = scmp.ne.s32.totalorder %s378, %s381
      %p390 = scmp.eq.s32.totalorder %s28, 1
      %p391 = por %p389, %p390
      %p392 = scmp.ne.s32.totalorder %s381, %s382
      %p393 = scmp.eq.s32.totalorder %s28, 0
      %p394 = por %p392, %p393
      %p395 = scmp.ne.s32.totalorder %s381, %s382
      %p396 = scmp.eq.s32.totalorder %s29, 1
      %p397 = por %p395, %p396
      %p399 = scmp.ne.s32.totalorder %s382, %s398
      %p400 = scmp.eq.s32.totalorder %s29, 0
      %p401 = por %p399, %p400
      %s402 = ssub.s32 %s30, %s42
      %p403 = scmp.eq.s32.totalorder %s402, 0
      %s405 = sadd.s32 %s404, 1
      %s406 = scalar_select %p403, %s404, %s405
      %p409 = pneg %p403
      %p410 = scmp.eq.s32.totalorder %s23, 1
      %p411 = por %p409, %p410
      %p412 = scmp.ne.s32.totalorder %s404, %s407
      %p413 = scmp.eq.s32.totalorder %s23, 0
      %p414 = por %p412, %p413
      %p415 = scmp.ne.s32.totalorder %s404, %s407
      %p416 = scmp.eq.s32.totalorder %s28, 1
      %p417 = por %p415, %p416
      %p418 = scmp.ne.s32.totalorder %s407, %s408
      %p419 = scmp.eq.s32.totalorder %s28, 0
      %p420 = por %p418, %p419
      %p421 = scmp.ne.s32.totalorder %s407, %s408
      %p422 = scmp.eq.s32.totalorder %s29, 1
      %p423 = por %p421, %p422
      %p425 = scmp.ne.s32.totalorder %s408, %s424
      %p426 = scmp.eq.s32.totalorder %s29, 0
      %p427 = por %p425, %p426
      %p428 = scmp.le.s32.totalorder 1, %s23
      %p429 = scmp.lt.s32.totalorder %s23, 3
      %p430 = pnand %p428, %p429
      %p431 = pneg %p430
      // Predicated region
      $region9: #{tpu_custom_call.1} parent=5 // pred_check
        _
      $region10: #{tpu_custom_call.1} parent=5 // pred_check_branch
        %433 = sbr.rel (%p430) target = $region12
      $region11: #{tpu_custom_call.1} parent=5 // pred_region
        %s434 = ssub.s32 %s23, 1
        // Predicated region
        $region13: #{tpu_custom_call.1} parent=11 // pred_check
          %p435 = pneg %p61
        $region14: #{tpu_custom_call.1} parent=11 // pred_check_branch
          %437 = sbr.rel (%p435) target = $region16
        $region15: #{tpu_custom_call.1} parent=11 // pred_region
          %s438 = smul.u32 2, %s32
          %s440 = ssub.s32 512, 512
          %441 = vsyncadd [#allocation3], %s440
          %s442 = smul.addr %s438, 2
          %s443 = smul.addr %s442, 128
          %s444 = scalar_lea.hbm %s0, %s443
          %s445 = sshll.u32 [#allocation2], 4
          %s446 = int_to_ptr.vmem [resolvable:$true] %s445
          %451 = dma.hbm_to_vmem [thread:$0]  %s444, 512, %s446, [#allocation3], 128, 128, 8
        $region16: #{tpu_custom_call.1} parent=11 // pred_fallthru
          _
        // Predicated region
        $region17: #{tpu_custom_call.1} parent=11 // pred_check
          %p452 = pneg %p82
        $region18: #{tpu_custom_call.1} parent=11 // pred_check_branch
          %454 = sbr.rel (%p452) target = $region20
        $region19: #{tpu_custom_call.1} parent=11 // pred_region
          %s456 = ssub.s32 256, 256
          %457 = vsyncadd [#allocation6], %s456
          %s458 = sshll.u32 [#allocation5], 4
          %s459 = int_to_ptr.vmem [resolvable:$true] %s458
          %464 = dma.hbm_to_vmem [thread:$0]  %s1, 256, %s459, [#allocation6], 128, 128, 8
        $region20: #{tpu_custom_call.1} parent=11 // pred_fallthru
          _
      $region12: #{tpu_custom_call.1} parent=5 // pred_fallthru
        _
      %p465 = scmp.lt.s32.totalorder %s23, 2
      // Predicated region
      $region21: #{tpu_custom_call.1} parent=5 // pred_check
        %p466 = pneg %p465
      $region22: #{tpu_custom_call.1} parent=5 // pred_check_branch
        %468 = sbr.rel (%p466) target = $region24
      $region23: #{tpu_custom_call.1} parent=5 // pred_region
        // Predicated region
        $region25: #{tpu_custom_call.1} parent=23 // pred_check
          %p469 = pneg %p102
        $region26: #{tpu_custom_call.1} parent=23 // pred_check_branch
          %471 = sbr.rel (%p469) target = $region28
        $region27: #{tpu_custom_call.1} parent=23 // pred_region
          %s472 = sand.u32 %s23, 1
          %s473 = scalar_lea.sflag [#allocation3], %s472
          %s474 = sand.u32 %s92, 1
          %s475 = smul.addr %s474, 192
          %s476 = scalar_lea.vmem [#allocation7], %s475
          %s478 = ssub.s32 3072, 3072
          %479 = vsyncadd %s473, %s478
          %s480 = smul.addr %s31, 48
          %s481 = smul.addr %s480, 64
          %s482 = scalar_lea.hbm %s2, %s481
          %s483 = sshll.u32 %s476, 4
          %s484 = int_to_ptr.vmem [resolvable:$true] %s483
          %489 = dma.hbm_to_vmem [thread:$0]  %s482, 3072, %s484, %s473, 192, 192, 12
        $region28: #{tpu_custom_call.1} parent=23 // pred_fallthru
          _
        // Predicated region
        $region29: #{tpu_custom_call.1} parent=23 // pred_check
          %p490 = pneg %p128
        $region30: #{tpu_custom_call.1} parent=23 // pred_check_branch
          %492 = sbr.rel (%p490) target = $region32
        $region31: #{tpu_custom_call.1} parent=23 // pred_region
          %s493 = sand.u32 %s23, 1
          %s494 = scalar_lea.sflag [#allocation3], %s493
          %s495 = sand.u32 %s118, 1
          %s496 = smul.addr %s495, 3
          %s497 = scalar_lea.vmem [#allocation8], %s496
          %s499 = ssub.s32 48, 48
          %500 = vsyncadd %s494, %s499
          %s501 = smul.addr %s31, 3
          %s502 = smul.addr %s501, 16
          %s503 = scalar_lea.hbm %s3, %s502
          %s505 = sshll.u32 %s497, 4
          %s506 = int_to_ptr.vmem [resolvable:$true] %s505
          %508 = dma.hbm_to_vmem [thread:$0]  %s503, 48, %s506, %s494
        $region32: #{tpu_custom_call.1} parent=23 // pred_fallthru
          _
        // Predicated region
        $region33: #{tpu_custom_call.1} parent=23 // pred_check
          %p509 = pneg %p154
        $region34: #{tpu_custom_call.1} parent=23 // pred_check_branch
          %511 = sbr.rel (%p509) target = $region36
        $region35: #{tpu_custom_call.1} parent=23 // pred_region
          %s512 = sand.u32 %s23, 1
          %s513 = scalar_lea.sflag [#allocation3], %s512
          %s514 = sand.u32 %s144, 1
          %s515 = smul.addr %s514, 64
          %s516 = scalar_lea.vmem [#allocation9], %s515
          %s518 = ssub.s32 1024, 1024
          %519 = vsyncadd %s513, %s518
          %s520 = smul.addr %s31, 16
          %s521 = smul.addr %s520, 64
          %s522 = scalar_lea.hbm %s4, %s521
          %s523 = sshll.u32 %s516, 4
          %s524 = int_to_ptr.vmem [resolvable:$true] %s523
          %529 = dma.hbm_to_vmem [thread:$0]  %s522, 1024, %s524, %s513, 64, 64, 4
        $region36: #{tpu_custom_call.1} parent=23 // pred_fallthru
          _
        // Predicated region
        $region37: #{tpu_custom_call.1} parent=23 // pred_check
          %p530 = pneg %p180
        $region38: #{tpu_custom_call.1} parent=23 // pred_check_branch
          %532 = sbr.rel (%p530) target = $region40
        $region39: #{tpu_custom_call.1} parent=23 // pred_region
          %p533 = scmp.lt.s32.totalorder %s31, 1
          %s534 = scalar_select %p533, %s31, 1
          %s535 = scalar_lea.vmem %s5, %s534
        $region40: #{tpu_custom_call.1} parent=23 // pred_fallthru
          _
        // Predicated region
        $region41: #{tpu_custom_call.1} parent=23 // pred_check
          %p536 = pneg %p206
        $region42: #{tpu_custom_call.1} parent=23 // pred_check_branch
          %538 = sbr.rel (%p536) target = $region44
        $region43: #{tpu_custom_call.1} parent=23 // pred_region
          %p539 = scmp.lt.s32.totalorder %s31, 1
          %s540 = scalar_select %p539, %s31, 1
          %s541 = scalar_lea.vmem %s6, %s540
        $region44: #{tpu_custom_call.1} parent=23 // pred_fallthru
          _
        // Predicated region
        $region45: #{tpu_custom_call.1} parent=23 // pred_check
          %p542 = pneg %p232
        $region46: #{tpu_custom_call.1} parent=23 // pred_check_branch
          %544 = sbr.rel (%p542) target = $region48
        $region47: #{tpu_custom_call.1} parent=23 // pred_region
          %p545 = scmp.lt.s32.totalorder %s31, 1
          %s546 = scalar_select %p545, %s31, 1
          %s547 = scalar_lea.vmem %s7, %s546
        $region48: #{tpu_custom_call.1} parent=23 // pred_fallthru
          _
        // Predicated region
        $region49: #{tpu_custom_call.1} parent=23 // pred_check
          %p548 = pneg %p258
        $region50: #{tpu_custom_call.1} parent=23 // pred_check_branch
          %550 = sbr.rel (%p548) target = $region52
        $region51: #{tpu_custom_call.1} parent=23 // pred_region
          %s551 = sand.u32 %s23, 1
          %s552 = scalar_lea.sflag [#allocation3], %s551
          %s553 = sand.u32 %s248, 1
          %s554 = smul.addr %s553, 128
          %s555 = scalar_lea.vmem [#allocation10], %s554
          %s557 = ssub.s32 2048, 2048
          %558 = vsyncadd %s552, %s557
          %s559 = smul.addr %s31, 32
          %s560 = smul.addr %s559, 64
          %s561 = scalar_lea.hbm %s8, %s560
          %s562 = sshll.u32 %s555, 4
          %s563 = int_to_ptr.vmem [resolvable:$true] %s562
          %568 = dma.hbm_to_vmem [thread:$0]  %s561, 2048, %s563, %s552, 128, 128, 8
        $region52: #{tpu_custom_call.1} parent=23 // pred_fallthru
          _
        // Predicated region
        $region53: #{tpu_custom_call.1} parent=23 // pred_check
          %p569 = pneg %p284
        $region54: #{tpu_custom_call.1} parent=23 // pred_check_branch
          %571 = sbr.rel (%p569) target = $region56
        $region55: #{tpu_custom_call.1} parent=23 // pred_region
          %p572 = scmp.lt.s32.totalorder %s31, 1
          %s573 = scalar_select %p572, %s31, 1
          %s574 = smul.addr %s573, 2
          %s575 = scalar_lea.vmem %s9, %s574
        $region56: #{tpu_custom_call.1} parent=23 // pred_fallthru
          _
        // Predicated region
        $region57: #{tpu_custom_call.1} parent=23 // pred_check
          %p576 = pneg %p310
        $region58: #{tpu_custom_call.1} parent=23 // pred_check_branch
          %578 = sbr.rel (%p576) target = $region60
        $region59: #{tpu_custom_call.1} parent=23 // pred_region
          %s579 = sand.u32 %s23, 1
          %s580 = scalar_lea.sflag [#allocation3], %s579
          %s581 = sand.u32 %s300, 1
          %s582 = smul.addr %s581, 128
          %s583 = scalar_lea.vmem [#allocation11], %s582
          %s585 = ssub.s32 2048, 2048
          %586 = vsyncadd %s580, %s585
          %s587 = smul.addr %s31, 32
          %s588 = smul.addr %s587, 64
          %s589 = scalar_lea.hbm %s10, %s588
          %s590 = sshll.u32 %s583, 4
          %s591 = int_to_ptr.vmem [resolvable:$true] %s590
          %596 = dma.hbm_to_vmem [thread:$0]  %s589, 2048, %s591, %s580, 64, 64, 4
        $region60: #{tpu_custom_call.1} parent=23 // pred_fallthru
          _
        // Predicated region
        $region61: #{tpu_custom_call.1} parent=23 // pred_check
          %p597 = pneg %p336
        $region62: #{tpu_custom_call.1} parent=23 // pred_check_branch
          %599 = sbr.rel (%p597) target = $region64
        $region63: #{tpu_custom_call.1} parent=23 // pred_region
          %p600 = scmp.lt.s32.totalorder %s31, 1
          %s601 = scalar_select %p600, %s31, 1
          %s602 = scalar_lea.vmem %s11, %s601
        $region64: #{tpu_custom_call.1} parent=23 // pred_fallthru
          _
        // Predicated region
        $region65: #{tpu_custom_call.1} parent=23 // pred_check
          %p603 = pneg %p362
        $region66: #{tpu_custom_call.1} parent=23 // pred_check_branch
          %605 = sbr.rel (%p603) target = $region68
        $region67: #{tpu_custom_call.1} parent=23 // pred_region
          %p606 = scmp.lt.s32.totalorder %s31, 1
          %s607 = scalar_select %p606, %s31, 1
          %s608 = scalar_lea.vmem %s12, %s607
        $region68: #{tpu_custom_call.1} parent=23 // pred_fallthru
          _
        // Predicated region
        $region69: #{tpu_custom_call.1} parent=23 // pred_check
          %p609 = pneg %p388
        $region70: #{tpu_custom_call.1} parent=23 // pred_check_branch
          %611 = sbr.rel (%p609) target = $region72
        $region71: #{tpu_custom_call.1} parent=23 // pred_region
          %p612 = scmp.lt.s32.totalorder %s31, 1
          %s613 = scalar_select %p612, %s31, 1
          %s614 = scalar_lea.vmem %s13, %s613
        $region72: #{tpu_custom_call.1} parent=23 // pred_fallthru
          _
      $region24: #{tpu_custom_call.1} parent=5 // pred_fallthru
        _
      %p615 = scmp.le.s32.totalorder 1, %s23
      %p616 = scmp.lt.s32.totalorder %s23, 3
      %p617 = pnand %p615, %p616
      %p618 = pneg %p617
      // Predicated region
      $region73: #{tpu_custom_call.1} parent=5 // pred_check
        _
      $region74: #{tpu_custom_call.1} parent=5 // pred_check_branch
        %620 = sbr.rel (%p617) target = $region76
      $region75: #{tpu_custom_call.1} parent=5 // pred_region
        %s621 = ssub.s32 %s23, 1
        // Predicated region
        $region77: #{tpu_custom_call.1} parent=75 // pred_check
          %p622 = pneg %p61
        $region78: #{tpu_custom_call.1} parent=75 // pred_check_branch
          %624 = sbr.rel (%p622) target = $region80
        $region79: #{tpu_custom_call.1} parent=75 // pred_region
          %625 = dma.done [#allocation3], 512
        $region80: #{tpu_custom_call.1} parent=75 // pred_fallthru
          _
        // Predicated region
        $region81: #{tpu_custom_call.1} parent=75 // pred_check
          %p626 = pneg %p82
        $region82: #{tpu_custom_call.1} parent=75 // pred_check_branch
          %628 = sbr.rel (%p626) target = $region84
        $region83: #{tpu_custom_call.1} parent=75 // pred_region
          %629 = dma.done [#allocation6], 256
        $region84: #{tpu_custom_call.1} parent=75 // pred_fallthru
          _
        %s630 = sand.u32 %s28, 1
        %s631 = scalar_lea.sflag [#allocation3], %s630
        %s632 = sand.u32 %s95, 1
        %s633 = smul.addr %s632, 192
        %s634 = scalar_lea.vmem [#allocation7], %s633
        // Predicated region
        $region85: #{tpu_custom_call.1} parent=75 // pred_check
          %p635 = pneg %p108
        $region86: #{tpu_custom_call.1} parent=75 // pred_check_branch
          %637 = sbr.rel (%p635) target = $region88
        $region87: #{tpu_custom_call.1} parent=75 // pred_region
          %638 = dma.done %s631, 3072
        $region88: #{tpu_custom_call.1} parent=75 // pred_fallthru
          _
        %s639 = sand.u32 %s28, 1
        %s640 = scalar_lea.sflag [#allocation3], %s639
        %s641 = sand.u32 %s121, 1
        %s642 = smul.addr %s641, 3
        %s643 = scalar_lea.vmem [#allocation8], %s642
        // Predicated region
        $region89: #{tpu_custom_call.1} parent=75 // pred_check
          %p644 = pneg %p134
        $region90: #{tpu_custom_call.1} parent=75 // pred_check_branch
          %646 = sbr.rel (%p644) target = $region92
        $region91: #{tpu_custom_call.1} parent=75 // pred_region
          %647 = dma.done %s640, 48
        $region92: #{tpu_custom_call.1} parent=75 // pred_fallthru
          _
        %s648 = sand.u32 %s28, 1
        %s649 = scalar_lea.sflag [#allocation3], %s648
        %s650 = sand.u32 %s147, 1
        %s651 = smul.addr %s650, 64
        %s652 = scalar_lea.vmem [#allocation9], %s651
        // Predicated region
        $region93: #{tpu_custom_call.1} parent=75 // pred_check
          %p653 = pneg %p160
        $region94: #{tpu_custom_call.1} parent=75 // pred_check_branch
          %655 = sbr.rel (%p653) target = $region96
        $region95: #{tpu_custom_call.1} parent=75 // pred_region
          %656 = dma.done %s649, 1024
        $region96: #{tpu_custom_call.1} parent=75 // pred_fallthru
          _
        %s657 = sand.u32 %s28, 1
        %s658 = scalar_lea.sflag [#allocation3], %s657
        %s659 = sand.u32 %s251, 1
        %s660 = smul.addr %s659, 128
        %s661 = scalar_lea.vmem [#allocation10], %s660
        // Predicated region
        $region97: #{tpu_custom_call.1} parent=75 // pred_check
          %p662 = pneg %p264
        $region98: #{tpu_custom_call.1} parent=75 // pred_check_branch
          %664 = sbr.rel (%p662) target = $region100
        $region99: #{tpu_custom_call.1} parent=75 // pred_region
          %665 = dma.done %s658, 2048
        $region100: #{tpu_custom_call.1} parent=75 // pred_fallthru
          _
        %s666 = sand.u32 %s28, 1
        %s667 = scalar_lea.sflag [#allocation3], %s666
        %s668 = sand.u32 %s303, 1
        %s669 = smul.addr %s668, 128
        %s670 = scalar_lea.vmem [#allocation11], %s669
        // Predicated region
        $region101: #{tpu_custom_call.1} parent=75 // pred_check
          %p671 = pneg %p316
        $region102: #{tpu_custom_call.1} parent=75 // pred_check_branch
          %673 = sbr.rel (%p671) target = $region104
        $region103: #{tpu_custom_call.1} parent=75 // pred_region
          %674 = dma.done %s667, 2048
        $region104: #{tpu_custom_call.1} parent=75 // pred_fallthru
          _
        %p675 = pneg %p61
        %p676 = pneg %p58
        %p677 = pneg %p82
        %p678 = pneg %p79
        %s679 = sand.u32 %s28, 1
        %s680 = scalar_lea.sflag [#allocation3], %s679
        %s681 = sand.u32 %s95, 1
        %s682 = smul.addr %s681, 192
        %s683 = scalar_lea.vmem [#allocation7], %s682
        %p684 = pneg %p108
        %p685 = pneg %p105
        %s686 = sand.u32 %s28, 1
        %s687 = scalar_lea.sflag [#allocation3], %s686
        %s688 = sand.u32 %s121, 1
        %s689 = smul.addr %s688, 3
        %s690 = scalar_lea.vmem [#allocation8], %s689
        %p691 = pneg %p134
        %p692 = pneg %p131
        %s693 = sand.u32 %s28, 1
        %s694 = scalar_lea.sflag [#allocation3], %s693
        %s695 = sand.u32 %s147, 1
        %s696 = smul.addr %s695, 64
        %s697 = scalar_lea.vmem [#allocation9], %s696
        %p698 = pneg %p160
        %p699 = pneg %p157
        %p700 = scmp.lt.s32.totalorder %s33, 1
        %s701 = scalar_select %p700, %s33, 1
        %s702 = scalar_lea.vmem %s5, %s701
        %p703 = pneg %p186
        %p704 = pneg %p183
        %p705 = scmp.lt.s32.totalorder %s33, 1
        %s706 = scalar_select %p705, %s33, 1
        %s707 = scalar_lea.vmem %s6, %s706
        %p708 = pneg %p212
        %p709 = pneg %p209
        %p710 = scmp.lt.s32.totalorder %s33, 1
        %s711 = scalar_select %p710, %s33, 1
        %s712 = scalar_lea.vmem %s7, %s711
        %p713 = pneg %p238
        %p714 = pneg %p235
        %s715 = sand.u32 %s28, 1
        %s716 = scalar_lea.sflag [#allocation3], %s715
        %s717 = sand.u32 %s251, 1
        %s718 = smul.addr %s717, 128
        %s719 = scalar_lea.vmem [#allocation10], %s718
        %p720 = pneg %p264
        %p721 = pneg %p261
        %p722 = scmp.lt.s32.totalorder %s33, 1
        %s723 = scalar_select %p722, %s33, 1
        %s724 = smul.addr %s723, 2
        %s725 = scalar_lea.vmem %s9, %s724
        %p726 = pneg %p290
        %p727 = pneg %p287
        %s728 = sand.u32 %s28, 1
        %s729 = scalar_lea.sflag [#allocation3], %s728
        %s730 = sand.u32 %s303, 1
        %s731 = smul.addr %s730, 128
        %s732 = scalar_lea.vmem [#allocation11], %s731
        %p733 = pneg %p316
        %p734 = pneg %p313
        %p735 = scmp.lt.s32.totalorder %s33, 1
        %s736 = scalar_select %p735, %s33, 1
        %s737 = scalar_lea.vmem %s11, %s736
        %p738 = pneg %p342
        %p739 = pneg %p339
        %p740 = scmp.lt.s32.totalorder %s33, 1
        %s741 = scalar_select %p740, %s33, 1
        %s742 = scalar_lea.vmem %s12, %s741
        %p743 = pneg %p368
        %p744 = pneg %p365
        %p745 = scmp.lt.s32.totalorder %s33, 1
        %s746 = scalar_select %p745, %s33, 1
        %s747 = scalar_lea.vmem %s13, %s746
        %p748 = pneg %p394
        %p749 = pneg %p391
        %p750 = pneg %p420
        %p751 = pneg %p417
        %s752 = smul.u32 2, %s32
        %p753 = scmp.lt.s32.totalorder %s33, 1
        %s754 = scalar_select %p753, %s33, 1
        %s755 = scalar_lea.vmem %s5, %s754
        %p756 = scmp.lt.s32.totalorder %s33, 1
        %s757 = scalar_select %p756, %s33, 1
        %s758 = scalar_lea.vmem %s6, %s757
        %p759 = scmp.lt.s32.totalorder %s33, 1
        %s760 = scalar_select %p759, %s33, 1
        %s761 = scalar_lea.vmem %s7, %s760
        %p762 = scmp.lt.s32.totalorder %s33, 1
        %s763 = scalar_select %p762, %s33, 1
        %s764 = smul.addr %s763, 2
        %s765 = scalar_lea.vmem %s9, %s764
        %p766 = scmp.lt.s32.totalorder %s33, 1
        %s767 = scalar_select %p766, %s33, 1
        %s768 = scalar_lea.vmem %s11, %s767
        %p769 = scmp.lt.s32.totalorder %s33, 1
        %s770 = scalar_select %p769, %s33, 1
        %s771 = scalar_lea.vmem %s12, %s770
        %p772 = scmp.lt.s32.totalorder %s33, 1
        %s773 = scalar_select %p772, %s33, 1
        %s774 = scalar_lea.vmem %s13, %s773
        %s775 = smul.u32 2, %s32
        %p777 = scmp.eq.s32.totalorder %s33, 0
        // Predicated region
        $region105: #{tpu_custom_call.1} parent=75 // pred_check
          %p778 = pneg %p777
        $region106: #{tpu_custom_call.1} parent=75 // pred_check_branch
          %780 = sbr.rel (%p778) target = $region108
        $region107: #{tpu_custom_call.1} parent=75 // pred_region
          %v781 = vld [vmem:[#allocation2] sm:$0xff]
          %v782 = vld [vmem:[#allocation2 + $0x8] sm:$0xff]
          %v783 = vld [vmem:[#allocation2 + $0x10] sm:$0xff]
          %v784 = vld [vmem:[#allocation2 + $0x18] sm:$0xff]
          %v785 = vld [vmem:[#allocation5] sm:$0xff]
          %v786 = vld [vmem:[#allocation5 + $0x8] sm:$0xff]
          %v787 = vadd.f32 %v781, %v785
          %v788 = vadd.f32 %v782, %v786
          %v789 = vadd.f32 %v783, %v785
          %v790 = vadd.f32 %v784, %v786
          %791 = vst [vmem:[#allocation12] sm:$0xff] %v787
          %792 = vst [vmem:[#allocation12 + $0x8] sm:$0xff] %v788
          %793 = vst [vmem:[#allocation12 + $0x10] sm:$0xff] %v789
          %794 = vst [vmem:[#allocation12 + $0x18] sm:$0xff] %v790
        $region108: #{tpu_custom_call.1} parent=75 // pred_fallthru
          _
        %v795 = vld [vmem:[%s634] sm:$0xff]
        %v796 = vld [vmem:[%s634 + $0x8] sm:$0xf]
        %v797 = vld [vmem:[%s634 + $0xc] sm:$0xff]
        %v798 = vld [vmem:[%s634 + $0x14] sm:$0xf]
        %v799 = vld [vmem:[%s634 + $0x18] sm:$0xff]
        %v800 = vld [vmem:[%s634 + $0x20] sm:$0xf]
        %v801 = vld [vmem:[%s634 + $0x24] sm:$0xff]
        %v802 = vld [vmem:[%s634 + $0x2c] sm:$0xf]
        %v803 = vld [vmem:[%s634 + $0x30] sm:$0xff]
        %v804 = vld [vmem:[%s634 + $0x38] sm:$0xf]
        %v805 = vld [vmem:[%s634 + $0x3c] sm:$0xff]
        %v806 = vld [vmem:[%s634 + $0x44] sm:$0xf]
        %v807 = vld [vmem:[%s634 + $0x48] sm:$0xff]
        %v808 = vld [vmem:[%s634 + $0x50] sm:$0xf]
        %v809 = vld [vmem:[%s634 + $0x54] sm:$0xff]
        %v810 = vld [vmem:[%s634 + $0x5c] sm:$0xf]
        %v811 = vld [vmem:[%s634 + $0x60] sm:$0xff]
        %v812 = vld [vmem:[%s634 + $0x68] sm:$0xf]
        %v813 = vld [vmem:[%s634 + $0x6c] sm:$0xff]
        %v814 = vld [vmem:[%s634 + $0x74] sm:$0xf]
        %v815 = vld [vmem:[%s634 + $0x78] sm:$0xff]
        %v816 = vld [vmem:[%s634 + $0x80] sm:$0xf]
        %v817 = vld [vmem:[%s634 + $0x84] sm:$0xff]
        %v818 = vld [vmem:[%s634 + $0x8c] sm:$0xf]
        %v819 = vld [vmem:[%s634 + $0x90] sm:$0xff]
        %v820 = vld [vmem:[%s634 + $0x98] sm:$0xf]
        %v821 = vld [vmem:[%s634 + $0x9c] sm:$0xff]
        %v822 = vld [vmem:[%s634 + $0xa4] sm:$0xf]
        %v823 = vld [vmem:[%s634 + $0xa8] sm:$0xff]
        %v824 = vld [vmem:[%s634 + $0xb0] sm:$0xf]
        %v825 = vld [vmem:[%s634 + $0xb4] sm:$0xff]
        %v826 = vld [vmem:[%s634 + $0xbc] sm:$0xf]
        %v827 = vld [vmem:[#allocation12] sm:$0xff]
        %v828 = vld [vmem:[#allocation12 + $0x8] sm:$0xff]
        %v829 = vld [vmem:[#allocation12 + $0x10] sm:$0xff]
        %v830 = vld [vmem:[#allocation12 + $0x18] sm:$0xff]
        %v831 = vpack.c.bf16 %v828, %v827
        %v832 = vpack.c.bf16 %v830, %v829
        %v833 = vld [vmem:[%s643] sm:$0x7]
        %v835 = vlaneseq
        %v836 = vshrl.u32 %v835, 7
        %v837 = vsub.s32 0, %v836
        %v838 = vrot.slane %v833, %v837
        %v839 = vlaneseq
        %v840 = vshrl.u32 %v839, 7
        %v841 = vsub.s32 1, %v840
        %v842 = vrot.slane %v833, %v841
        %v843 = vlaneseq
        %v844 = vshrl.u32 %v843, 7
        %v845 = vsub.s32 2, %v844
        %v846 = vrot.slane %v833, %v845
        %v882 = vunpack.c.l.b16 %v795
        %v883 = vunpack.c.h.b16 %v795
        %v884 = vunpack.c.l.b16 %v796
        %v885 = vunpack.c.l.b16 %v797
        %v886 = vunpack.c.h.b16 %v797
        %v887 = vunpack.c.l.b16 %v798
        %v888 = vunpack.c.l.b16 %v799
        %v889 = vunpack.c.h.b16 %v799
        %v890 = vunpack.c.l.b16 %v800
        %v891 = vunpack.c.l.b16 %v801
        %v892 = vunpack.c.h.b16 %v801
        %v893 = vunpack.c.l.b16 %v802
        %v894 = vunpack.c.l.b16 %v803
        %v895 = vunpack.c.h.b16 %v803
        %v896 = vunpack.c.l.b16 %v804
        %v897 = vunpack.c.l.b16 %v805
        %v898 = vunpack.c.h.b16 %v805
        %v899 = vunpack.c.l.b16 %v806
        %v900 = vunpack.c.l.b16 %v807
        %v901 = vunpack.c.h.b16 %v807
        %v902 = vunpack.c.l.b16 %v808
        %v903 = vunpack.c.l.b16 %v809
        %v904 = vunpack.c.h.b16 %v809
        %v905 = vunpack.c.l.b16 %v810
        %v906 = vunpack.c.l.b16 %v811
        %v907 = vunpack.c.h.b16 %v811
        %v908 = vunpack.c.l.b16 %v812
        %v909 = vunpack.c.l.b16 %v813
        %v910 = vunpack.c.h.b16 %v813
        %v911 = vunpack.c.l.b16 %v814
        %v912 = vunpack.c.l.b16 %v815
        %v913 = vunpack.c.h.b16 %v815
        %v914 = vunpack.c.l.b16 %v816
        %v915 = vunpack.c.l.b16 %v817
        %v916 = vunpack.c.h.b16 %v817
        %v917 = vunpack.c.l.b16 %v818
        %v918 = vunpack.c.l.b16 %v819
        %v919 = vunpack.c.h.b16 %v819
        %v920 = vunpack.c.l.b16 %v820
        %v921 = vunpack.c.l.b16 %v821
        %v922 = vunpack.c.h.b16 %v821
        %v923 = vunpack.c.l.b16 %v822
        %v924 = vunpack.c.l.b16 %v823
        %v925 = vunpack.c.h.b16 %v823
        %v926 = vunpack.c.l.b16 %v824
        %v927 = vunpack.c.l.b16 %v825
        %v928 = vunpack.c.h.b16 %v825
        %v929 = vunpack.c.l.b16 %v826
        %v930 = vpack.c.b16 %v885, %v882
        %v931 = vpack.c.b16 %v886, %v883
        %v932 = vpack.c.b16 %v887, %v884
        %v933 = vpack.c.b16 %v891, %v888
        %v934 = vpack.c.b16 %v892, %v889
        %v935 = vpack.c.b16 %v893, %v890
        %v936 = vpack.c.b16 %v897, %v894
        %v937 = vpack.c.b16 %v898, %v895
        %v938 = vpack.c.b16 %v899, %v896
        %v939 = vpack.c.b16 %v903, %v900
        %v940 = vpack.c.b16 %v904, %v901
        %v941 = vpack.c.b16 %v905, %v902
        %v942 = vpack.c.b16 %v909, %v906
        %v943 = vpack.c.b16 %v910, %v907
        %v944 = vpack.c.b16 %v911, %v908
        %v945 = vpack.c.b16 %v915, %v912
        %v946 = vpack.c.b16 %v916, %v913
        %v947 = vpack.c.b16 %v917, %v914
        %v948 = vpack.c.b16 %v921, %v918
        %v949 = vpack.c.b16 %v922, %v919
        %v950 = vpack.c.b16 %v923, %v920
        %v951 = vpack.c.b16 %v927, %v924
        %v952 = vpack.c.b16 %v928, %v925
        %v953 = vpack.c.b16 %v929, %v926
        %978 = vmatprep.subr.bf16.mxu0 %v952
        %979 = vmatpush1.bf16.msra.mxu0 %v951
        %980 = vmatprep.subr.bf16.mxu0 %v949
        %981 = vmatpush1.bf16.msra.mxu0 %v948
        %982 = vmatprep.subr.bf16.mxu0 %v946
        %983 = vmatpush1.bf16.msra.mxu0 %v945
        %984 = vmatprep.subr.bf16.mxu0 %v943
        %985 = vmatpush1.bf16.msra.mxu0 %v942
        %986 = vmatprep.subr.bf16.mxu0 %v940
        %987 = vmatpush1.bf16.msra.mxu0 %v939
        %988 = vmatprep.subr.bf16.mxu0 %v937
        %989 = vmatpush1.bf16.msra.mxu0 %v936
        %990 = vmatprep.subr.bf16.mxu0 %v934
        %991 = vmatpush1.bf16.msra.mxu0 %v933
        %992 = vmatprep.subr.bf16.mxu0 %v931
        %993 = vmatpush1.bf16.msra.mxu0 %v930
        %994 = vmatprep.subr.bf16.mxu0 0
        %995 = vmatpush2.bf16.msra.mxu0 0
        %996 = vmatprep.subr.bf16.mxu0 0
        %997 = vmatpush2.bf16.msra.mxu0 0
        %998 = vmatprep.subr.bf16.mxu0 0
        %999 = vmatpush2.bf16.msra.mxu0 0
        %1000 = vmatprep.subr.bf16.mxu0 0
        %1001 = vmatpush2.bf16.msra.mxu0 0
        %1002 = vmatprep.subr.bf16.mxu0 0
        %1003 = vmatpush2.bf16.msra.mxu0 0
        %1004 = vmatprep.subr.bf16.mxu0 0
        %1005 = vmatpush2.bf16.msra.mxu0 0
        %1006 = vmatprep.subr.bf16.mxu0 0
        %1007 = vmatpush2.bf16.msra.mxu0 0
        %1008 = vmatprep.subr.bf16.mxu0 0
        %1009 = vmatpush2.bf16.msra.mxu0 0
        %1010 = vmatprep.mubr.bf16.mxu0 0
        %1011 = vmatmul.mubr.bf16.gmra.mxu0 %v831
        %v1012 = vpop.f32.mrf.mxu0
        %v1013 = vadd.f32 %v838, %v1012
        %v1014 = vpop.f32.mrf.mxu0
        %v1015 = vadd.f32 %v842, %v1014
        %v1016 = vpop.f32.mrf.mxu0
        %v1017 = vadd.f32 %v838, %v1016
        %v1018 = vpop.f32.mrf.mxu0
        %v1019 = vadd.f32 %v842, %v1018
        %1020 = vmatprep.mubr.bf16.mxu0 0
        %1021 = vmatmul.mubr.bf16.gmra.mxu0 %v832
        %v1022 = vpop.f32.mrf.mxu0
        %v1023 = vadd.f32 %v838, %v1022
        %v1024 = vpop.f32.mrf.mxu0
        %v1025 = vadd.f32 %v842, %v1024
        %v1026 = vpop.f32.mrf.mxu0
        %v1027 = vadd.f32 %v838, %v1026
        %v1028 = vpop.f32.mrf.mxu0
        %v1029 = vadd.f32 %v842, %v1028
        %1030 = vdwg.mxu0
        %1031 = vmatprep.subr.bf16.mxu0 0
        %1032 = vmatpush1.bf16.msra.mxu0 %v953
        %1033 = vmatprep.subr.bf16.mxu0 0
        %1034 = vmatpush1.bf16.msra.mxu0 %v950
        %1035 = vmatprep.subr.bf16.mxu0 0
        %1036 = vmatpush1.bf16.msra.mxu0 %v947
        %1037 = vmatprep.subr.bf16.mxu0 0
        %1038 = vmatpush1.bf16.msra.mxu0 %v944
        %1039 = vmatprep.subr.bf16.mxu0 0
        %1040 = vmatpush1.bf16.msra.mxu0 %v941
        %1041 = vmatprep.subr.bf16.mxu0 0
        %1042 = vmatpush1.bf16.msra.mxu0 %v938
        %1043 = vmatprep.subr.bf16.mxu0 0
        %1044 = vmatpush1.bf16.msra.mxu0 %v935
        %1045 = vmatprep.subr.bf16.mxu0 0
        %1046 = vmatpush1.bf16.msra.mxu0 %v932
        %1047 = vmatprep.subr.bf16.mxu0 0
        %1048 = vmatpush2.bf16.msra.mxu0 0
        %1049 = vmatprep.subr.bf16.mxu0 0
        %1050 = vmatpush2.bf16.msra.mxu0 0
        %1051 = vmatprep.subr.bf16.mxu0 0
        %1052 = vmatpush2.bf16.msra.mxu0 0
        %1053 = vmatprep.subr.bf16.mxu0 0
        %1054 = vmatpush2.bf16.msra.mxu0 0
        %1055 = vmatprep.subr.bf16.mxu0 0
        %1056 = vmatpush2.bf16.msra.mxu0 0
        %1057 = vmatprep.subr.bf16.mxu0 0
        %1058 = vmatpush2.bf16.msra.mxu0 0
        %1059 = vmatprep.subr.bf16.mxu0 0
        %1060 = vmatpush2.bf16.msra.mxu0 0
        %1061 = vmatprep.subr.bf16.mxu0 0
        %1062 = vmatpush2.bf16.msra.mxu0 0
        %1063 = vmatprep.mubr.bf16.mxu0 0
        %1064 = vmatmul.mubr.bf16.gmra.mxu0 %v831
        %v1065 = vpop.f32.mrf.mxu0
        %v1066 = vadd.f32 %v846, %v1065
        %v1067 = vpop.f32.mrf.mxu0
        %v1068 = vpop.f32.mrf.mxu0
        %v1069 = vadd.f32 %v846, %v1068
        %v1070 = vpop.f32.mrf.mxu0
        %1071 = vmatprep.mubr.bf16.mxu0 0
        %1072 = vmatmul.mubr.bf16.gmra.mxu0 %v832
        %v1073 = vpop.f32.mrf.mxu0
        %v1074 = vadd.f32 %v846, %v1073
        %v1075 = vpop.f32.mrf.mxu0
        %v1076 = vpop.f32.mrf.mxu0
        %v1077 = vadd.f32 %v846, %v1076
        %v1078 = vpop.f32.mrf.mxu0
        %1079 = vdwg.mxu0
        %vm1080 = vcmask 261120
        %v1082 = vsel %vm1080, %v1013, 0
        %v1085 = vsel %vm1080, %v1017, 0
        %v1088 = vsel %vm1080, %v1015, 0
        %v1091 = vsel %vm1080, %v1019, 0
        %1093 = vmatprep.subr.mxu0 0.0
        %1094 = vmatpush1.xpose.msra.mxu0 0.0
        %1095 = vmatprep.subr.mxu0 0.0
        %1096 = vmatpush1.xpose.msra.mxu0 0.0
        %1097 = vmatprep.subr.mxu0 0.0
        %1098 = vmatpush1.xpose.msra.mxu0 0.0
        %1099 = vmatprep.subr.mxu0 0.0
        %1100 = vmatpush1.xpose.msra.mxu0 0.0
        %1101 = vmatprep.subr.mxu0 0.0
        %1102 = vmatpush1.xpose.msra.mxu0 0.0
        %1103 = vmatprep.subr.mxu0 0.0
        %1104 = vmatpush1.xpose.msra.mxu0 0.0
        %1105 = vmatprep.subr.mxu0 0.0
        %1106 = vmatpush1.xpose.msra.mxu0 0.0
        %1107 = vmatprep.subr.mxu0 0.0
        %1108 = vmatpush1.xpose.msra.mxu0 0.0
        %1109 = vmatprep.subr.mxu0 0.0
        %1110 = vmatpush1.xpose.msra.mxu0 0.0
        %1111 = vmatprep.subr.mxu0 0.0
        %1112 = vmatpush1.xpose.msra.mxu0 0.0
        %1113 = vmatprep.subr.mxu0 0.0
        %1114 = vmatpush1.xpose.msra.mxu0 0.0
        %1115 = vmatprep.subr.mxu0 0.0
        %1116 = vmatpush1.xpose.msra.mxu0 0.0
        %1117 = vmatprep.subr.mxu0 0.0
        %1118 = vmatpush1.xpose.msra.mxu0 0.0
        %1119 = vmatprep.subr.mxu0 0.0
        %1120 = vmatpush1.xpose.msra.mxu0 0.0
        %1121 = vmatprep.subr.mxu0 0.0
        %1122 = vmatpush1.xpose.msra.mxu0 %v1091
        %1123 = vmatprep.subr.mxu0 0.0
        %1124 = vmatpush1.xpose.msra.mxu0 %v1088
        %1125 = vmatprep.subr.mxu0 0.0
        %1126 = vmatpush2.xpose.msra.mxu0 0.0
        %1127 = vmatprep.subr.mxu0 0.0
        %1128 = vmatpush2.xpose.msra.mxu0 0.0
        %1129 = vmatprep.subr.mxu0 0.0
        %1130 = vmatpush2.xpose.msra.mxu0 0.0
        %1131 = vmatprep.subr.mxu0 0.0
        %1132 = vmatpush2.xpose.msra.mxu0 0.0
        %1133 = vmatprep.subr.mxu0 0.0
        %1134 = vmatpush2.xpose.msra.mxu0 0.0
        %1135 = vmatprep.subr.mxu0 0.0
        %1136 = vmatpush2.xpose.msra.mxu0 0.0
        %1137 = vmatprep.subr.mxu0 0.0
        %1138 = vmatpush2.xpose.msra.mxu0 0.0
        %1139 = vmatprep.subr.mxu0 0.0
        %1140 = vmatpush2.xpose.msra.mxu0 0.0
        %1141 = vmatprep.subr.mxu0 0.0
        %1142 = vmatpush2.xpose.msra.mxu0 0.0
        %1143 = vmatprep.subr.mxu0 0.0
        %1144 = vmatpush2.xpose.msra.mxu0 0.0
        %1145 = vmatprep.subr.mxu0 0.0
        %1146 = vmatpush2.xpose.msra.mxu0 0.0
        %1147 = vmatprep.subr.mxu0 0.0
        %1148 = vmatpush2.xpose.msra.mxu0 0.0
        %1149 = vmatprep.subr.mxu0 0.0
        %1150 = vmatpush2.xpose.msra.mxu0 0.0
        %1151 = vmatprep.subr.mxu0 0.0
        %1152 = vmatpush2.xpose.msra.mxu0 0.0
        %1153 = vmatprep.subr.mxu0 0.0
        %1154 = vmatpush2.xpose.msra.mxu0 0.0
        %1155 = vmatprep.subr.mxu0 0.0
        %1156 = vmatpush2.xpose.msra.mxu0 0.0
        %1157 = vmatprep.mubr.f32.mxu0 0.0
        %1158 = vmatmul.mubr.f32.gmra.mxu0 %v1082
        %v1159 = vpop.f32.mrf.mxu0
        %v1160 = vadd.f32 0.0, %v1159
        %v1161 = vpop.f32.mrf.mxu0
        %1162 = vmatprep.mubr.f32.mxu0 0.0
        %1163 = vmatmul.mubr.f32.gmra.mxu0 %v1085
        %v1164 = vpop.f32.mrf.mxu0
        %v1165 = vadd.f32 0.0, %v1164
        %v1166 = vpop.f32.mrf.mxu0
        %1167 = vdwg.mxu0
        %v1169 = vsel %vm1080, %v1023, 0
        %v1172 = vsel %vm1080, %v1027, 0
        %v1175 = vsel %vm1080, %v1025, 0
        %v1178 = vsel %vm1080, %v1029, 0
        %1180 = vmatprep.subr.mxu0 0.0
        %1181 = vmatpush1.xpose.msra.mxu0 0.0
        %1182 = vmatprep.subr.mxu0 0.0
        %1183 = vmatpush1.xpose.msra.mxu0 0.0
        %1184 = vmatprep.subr.mxu0 0.0
        %1185 = vmatpush1.xpose.msra.mxu0 0.0
        %1186 = vmatprep.subr.mxu0 0.0
        %1187 = vmatpush1.xpose.msra.mxu0 0.0
        %1188 = vmatprep.subr.mxu0 0.0
        %1189 = vmatpush1.xpose.msra.mxu0 0.0
        %1190 = vmatprep.subr.mxu0 0.0
        %1191 = vmatpush1.xpose.msra.mxu0 0.0
        %1192 = vmatprep.subr.mxu0 0.0
        %1193 = vmatpush1.xpose.msra.mxu0 0.0
        %1194 = vmatprep.subr.mxu0 0.0
        %1195 = vmatpush1.xpose.msra.mxu0 0.0
        %1196 = vmatprep.subr.mxu0 0.0
        %1197 = vmatpush1.xpose.msra.mxu0 0.0
        %1198 = vmatprep.subr.mxu0 0.0
        %1199 = vmatpush1.xpose.msra.mxu0 0.0
        %1200 = vmatprep.subr.mxu0 0.0
        %1201 = vmatpush1.xpose.msra.mxu0 0.0
        %1202 = vmatprep.subr.mxu0 0.0
        %1203 = vmatpush1.xpose.msra.mxu0 0.0
        %1204 = vmatprep.subr.mxu0 0.0
        %1205 = vmatpush1.xpose.msra.mxu0 0.0
        %1206 = vmatprep.subr.mxu0 0.0
        %1207 = vmatpush1.xpose.msra.mxu0 0.0
        %1208 = vmatprep.subr.mxu0 0.0
        %1209 = vmatpush1.xpose.msra.mxu0 %v1178
        %1210 = vmatprep.subr.mxu0 0.0
        %1211 = vmatpush1.xpose.msra.mxu0 %v1175
        %1212 = vmatprep.subr.mxu0 0.0
        %1213 = vmatpush2.xpose.msra.mxu0 0.0
        %1214 = vmatprep.subr.mxu0 0.0
        %1215 = vmatpush2.xpose.msra.mxu0 0.0
        %1216 = vmatprep.subr.mxu0 0.0
        %1217 = vmatpush2.xpose.msra.mxu0 0.0
        %1218 = vmatprep.subr.mxu0 0.0
        %1219 = vmatpush2.xpose.msra.mxu0 0.0
        %1220 = vmatprep.subr.mxu0 0.0
        %1221 = vmatpush2.xpose.msra.mxu0 0.0
        %1222 = vmatprep.subr.mxu0 0.0
        %1223 = vmatpush2.xpose.msra.mxu0 0.0
        %1224 = vmatprep.subr.mxu0 0.0
        %1225 = vmatpush2.xpose.msra.mxu0 0.0
        %1226 = vmatprep.subr.mxu0 0.0
        %1227 = vmatpush2.xpose.msra.mxu0 0.0
        %1228 = vmatprep.subr.mxu0 0.0
        %1229 = vmatpush2.xpose.msra.mxu0 0.0
        %1230 = vmatprep.subr.mxu0 0.0
        %1231 = vmatpush2.xpose.msra.mxu0 0.0
        %1232 = vmatprep.subr.mxu0 0.0
        %1233 = vmatpush2.xpose.msra.mxu0 0.0
        %1234 = vmatprep.subr.mxu0 0.0
        %1235 = vmatpush2.xpose.msra.mxu0 0.0
        %1236 = vmatprep.subr.mxu0 0.0
        %1237 = vmatpush2.xpose.msra.mxu0 0.0
        %1238 = vmatprep.subr.mxu0 0.0
        %1239 = vmatpush2.xpose.msra.mxu0 0.0
        %1240 = vmatprep.subr.mxu0 0.0
        %1241 = vmatpush2.xpose.msra.mxu0 0.0
        %1242 = vmatprep.subr.mxu0 0.0
        %1243 = vmatpush2.xpose.msra.mxu0 0.0
        %1244 = vmatprep.mubr.f32.mxu0 0.0
        %1245 = vmatmul.mubr.f32.gmra.mxu0 %v1169
        %v1246 = vpop.f32.mrf.mxu0
        %v1247 = vadd.f32 0.0, %v1246
        %v1248 = vpop.f32.mrf.mxu0
        %1249 = vmatprep.mubr.f32.mxu0 0.0
        %1250 = vmatmul.mubr.f32.gmra.mxu0 %v1172
        %v1251 = vpop.f32.mrf.mxu0
        %v1252 = vadd.f32 0.0, %v1251
        %v1253 = vpop.f32.mrf.mxu0
        %1254 = vdwg.mxu0
        %v1255 = vmul.f32 %v1160, 0.17677669
        %v1256 = vmul.f32 %v1165, 0.17677669
        %v1257 = vmul.f32 %v1247, 0.17677669
        %v1258 = vmul.f32 %v1252, 0.17677669
        %vm1259 = vcmask 130048
        %v1260 = vsel %vm1259, %v1255, -inf
        %1261 = vmax.xlane.f32.xlu0 %v1260
        %v1262 = vpop.xlane.xlu0 %1261
        %v1263 = vsel %vm1259, %v1256, -inf
        %1264 = vmax.xlane.f32.xlu0 %v1263
        %v1265 = vpop.xlane.xlu0 %1264
        %v1266 = vsel %vm1259, %v1257, -inf
        %1267 = vmax.xlane.f32.xlu0 %v1266
        %v1268 = vpop.xlane.xlu0 %1267
        %v1269 = vsel %vm1259, %v1258, -inf
        %1270 = vmax.xlane.f32.xlu0 %v1269
        %v1271 = vpop.xlane.xlu0 %1270
        %v1272 = vsub.f32 %v1255, %v1262
        %v1273 = vsub.f32 %v1256, %v1265
        %v1274 = vsub.f32 %v1257, %v1268
        %v1275 = vsub.f32 %v1258, %v1271
        %v1276 = vmul.f32 %v1272, 1.442695
        %v1277 = vpow.pop %v1276
        %v1278 = vmul.f32 %v1273, 1.442695
        %v1279 = vpow.pop %v1278
        %v1280 = vmul.f32 %v1274, 1.442695
        %v1281 = vpow.pop %v1280
        %v1282 = vmul.f32 %v1275, 1.442695
        %v1283 = vpow.pop %v1282
        %v1284 = vsel %vm1259, %v1277, 0.0
        %1285 = vadd.xlane.f32.xlu0 %v1284
        %v1286 = vpop.xlane.xlu0 %1285
        %v1287 = vsel %vm1259, %v1279, 0.0
        %1288 = vadd.xlane.f32.xlu0 %v1287
        %v1289 = vpop.xlane.xlu0 %1288
        %v1290 = vsel %vm1259, %v1281, 0.0
        %1291 = vadd.xlane.f32.xlu0 %v1290
        %v1292 = vpop.xlane.xlu0 %1291
        %v1293 = vsel %vm1259, %v1283, 0.0
        %1294 = vadd.xlane.f32.xlu0 %v1293
        %v1295 = vpop.xlane.xlu0 %1294
        %v1296 = vrcp.pop %v1286
        %v1297 = vmul.f32 %v1277, %v1296
        %v1298 = vrcp.pop %v1289
        %v1299 = vmul.f32 %v1279, %v1298
        %v1300 = vrcp.pop %v1292
        %v1301 = vmul.f32 %v1281, %v1300
        %v1302 = vrcp.pop %v1295
        %v1303 = vmul.f32 %v1283, %v1302
        %v1305 = vsel %vm1259, %v1297, 0
        %v1308 = vsel %vm1259, %v1299, 0
        %1310 = vmatprep.subr.mxu0 0.0
        %1311 = vmatpush1.msra.mxu0 0.0
        %1312 = vmatprep.subr.mxu0 0.0
        %1313 = vmatpush1.msra.mxu0 0.0
        %1314 = vmatprep.subr.mxu0 0.0
        %1315 = vmatpush1.msra.mxu0 0.0
        %1316 = vmatprep.subr.mxu0 0.0
        %1317 = vmatpush1.msra.mxu0 0.0
        %1318 = vmatprep.subr.mxu0 0.0
        %1319 = vmatpush1.msra.mxu0 0.0
        %1320 = vmatprep.subr.mxu0 0.0
        %1321 = vmatpush1.msra.mxu0 0.0
        %1322 = vmatprep.subr.mxu0 0.0
        %1323 = vmatpush1.msra.mxu0 0.0
        %1324 = vmatprep.subr.mxu0 0.0
        %1325 = vmatpush1.msra.mxu0 0.0
        %1326 = vmatprep.subr.mxu0 0.0
        %1327 = vmatpush1.msra.mxu0 0.0
        %1328 = vmatprep.subr.mxu0 0.0
        %1329 = vmatpush1.msra.mxu0 0.0
        %1330 = vmatprep.subr.mxu0 0.0
        %1331 = vmatpush1.msra.mxu0 0.0
        %1332 = vmatprep.subr.mxu0 0.0
        %1333 = vmatpush1.msra.mxu0 0.0
        %1334 = vmatprep.subr.mxu0 0.0
        %1335 = vmatpush1.msra.mxu0 0.0
        %1336 = vmatprep.subr.mxu0 0.0
        %1337 = vmatpush1.msra.mxu0 0.0
        %1338 = vmatprep.subr.mxu0 0.0
        %1339 = vmatpush1.msra.mxu0 %v1069
        %1340 = vmatprep.subr.mxu0 0.0
        %1341 = vmatpush1.msra.mxu0 %v1066
        %1342 = vmatprep.subr.mxu0 0.0
        %1343 = vmatpush2.msra.mxu0 0.0
        %1344 = vmatprep.subr.mxu0 0.0
        %1345 = vmatpush2.msra.mxu0 0.0
        %1346 = vmatprep.subr.mxu0 0.0
        %1347 = vmatpush2.msra.mxu0 0.0
        %1348 = vmatprep.subr.mxu0 0.0
        %1349 = vmatpush2.msra.mxu0 0.0
        %1350 = vmatprep.subr.mxu0 0.0
        %1351 = vmatpush2.msra.mxu0 0.0
        %1352 = vmatprep.subr.mxu0 0.0
        %1353 = vmatpush2.msra.mxu0 0.0
        %1354 = vmatprep.subr.mxu0 0.0
        %1355 = vmatpush2.msra.mxu0 0.0
        %1356 = vmatprep.subr.mxu0 0.0
        %1357 = vmatpush2.msra.mxu0 0.0
        %1358 = vmatprep.subr.mxu0 0.0
        %1359 = vmatpush2.msra.mxu0 0.0
        %1360 = vmatprep.subr.mxu0 0.0
        %1361 = vmatpush2.msra.mxu0 0.0
        %1362 = vmatprep.subr.mxu0 0.0
        %1363 = vmatpush2.msra.mxu0 0.0
        %1364 = vmatprep.subr.mxu0 0.0
        %1365 = vmatpush2.msra.mxu0 0.0
        %1366 = vmatprep.subr.mxu0 0.0
        %1367 = vmatpush2.msra.mxu0 0.0
        %1368 = vmatprep.subr.mxu0 0.0
        %1369 = vmatpush2.msra.mxu0 0.0
        %1370 = vmatprep.subr.mxu0 0.0
        %1371 = vmatpush2.msra.mxu0 0.0
        %1372 = vmatprep.subr.mxu0 0.0
        %1373 = vmatpush2.msra.mxu0 0.0
        %1374 = vmatprep.mubr.f32.mxu0 0.0
        %1375 = vmatmul.mubr.f32.gmra.mxu0 %v1305
        %v1376 = vpop.f32.mrf.mxu0
        %v1377 = vadd.f32 0.0, %v1376
        %v1378 = vpop.f32.mrf.mxu0
        %1379 = vmatprep.mubr.f32.mxu0 0.0
        %1380 = vmatmul.mubr.f32.gmra.mxu0 %v1308
        %v1381 = vpop.f32.mrf.mxu0
        %v1382 = vadd.f32 0.0, %v1381
        %v1383 = vpop.f32.mrf.mxu0
        %1384 = vdwg.mxu0
        %v1386 = vsel %vm1259, %v1301, 0
        %v1389 = vsel %vm1259, %v1303, 0
        %1391 = vmatprep.subr.mxu0 0.0
        %1392 = vmatpush1.msra.mxu0 0.0
        %1393 = vmatprep.subr.mxu0 0.0
        %1394 = vmatpush1.msra.mxu0 0.0
        %1395 = vmatprep.subr.mxu0 0.0
        %1396 = vmatpush1.msra.mxu0 0.0
        %1397 = vmatprep.subr.mxu0 0.0
        %1398 = vmatpush1.msra.mxu0 0.0
        %1399 = vmatprep.subr.mxu0 0.0
        %1400 = vmatpush1.msra.mxu0 0.0
        %1401 = vmatprep.subr.mxu0 0.0
        %1402 = vmatpush1.msra.mxu0 0.0
        %1403 = vmatprep.subr.mxu0 0.0
        %1404 = vmatpush1.msra.mxu0 0.0
        %1405 = vmatprep.subr.mxu0 0.0
        %1406 = vmatpush1.msra.mxu0 0.0
        %1407 = vmatprep.subr.mxu0 0.0
        %1408 = vmatpush1.msra.mxu0 0.0
        %1409 = vmatprep.subr.mxu0 0.0
        %1410 = vmatpush1.msra.mxu0 0.0
        %1411 = vmatprep.subr.mxu0 0.0
        %1412 = vmatpush1.msra.mxu0 0.0
        %1413 = vmatprep.subr.mxu0 0.0
        %1414 = vmatpush1.msra.mxu0 0.0
        %1415 = vmatprep.subr.mxu0 0.0
        %1416 = vmatpush1.msra.mxu0 0.0
        %1417 = vmatprep.subr.mxu0 0.0
        %1418 = vmatpush1.msra.mxu0 0.0
        %1419 = vmatprep.subr.mxu0 0.0
        %1420 = vmatpush1.msra.mxu0 %v1077
        %1421 = vmatprep.subr.mxu0 0.0
        %1422 = vmatpush1.msra.mxu0 %v1074
        %1423 = vmatprep.subr.mxu0 0.0
        %1424 = vmatpush2.msra.mxu0 0.0
        %1425 = vmatprep.subr.mxu0 0.0
        %1426 = vmatpush2.msra.mxu0 0.0
        %1427 = vmatprep.subr.mxu0 0.0
        %1428 = vmatpush2.msra.mxu0 0.0
        %1429 = vmatprep.subr.mxu0 0.0
        %1430 = vmatpush2.msra.mxu0 0.0
        %1431 = vmatprep.subr.mxu0 0.0
        %1432 = vmatpush2.msra.mxu0 0.0
        %1433 = vmatprep.subr.mxu0 0.0
        %1434 = vmatpush2.msra.mxu0 0.0
        %1435 = vmatprep.subr.mxu0 0.0
        %1436 = vmatpush2.msra.mxu0 0.0
        %1437 = vmatprep.subr.mxu0 0.0
        %1438 = vmatpush2.msra.mxu0 0.0
        %1439 = vmatprep.subr.mxu0 0.0
        %1440 = vmatpush2.msra.mxu0 0.0
        %1441 = vmatprep.subr.mxu0 0.0
        %1442 = vmatpush2.msra.mxu0 0.0
        %1443 = vmatprep.subr.mxu0 0.0
        %1444 = vmatpush2.msra.mxu0 0.0
        %1445 = vmatprep.subr.mxu0 0.0
        %1446 = vmatpush2.msra.mxu0 0.0
        %1447 = vmatprep.subr.mxu0 0.0
        %1448 = vmatpush2.msra.mxu0 0.0
        %1449 = vmatprep.subr.mxu0 0.0
        %1450 = vmatpush2.msra.mxu0 0.0
        %1451 = vmatprep.subr.mxu0 0.0
        %1452 = vmatpush2.msra.mxu0 0.0
        %1453 = vmatprep.subr.mxu0 0.0
        %1454 = vmatpush2.msra.mxu0 0.0
        %1455 = vmatprep.mubr.f32.mxu0 0.0
        %1456 = vmatmul.mubr.f32.gmra.mxu0 %v1386
        %v1457 = vpop.f32.mrf.mxu0
        %v1458 = vadd.f32 0.0, %v1457
        %v1459 = vpop.f32.mrf.mxu0
        %1460 = vmatprep.mubr.f32.mxu0 0.0
        %1461 = vmatmul.mubr.f32.gmra.mxu0 %v1389
        %v1462 = vpop.f32.mrf.mxu0
        %v1463 = vadd.f32 0.0, %v1462
        %v1464 = vpop.f32.mrf.mxu0
        %1465 = vdwg.mxu0
        %1466 = vrot.lane.b32.xlu0 %v1013, 96
        %v1467 = vpop.permute.xlu0 %1466
        %1468 = vrot.lane.b32.xlu0 %v1017, 96
        %v1469 = vpop.permute.xlu0 %1468
        %1470 = vrot.lane.b32.xlu0 %v1015, 96
        %v1471 = vpop.permute.xlu0 %1470
        %1472 = vrot.lane.b32.xlu0 %v1019, 96
        %v1473 = vpop.permute.xlu0 %1472
        %v1474 = vsel %vm1080, %v1467, 0
        %v1476 = vsel %vm1080, %v1469, 0
        %v1478 = vsel %vm1080, %v1471, 0
        %v1480 = vsel %vm1080, %v1473, 0
        %1482 = vmatprep.subr.mxu0 0.0
        %1483 = vmatpush1.xpose.msra.mxu0 0.0
        %1484 = vmatprep.subr.mxu0 0.0
        %1485 = vmatpush1.xpose.msra.mxu0 0.0
        %1486 = vmatprep.subr.mxu0 0.0
        %1487 = vmatpush1.xpose.msra.mxu0 0.0
        %1488 = vmatprep.subr.mxu0 0.0
        %1489 = vmatpush1.xpose.msra.mxu0 0.0
        %1490 = vmatprep.subr.mxu0 0.0
        %1491 = vmatpush1.xpose.msra.mxu0 0.0
        %1492 = vmatprep.subr.mxu0 0.0
        %1493 = vmatpush1.xpose.msra.mxu0 0.0
        %1494 = vmatprep.subr.mxu0 0.0
        %1495 = vmatpush1.xpose.msra.mxu0 0.0
        %1496 = vmatprep.subr.mxu0 0.0
        %1497 = vmatpush1.xpose.msra.mxu0 0.0
        %1498 = vmatprep.subr.mxu0 0.0
        %1499 = vmatpush1.xpose.msra.mxu0 0.0
        %1500 = vmatprep.subr.mxu0 0.0
        %1501 = vmatpush1.xpose.msra.mxu0 0.0
        %1502 = vmatprep.subr.mxu0 0.0
        %1503 = vmatpush1.xpose.msra.mxu0 0.0
        %1504 = vmatprep.subr.mxu0 0.0
        %1505 = vmatpush1.xpose.msra.mxu0 0.0
        %1506 = vmatprep.subr.mxu0 0.0
        %1507 = vmatpush1.xpose.msra.mxu0 0.0
        %1508 = vmatprep.subr.mxu0 0.0
        %1509 = vmatpush1.xpose.msra.mxu0 0.0
        %1510 = vmatprep.subr.mxu0 0.0
        %1511 = vmatpush1.xpose.msra.mxu0 %v1480
        %1512 = vmatprep.subr.mxu0 0.0
        %1513 = vmatpush1.xpose.msra.mxu0 %v1478
        %1514 = vmatprep.subr.mxu0 0.0
        %1515 = vmatpush2.xpose.msra.mxu0 0.0
        %1516 = vmatprep.subr.mxu0 0.0
        %1517 = vmatpush2.xpose.msra.mxu0 0.0
        %1518 = vmatprep.subr.mxu0 0.0
        %1519 = vmatpush2.xpose.msra.mxu0 0.0
        %1520 = vmatprep.subr.mxu0 0.0
        %1521 = vmatpush2.xpose.msra.mxu0 0.0
        %1522 = vmatprep.subr.mxu0 0.0
        %1523 = vmatpush2.xpose.msra.mxu0 0.0
        %1524 = vmatprep.subr.mxu0 0.0
        %1525 = vmatpush2.xpose.msra.mxu0 0.0
        %1526 = vmatprep.subr.mxu0 0.0
        %1527 = vmatpush2.xpose.msra.mxu0 0.0
        %1528 = vmatprep.subr.mxu0 0.0
        %1529 = vmatpush2.xpose.msra.mxu0 0.0
        %1530 = vmatprep.subr.mxu0 0.0
        %1531 = vmatpush2.xpose.msra.mxu0 0.0
        %1532 = vmatprep.subr.mxu0 0.0
        %1533 = vmatpush2.xpose.msra.mxu0 0.0
        %1534 = vmatprep.subr.mxu0 0.0
        %1535 = vmatpush2.xpose.msra.mxu0 0.0
        %1536 = vmatprep.subr.mxu0 0.0
        %1537 = vmatpush2.xpose.msra.mxu0 0.0
        %1538 = vmatprep.subr.mxu0 0.0
        %1539 = vmatpush2.xpose.msra.mxu0 0.0
        %1540 = vmatprep.subr.mxu0 0.0
        %1541 = vmatpush2.xpose.msra.mxu0 0.0
        %1542 = vmatprep.subr.mxu0 0.0
        %1543 = vmatpush2.xpose.msra.mxu0 0.0
        %1544 = vmatprep.subr.mxu0 0.0
        %1545 = vmatpush2.xpose.msra.mxu0 0.0
        %1546 = vmatprep.mubr.f32.mxu0 0.0
        %1547 = vmatmul.mubr.f32.gmra.mxu0 %v1474
        %v1548 = vpop.f32.mrf.mxu0
        %v1549 = vadd.f32 0.0, %v1548
        %v1550 = vpop.f32.mrf.mxu0
        %1551 = vmatprep.mubr.f32.mxu0 0.0
        %1552 = vmatmul.mubr.f32.gmra.mxu0 %v1476
        %v1553 = vpop.f32.mrf.mxu0
        %v1554 = vadd.f32 0.0, %v1553
        %v1555 = vpop.f32.mrf.mxu0
        %1556 = vdwg.mxu0
        %1557 = vrot.lane.b32.xlu0 %v1023, 96
        %v1558 = vpop.permute.xlu0 %1557
        %1559 = vrot.lane.b32.xlu0 %v1027, 96
        %v1560 = vpop.permute.xlu0 %1559
        %1561 = vrot.lane.b32.xlu0 %v1025, 96
        %v1562 = vpop.permute.xlu0 %1561
        %1563 = vrot.lane.b32.xlu0 %v1029, 96
        %v1564 = vpop.permute.xlu0 %1563
        %v1565 = vsel %vm1080, %v1558, 0
        %v1567 = vsel %vm1080, %v1560, 0
        %v1569 = vsel %vm1080, %v1562, 0
        %v1571 = vsel %vm1080, %v1564, 0
        %1573 = vmatprep.subr.mxu0 0.0
        %1574 = vmatpush1.xpose.msra.mxu0 0.0
        %1575 = vmatprep.subr.mxu0 0.0
        %1576 = vmatpush1.xpose.msra.mxu0 0.0
        %1577 = vmatprep.subr.mxu0 0.0
        %1578 = vmatpush1.xpose.msra.mxu0 0.0
        %1579 = vmatprep.subr.mxu0 0.0
        %1580 = vmatpush1.xpose.msra.mxu0 0.0
        %1581 = vmatprep.subr.mxu0 0.0
        %1582 = vmatpush1.xpose.msra.mxu0 0.0
        %1583 = vmatprep.subr.mxu0 0.0
        %1584 = vmatpush1.xpose.msra.mxu0 0.0
        %1585 = vmatprep.subr.mxu0 0.0
        %1586 = vmatpush1.xpose.msra.mxu0 0.0
        %1587 = vmatprep.subr.mxu0 0.0
        %1588 = vmatpush1.xpose.msra.mxu0 0.0
        %1589 = vmatprep.subr.mxu0 0.0
        %1590 = vmatpush1.xpose.msra.mxu0 0.0
        %1591 = vmatprep.subr.mxu0 0.0
        %1592 = vmatpush1.xpose.msra.mxu0 0.0
        %1593 = vmatprep.subr.mxu0 0.0
        %1594 = vmatpush1.xpose.msra.mxu0 0.0
        %1595 = vmatprep.subr.mxu0 0.0
        %1596 = vmatpush1.xpose.msra.mxu0 0.0
        %1597 = vmatprep.subr.mxu0 0.0
        %1598 = vmatpush1.xpose.msra.mxu0 0.0
        %1599 = vmatprep.subr.mxu0 0.0
        %1600 = vmatpush1.xpose.msra.mxu0 0.0
        %1601 = vmatprep.subr.mxu0 0.0
        %1602 = vmatpush1.xpose.msra.mxu0 %v1571
        %1603 = vmatprep.subr.mxu0 0.0
        %1604 = vmatpush1.xpose.msra.mxu0 %v1569
        %1605 = vmatprep.subr.mxu0 0.0
        %1606 = vmatpush2.xpose.msra.mxu0 0.0
        %1607 = vmatprep.subr.mxu0 0.0
        %1608 = vmatpush2.xpose.msra.mxu0 0.0
        %1609 = vmatprep.subr.mxu0 0.0
        %1610 = vmatpush2.xpose.msra.mxu0 0.0
        %1611 = vmatprep.subr.mxu0 0.0
        %1612 = vmatpush2.xpose.msra.mxu0 0.0
        %1613 = vmatprep.subr.mxu0 0.0
        %1614 = vmatpush2.xpose.msra.mxu0 0.0
        %1615 = vmatprep.subr.mxu0 0.0
        %1616 = vmatpush2.xpose.msra.mxu0 0.0
        %1617 = vmatprep.subr.mxu0 0.0
        %1618 = vmatpush2.xpose.msra.mxu0 0.0
        %1619 = vmatprep.subr.mxu0 0.0
        %1620 = vmatpush2.xpose.msra.mxu0 0.0
        %1621 = vmatprep.subr.mxu0 0.0
        %1622 = vmatpush2.xpose.msra.mxu0 0.0
        %1623 = vmatprep.subr.mxu0 0.0
        %1624 = vmatpush2.xpose.msra.mxu0 0.0
        %1625 = vmatprep.subr.mxu0 0.0
        %1626 = vmatpush2.xpose.msra.mxu0 0.0
        %1627 = vmatprep.subr.mxu0 0.0
        %1628 = vmatpush2.xpose.msra.mxu0 0.0
        %1629 = vmatprep.subr.mxu0 0.0
        %1630 = vmatpush2.xpose.msra.mxu0 0.0
        %1631 = vmatprep.subr.mxu0 0.0
        %1632 = vmatpush2.xpose.msra.mxu0 0.0
        %1633 = vmatprep.subr.mxu0 0.0
        %1634 = vmatpush2.xpose.msra.mxu0 0.0
        %1635 = vmatprep.subr.mxu0 0.0
        %1636 = vmatpush2.xpose.msra.mxu0 0.0
        %1637 = vmatprep.mubr.f32.mxu0 0.0
        %1638 = vmatmul.mubr.f32.gmra.mxu0 %v1565
        %v1639 = vpop.f32.mrf.mxu0
        %v1640 = vadd.f32 0.0, %v1639
        %v1641 = vpop.f32.mrf.mxu0
        %1642 = vmatprep.mubr.f32.mxu0 0.0
        %1643 = vmatmul.mubr.f32.gmra.mxu0 %v1567
        %v1644 = vpop.f32.mrf.mxu0
        %v1645 = vadd.f32 0.0, %v1644
        %v1646 = vpop.f32.mrf.mxu0
        %1647 = vdwg.mxu0
        %v1648 = vmul.f32 %v1549, 0.17677669
        %v1649 = vmul.f32 %v1554, 0.17677669
        %v1650 = vmul.f32 %v1640, 0.17677669
        %v1651 = vmul.f32 %v1645, 0.17677669
        %v1652 = vsel %vm1259, %v1648, -inf
        %1653 = vmax.xlane.f32.xlu0 %v1652
        %v1654 = vpop.xlane.xlu0 %1653
        %v1655 = vsel %vm1259, %v1649, -inf
        %1656 = vmax.xlane.f32.xlu0 %v1655
        %v1657 = vpop.xlane.xlu0 %1656
        %v1658 = vsel %vm1259, %v1650, -inf
        %1659 = vmax.xlane.f32.xlu0 %v1658
        %v1660 = vpop.xlane.xlu0 %1659
        %v1661 = vsel %vm1259, %v1651, -inf
        %1662 = vmax.xlane.f32.xlu0 %v1661
        %v1663 = vpop.xlane.xlu0 %1662
        %v1664 = vsub.f32 %v1648, %v1654
        %v1665 = vsub.f32 %v1649, %v1657
        %v1666 = vsub.f32 %v1650, %v1660
        %v1667 = vsub.f32 %v1651, %v1663
        %v1668 = vmul.f32 %v1664, 1.442695
        %v1669 = vpow.pop %v1668
        %v1670 = vmul.f32 %v1665, 1.442695
        %v1671 = vpow.pop %v1670
        %v1672 = vmul.f32 %v1666, 1.442695
        %v1673 = vpow.pop %v1672
        %v1674 = vmul.f32 %v1667, 1.442695
        %v1675 = vpow.pop %v1674
        %v1676 = vsel %vm1259, %v1669, 0.0
        %1677 = vadd.xlane.f32.xlu0 %v1676
        %v1678 = vpop.xlane.xlu0 %1677
        %v1679 = vsel %vm1259, %v1671, 0.0
        %1680 = vadd.xlane.f32.xlu0 %v1679
        %v1681 = vpop.xlane.xlu0 %1680
        %v1682 = vsel %vm1259, %v1673, 0.0
        %1683 = vadd.xlane.f32.xlu0 %v1682
        %v1684 = vpop.xlane.xlu0 %1683
        %v1685 = vsel %vm1259, %v1675, 0.0
        %1686 = vadd.xlane.f32.xlu0 %v1685
        %v1687 = vpop.xlane.xlu0 %1686
        %v1688 = vrcp.pop %v1678
        %v1689 = vmul.f32 %v1669, %v1688
        %v1690 = vrcp.pop %v1681
        %v1691 = vmul.f32 %v1671, %v1690
        %v1692 = vrcp.pop %v1684
        %v1693 = vmul.f32 %v1673, %v1692
        %v1694 = vrcp.pop %v1687
        %v1695 = vmul.f32 %v1675, %v1694
        %1698 = vrot.lane.b32.xlu0 %v1066, 96
        %v1699 = vpop.permute.xlu0 %1698
        %1700 = vrot.lane.b32.xlu0 %v1069, 96
        %v1701 = vpop.permute.xlu0 %1700
        %v1705 = vsel %vm1259, %v1689, 0
        %v1708 = vsel %vm1259, %v1691, 0
        %1710 = vmatprep.subr.mxu0 0.0
        %1711 = vmatpush1.msra.mxu0 0.0
        %1712 = vmatprep.subr.mxu0 0.0
        %1713 = vmatpush1.msra.mxu0 0.0
        %1714 = vmatprep.subr.mxu0 0.0
        %1715 = vmatpush1.msra.mxu0 0.0
        %1716 = vmatprep.subr.mxu0 0.0
        %1717 = vmatpush1.msra.mxu0 0.0
        %1718 = vmatprep.subr.mxu0 0.0
        %1719 = vmatpush1.msra.mxu0 0.0
        %1720 = vmatprep.subr.mxu0 0.0
        %1721 = vmatpush1.msra.mxu0 0.0
        %1722 = vmatprep.subr.mxu0 0.0
        %1723 = vmatpush1.msra.mxu0 0.0
        %1724 = vmatprep.subr.mxu0 0.0
        %1725 = vmatpush1.msra.mxu0 0.0
        %1726 = vmatprep.subr.mxu0 0.0
        %1727 = vmatpush1.msra.mxu0 0.0
        %1728 = vmatprep.subr.mxu0 0.0
        %1729 = vmatpush1.msra.mxu0 0.0
        %1730 = vmatprep.subr.mxu0 0.0
        %1731 = vmatpush1.msra.mxu0 0.0
        %1732 = vmatprep.subr.mxu0 0.0
        %1733 = vmatpush1.msra.mxu0 0.0
        %1734 = vmatprep.subr.mxu0 0.0
        %1735 = vmatpush1.msra.mxu0 0.0
        %1736 = vmatprep.subr.mxu0 0.0
        %1737 = vmatpush1.msra.mxu0 0.0
        %1738 = vmatprep.subr.mxu0 0.0
        %1739 = vmatpush1.msra.mxu0 %v1701
        %1740 = vmatprep.subr.mxu0 0.0
        %1741 = vmatpush1.msra.mxu0 %v1699
        %1742 = vmatprep.subr.mxu0 0.0
        %1743 = vmatpush2.msra.mxu0 0.0
        %1744 = vmatprep.subr.mxu0 0.0
        %1745 = vmatpush2.msra.mxu0 0.0
        %1746 = vmatprep.subr.mxu0 0.0
        %1747 = vmatpush2.msra.mxu0 0.0
        %1748 = vmatprep.subr.mxu0 0.0
        %1749 = vmatpush2.msra.mxu0 0.0
        %1750 = vmatprep.subr.mxu0 0.0
        %1751 = vmatpush2.msra.mxu0 0.0
        %1752 = vmatprep.subr.mxu0 0.0
        %1753 = vmatpush2.msra.mxu0 0.0
        %1754 = vmatprep.subr.mxu0 0.0
        %1755 = vmatpush2.msra.mxu0 0.0
        %1756 = vmatprep.subr.mxu0 0.0
        %1757 = vmatpush2.msra.mxu0 0.0
        %1758 = vmatprep.subr.mxu0 0.0
        %1759 = vmatpush2.msra.mxu0 0.0
        %1760 = vmatprep.subr.mxu0 0.0
        %1761 = vmatpush2.msra.mxu0 0.0
        %1762 = vmatprep.subr.mxu0 0.0
        %1763 = vmatpush2.msra.mxu0 0.0
        %1764 = vmatprep.subr.mxu0 0.0
        %1765 = vmatpush2.msra.mxu0 0.0
        %1766 = vmatprep.subr.mxu0 0.0
        %1767 = vmatpush2.msra.mxu0 0.0
        %1768 = vmatprep.subr.mxu0 0.0
        %1769 = vmatpush2.msra.mxu0 0.0
        %1770 = vmatprep.subr.mxu0 0.0
        %1771 = vmatpush2.msra.mxu0 0.0
        %1772 = vmatprep.subr.mxu0 0.0
        %1773 = vmatpush2.msra.mxu0 0.0
        %1774 = vmatprep.mubr.f32.mxu0 0.0
        %1775 = vmatmul.mubr.f32.gmra.mxu0 %v1705
        %v1776 = vpop.f32.mrf.mxu0
        %v1777 = vadd.f32 0.0, %v1776
        %v1778 = vpop.f32.mrf.mxu0
        %1779 = vmatprep.mubr.f32.mxu0 0.0
        %1780 = vmatmul.mubr.f32.gmra.mxu0 %v1708
        %v1781 = vpop.f32.mrf.mxu0
        %v1782 = vadd.f32 0.0, %v1781
        %v1783 = vpop.f32.mrf.mxu0
        %1784 = vdwg.mxu0
        %1787 = vrot.lane.b32.xlu0 %v1074, 96
        %v1788 = vpop.permute.xlu0 %1787
        %1789 = vrot.lane.b32.xlu0 %v1077, 96
        %v1790 = vpop.permute.xlu0 %1789
        %v1794 = vsel %vm1259, %v1693, 0
        %v1797 = vsel %vm1259, %v1695, 0
        %1799 = vmatprep.subr.mxu0 0.0
        %1800 = vmatpush1.msra.mxu0 0.0
        %1801 = vmatprep.subr.mxu0 0.0
        %1802 = vmatpush1.msra.mxu0 0.0
        %1803 = vmatprep.subr.mxu0 0.0
        %1804 = vmatpush1.msra.mxu0 0.0
        %1805 = vmatprep.subr.mxu0 0.0
        %1806 = vmatpush1.msra.mxu0 0.0
        %1807 = vmatprep.subr.mxu0 0.0
        %1808 = vmatpush1.msra.mxu0 0.0
        %1809 = vmatprep.subr.mxu0 0.0
        %1810 = vmatpush1.msra.mxu0 0.0
        %1811 = vmatprep.subr.mxu0 0.0
        %1812 = vmatpush1.msra.mxu0 0.0
        %1813 = vmatprep.subr.mxu0 0.0
        %1814 = vmatpush1.msra.mxu0 0.0
        %1815 = vmatprep.subr.mxu0 0.0
        %1816 = vmatpush1.msra.mxu0 0.0
        %1817 = vmatprep.subr.mxu0 0.0
        %1818 = vmatpush1.msra.mxu0 0.0
        %1819 = vmatprep.subr.mxu0 0.0
        %1820 = vmatpush1.msra.mxu0 0.0
        %1821 = vmatprep.subr.mxu0 0.0
        %1822 = vmatpush1.msra.mxu0 0.0
        %1823 = vmatprep.subr.mxu0 0.0
        %1824 = vmatpush1.msra.mxu0 0.0
        %1825 = vmatprep.subr.mxu0 0.0
        %1826 = vmatpush1.msra.mxu0 0.0
        %1827 = vmatprep.subr.mxu0 0.0
        %1828 = vmatpush1.msra.mxu0 %v1790
        %1829 = vmatprep.subr.mxu0 0.0
        %1830 = vmatpush1.msra.mxu0 %v1788
        %1831 = vmatprep.subr.mxu0 0.0
        %1832 = vmatpush2.msra.mxu0 0.0
        %1833 = vmatprep.subr.mxu0 0.0
        %1834 = vmatpush2.msra.mxu0 0.0
        %1835 = vmatprep.subr.mxu0 0.0
        %1836 = vmatpush2.msra.mxu0 0.0
        %1837 = vmatprep.subr.mxu0 0.0
        %1838 = vmatpush2.msra.mxu0 0.0
        %1839 = vmatprep.subr.mxu0 0.0
        %1840 = vmatpush2.msra.mxu0 0.0
        %1841 = vmatprep.subr.mxu0 0.0
        %1842 = vmatpush2.msra.mxu0 0.0
        %1843 = vmatprep.subr.mxu0 0.0
        %1844 = vmatpush2.msra.mxu0 0.0
        %1845 = vmatprep.subr.mxu0 0.0
        %1846 = vmatpush2.msra.mxu0 0.0
        %1847 = vmatprep.subr.mxu0 0.0
        %1848 = vmatpush2.msra.mxu0 0.0
        %1849 = vmatprep.subr.mxu0 0.0
        %1850 = vmatpush2.msra.mxu0 0.0
        %1851 = vmatprep.subr.mxu0 0.0
        %1852 = vmatpush2.msra.mxu0 0.0
        %1853 = vmatprep.subr.mxu0 0.0
        %1854 = vmatpush2.msra.mxu0 0.0
        %1855 = vmatprep.subr.mxu0 0.0
        %1856 = vmatpush2.msra.mxu0 0.0
        %1857 = vmatprep.subr.mxu0 0.0
        %1858 = vmatpush2.msra.mxu0 0.0
        %1859 = vmatprep.subr.mxu0 0.0
        %1860 = vmatpush2.msra.mxu0 0.0
        %1861 = vmatprep.subr.mxu0 0.0
        %1862 = vmatpush2.msra.mxu0 0.0
        %1863 = vmatprep.mubr.f32.mxu0 0.0
        %1864 = vmatmul.mubr.f32.gmra.mxu0 %v1794
        %v1865 = vpop.f32.mrf.mxu0
        %v1866 = vadd.f32 0.0, %v1865
        %v1867 = vpop.f32.mrf.mxu0
        %1868 = vmatprep.mubr.f32.mxu0 0.0
        %1869 = vmatmul.mubr.f32.gmra.mxu0 %v1797
        %v1870 = vpop.f32.mrf.mxu0
        %v1871 = vadd.f32 0.0, %v1870
        %v1872 = vpop.f32.mrf.mxu0
        %1873 = vdwg.mxu0
        %1874 = vrot.lane.b32.xlu0 %v1013, 64
        %v1875 = vpop.permute.xlu0 %1874
        %1876 = vrot.lane.b32.xlu0 %v1017, 64
        %v1877 = vpop.permute.xlu0 %1876
        %1878 = vrot.lane.b32.xlu0 %v1015, 64
        %v1879 = vpop.permute.xlu0 %1878
        %1880 = vrot.lane.b32.xlu0 %v1019, 64
        %v1881 = vpop.permute.xlu0 %1880
        %v1882 = vsel %vm1080, %v1875, 0
        %v1884 = vsel %vm1080, %v1877, 0
        %v1886 = vsel %vm1080, %v1879, 0
        %v1888 = vsel %vm1080, %v1881, 0
        %1890 = vmatprep.subr.mxu0 0.0
        %1891 = vmatpush1.xpose.msra.mxu0 0.0
        %1892 = vmatprep.subr.mxu0 0.0
        %1893 = vmatpush1.xpose.msra.mxu0 0.0
        %1894 = vmatprep.subr.mxu0 0.0
        %1895 = vmatpush1.xpose.msra.mxu0 0.0
        %1896 = vmatprep.subr.mxu0 0.0
        %1897 = vmatpush1.xpose.msra.mxu0 0.0
        %1898 = vmatprep.subr.mxu0 0.0
        %1899 = vmatpush1.xpose.msra.mxu0 0.0
        %1900 = vmatprep.subr.mxu0 0.0
        %1901 = vmatpush1.xpose.msra.mxu0 0.0
        %1902 = vmatprep.subr.mxu0 0.0
        %1903 = vmatpush1.xpose.msra.mxu0 0.0
        %1904 = vmatprep.subr.mxu0 0.0
        %1905 = vmatpush1.xpose.msra.mxu0 0.0
        %1906 = vmatprep.subr.mxu0 0.0
        %1907 = vmatpush1.xpose.msra.mxu0 0.0
        %1908 = vmatprep.subr.mxu0 0.0
        %1909 = vmatpush1.xpose.msra.mxu0 0.0
        %1910 = vmatprep.subr.mxu0 0.0
        %1911 = vmatpush1.xpose.msra.mxu0 0.0
        %1912 = vmatprep.subr.mxu0 0.0
        %1913 = vmatpush1.xpose.msra.mxu0 0.0
        %1914 = vmatprep.subr.mxu0 0.0
        %1915 = vmatpush1.xpose.msra.mxu0 0.0
        %1916 = vmatprep.subr.mxu0 0.0
        %1917 = vmatpush1.xpose.msra.mxu0 0.0
        %1918 = vmatprep.subr.mxu0 0.0
        %1919 = vmatpush1.xpose.msra.mxu0 %v1888
        %1920 = vmatprep.subr.mxu0 0.0
        %1921 = vmatpush1.xpose.msra.mxu0 %v1886
        %1922 = vmatprep.subr.mxu0 0.0
        %1923 = vmatpush2.xpose.msra.mxu0 0.0
        %1924 = vmatprep.subr.mxu0 0.0
        %1925 = vmatpush2.xpose.msra.mxu0 0.0
        %1926 = vmatprep.subr.mxu0 0.0
        %1927 = vmatpush2.xpose.msra.mxu0 0.0
        %1928 = vmatprep.subr.mxu0 0.0
        %1929 = vmatpush2.xpose.msra.mxu0 0.0
        %1930 = vmatprep.subr.mxu0 0.0
        %1931 = vmatpush2.xpose.msra.mxu0 0.0
        %1932 = vmatprep.subr.mxu0 0.0
        %1933 = vmatpush2.xpose.msra.mxu0 0.0
        %1934 = vmatprep.subr.mxu0 0.0
        %1935 = vmatpush2.xpose.msra.mxu0 0.0
        %1936 = vmatprep.subr.mxu0 0.0
        %1937 = vmatpush2.xpose.msra.mxu0 0.0
        %1938 = vmatprep.subr.mxu0 0.0
        %1939 = vmatpush2.xpose.msra.mxu0 0.0
        %1940 = vmatprep.subr.mxu0 0.0
        %1941 = vmatpush2.xpose.msra.mxu0 0.0
        %1942 = vmatprep.subr.mxu0 0.0
        %1943 = vmatpush2.xpose.msra.mxu0 0.0
        %1944 = vmatprep.subr.mxu0 0.0
        %1945 = vmatpush2.xpose.msra.mxu0 0.0
        %1946 = vmatprep.subr.mxu0 0.0
        %1947 = vmatpush2.xpose.msra.mxu0 0.0
        %1948 = vmatprep.subr.mxu0 0.0
        %1949 = vmatpush2.xpose.msra.mxu0 0.0
        %1950 = vmatprep.subr.mxu0 0.0
        %1951 = vmatpush2.xpose.msra.mxu0 0.0
        %1952 = vmatprep.subr.mxu0 0.0
        %1953 = vmatpush2.xpose.msra.mxu0 0.0
        %1954 = vmatprep.mubr.f32.mxu0 0.0
        %1955 = vmatmul.mubr.f32.gmra.mxu0 %v1882
        %v1956 = vpop.f32.mrf.mxu0
        %v1957 = vadd.f32 0.0, %v1956
        %v1958 = vpop.f32.mrf.mxu0
        %1959 = vmatprep.mubr.f32.mxu0 0.0
        %1960 = vmatmul.mubr.f32.gmra.mxu0 %v1884
        %v1961 = vpop.f32.mrf.mxu0
        %v1962 = vadd.f32 0.0, %v1961
        %v1963 = vpop.f32.mrf.mxu0
        %1964 = vdwg.mxu0
        %1965 = vrot.lane.b32.xlu0 %v1023, 64
        %v1966 = vpop.permute.xlu0 %1965
        %1967 = vrot.lane.b32.xlu0 %v1027, 64
        %v1968 = vpop.permute.xlu0 %1967
        %1969 = vrot.lane.b32.xlu0 %v1025, 64
        %v1970 = vpop.permute.xlu0 %1969
        %1971 = vrot.lane.b32.xlu0 %v1029, 64
        %v1972 = vpop.permute.xlu0 %1971
        %v1973 = vsel %vm1080, %v1966, 0
        %v1975 = vsel %vm1080, %v1968, 0
        %v1977 = vsel %vm1080, %v1970, 0
        %v1979 = vsel %vm1080, %v1972, 0
        %1981 = vmatprep.subr.mxu0 0.0
        %1982 = vmatpush1.xpose.msra.mxu0 0.0
        %1983 = vmatprep.subr.mxu0 0.0
        %1984 = vmatpush1.xpose.msra.mxu0 0.0
        %1985 = vmatprep.subr.mxu0 0.0
        %1986 = vmatpush1.xpose.msra.mxu0 0.0
        %1987 = vmatprep.subr.mxu0 0.0
        %1988 = vmatpush1.xpose.msra.mxu0 0.0
        %1989 = vmatprep.subr.mxu0 0.0
        %1990 = vmatpush1.xpose.msra.mxu0 0.0
        %1991 = vmatprep.subr.mxu0 0.0
        %1992 = vmatpush1.xpose.msra.mxu0 0.0
        %1993 = vmatprep.subr.mxu0 0.0
        %1994 = vmatpush1.xpose.msra.mxu0 0.0
        %1995 = vmatprep.subr.mxu0 0.0
        %1996 = vmatpush1.xpose.msra.mxu0 0.0
        %1997 = vmatprep.subr.mxu0 0.0
        %1998 = vmatpush1.xpose.msra.mxu0 0.0
        %1999 = vmatprep.subr.mxu0 0.0
        %2000 = vmatpush1.xpose.msra.mxu0 0.0
        %2001 = vmatprep.subr.mxu0 0.0
        %2002 = vmatpush1.xpose.msra.mxu0 0.0
        %2003 = vmatprep.subr.mxu0 0.0
        %2004 = vmatpush1.xpose.msra.mxu0 0.0
        %2005 = vmatprep.subr.mxu0 0.0
        %2006 = vmatpush1.xpose.msra.mxu0 0.0
        %2007 = vmatprep.subr.mxu0 0.0
        %2008 = vmatpush1.xpose.msra.mxu0 0.0
        %2009 = vmatprep.subr.mxu0 0.0
        %2010 = vmatpush1.xpose.msra.mxu0 %v1979
        %2011 = vmatprep.subr.mxu0 0.0
        %2012 = vmatpush1.xpose.msra.mxu0 %v1977
        %2013 = vmatprep.subr.mxu0 0.0
        %2014 = vmatpush2.xpose.msra.mxu0 0.0
        %2015 = vmatprep.subr.mxu0 0.0
        %2016 = vmatpush2.xpose.msra.mxu0 0.0
        %2017 = vmatprep.subr.mxu0 0.0
        %2018 = vmatpush2.xpose.msra.mxu0 0.0
        %2019 = vmatprep.subr.mxu0 0.0
        %2020 = vmatpush2.xpose.msra.mxu0 0.0
        %2021 = vmatprep.subr.mxu0 0.0
        %2022 = vmatpush2.xpose.msra.mxu0 0.0
        %2023 = vmatprep.subr.mxu0 0.0
        %2024 = vmatpush2.xpose.msra.mxu0 0.0
        %2025 = vmatprep.subr.mxu0 0.0
        %2026 = vmatpush2.xpose.msra.mxu0 0.0
        %2027 = vmatprep.subr.mxu0 0.0
        %2028 = vmatpush2.xpose.msra.mxu0 0.0
        %2029 = vmatprep.subr.mxu0 0.0
        %2030 = vmatpush2.xpose.msra.mxu0 0.0
        %2031 = vmatprep.subr.mxu0 0.0
        %2032 = vmatpush2.xpose.msra.mxu0 0.0
        %2033 = vmatprep.subr.mxu0 0.0
        %2034 = vmatpush2.xpose.msra.mxu0 0.0
        %2035 = vmatprep.subr.mxu0 0.0
        %2036 = vmatpush2.xpose.msra.mxu0 0.0
        %2037 = vmatprep.subr.mxu0 0.0
        %2038 = vmatpush2.xpose.msra.mxu0 0.0
        %2039 = vmatprep.subr.mxu0 0.0
        %2040 = vmatpush2.xpose.msra.mxu0 0.0
        %2041 = vmatprep.subr.mxu0 0.0
        %2042 = vmatpush2.xpose.msra.mxu0 0.0
        %2043 = vmatprep.subr.mxu0 0.0
        %2044 = vmatpush2.xpose.msra.mxu0 0.0
        %2045 = vmatprep.mubr.f32.mxu0 0.0
        %2046 = vmatmul.mubr.f32.gmra.mxu0 %v1973
        %v2047 = vpop.f32.mrf.mxu0
        %v2048 = vadd.f32 0.0, %v2047
        %v2049 = vpop.f32.mrf.mxu0
        %2050 = vmatprep.mubr.f32.mxu0 0.0
        %2051 = vmatmul.mubr.f32.gmra.mxu0 %v1975
        %v2052 = vpop.f32.mrf.mxu0
        %v2053 = vadd.f32 0.0, %v2052
        %v2054 = vpop.f32.mrf.mxu0
        %2055 = vdwg.mxu0
        %v2056 = vmul.f32 %v1957, 0.17677669
        %v2057 = vmul.f32 %v1962, 0.17677669
        %v2058 = vmul.f32 %v2048, 0.17677669
        %v2059 = vmul.f32 %v2053, 0.17677669
        %v2060 = vsel %vm1259, %v2056, -inf
        %2061 = vmax.xlane.f32.xlu0 %v2060
        %v2062 = vpop.xlane.xlu0 %2061
        %v2063 = vsel %vm1259, %v2057, -inf
        %2064 = vmax.xlane.f32.xlu0 %v2063
        %v2065 = vpop.xlane.xlu0 %2064
        %v2066 = vsel %vm1259, %v2058, -inf
        %2067 = vmax.xlane.f32.xlu0 %v2066
        %v2068 = vpop.xlane.xlu0 %2067
        %v2069 = vsel %vm1259, %v2059, -inf
        %2070 = vmax.xlane.f32.xlu0 %v2069
        %v2071 = vpop.xlane.xlu0 %2070
        %v2072 = vsub.f32 %v2056, %v2062
        %v2073 = vsub.f32 %v2057, %v2065
        %v2074 = vsub.f32 %v2058, %v2068
        %v2075 = vsub.f32 %v2059, %v2071
        %v2076 = vmul.f32 %v2072, 1.442695
        %v2077 = vpow.pop %v2076
        %v2078 = vmul.f32 %v2073, 1.442695
        %v2079 = vpow.pop %v2078
        %v2080 = vmul.f32 %v2074, 1.442695
        %v2081 = vpow.pop %v2080
        %v2082 = vmul.f32 %v2075, 1.442695
        %v2083 = vpow.pop %v2082
        %v2084 = vsel %vm1259, %v2077, 0.0
        %2085 = vadd.xlane.f32.xlu0 %v2084
        %v2086 = vpop.xlane.xlu0 %2085
        %v2087 = vsel %vm1259, %v2079, 0.0
        %2088 = vadd.xlane.f32.xlu0 %v2087
        %v2089 = vpop.xlane.xlu0 %2088
        %v2090 = vsel %vm1259, %v2081, 0.0
        %2091 = vadd.xlane.f32.xlu0 %v2090
        %v2092 = vpop.xlane.xlu0 %2091
        %v2093 = vsel %vm1259, %v2083, 0.0
        %2094 = vadd.xlane.f32.xlu0 %v2093
        %v2095 = vpop.xlane.xlu0 %2094
        %v2096 = vrcp.pop %v2086
        %v2097 = vmul.f32 %v2077, %v2096
        %v2098 = vrcp.pop %v2089
        %v2099 = vmul.f32 %v2079, %v2098
        %v2100 = vrcp.pop %v2092
        %v2101 = vmul.f32 %v2081, %v2100
        %v2102 = vrcp.pop %v2095
        %v2103 = vmul.f32 %v2083, %v2102
        %2104 = vrot.lane.b32.xlu0 %v1066, 64
        %v2105 = vpop.permute.xlu0 %2104
        %2106 = vrot.lane.b32.xlu0 %v1069, 64
        %v2107 = vpop.permute.xlu0 %2106
        %v2111 = vsel %vm1259, %v2097, 0
        %v2114 = vsel %vm1259, %v2099, 0
        %2116 = vmatprep.subr.mxu0 0.0
        %2117 = vmatpush1.msra.mxu0 0.0
        %2118 = vmatprep.subr.mxu0 0.0
        %2119 = vmatpush1.msra.mxu0 0.0
        %2120 = vmatprep.subr.mxu0 0.0
        %2121 = vmatpush1.msra.mxu0 0.0
        %2122 = vmatprep.subr.mxu0 0.0
        %2123 = vmatpush1.msra.mxu0 0.0
        %2124 = vmatprep.subr.mxu0 0.0
        %2125 = vmatpush1.msra.mxu0 0.0
        %2126 = vmatprep.subr.mxu0 0.0
        %2127 = vmatpush1.msra.mxu0 0.0
        %2128 = vmatprep.subr.mxu0 0.0
        %2129 = vmatpush1.msra.mxu0 0.0
        %2130 = vmatprep.subr.mxu0 0.0
        %2131 = vmatpush1.msra.mxu0 0.0
        %2132 = vmatprep.subr.mxu0 0.0
        %2133 = vmatpush1.msra.mxu0 0.0
        %2134 = vmatprep.subr.mxu0 0.0
        %2135 = vmatpush1.msra.mxu0 0.0
        %2136 = vmatprep.subr.mxu0 0.0
        %2137 = vmatpush1.msra.mxu0 0.0
        %2138 = vmatprep.subr.mxu0 0.0
        %2139 = vmatpush1.msra.mxu0 0.0
        %2140 = vmatprep.subr.mxu0 0.0
        %2141 = vmatpush1.msra.mxu0 0.0
        %2142 = vmatprep.subr.mxu0 0.0
        %2143 = vmatpush1.msra.mxu0 0.0
        %2144 = vmatprep.subr.mxu0 0.0
        %2145 = vmatpush1.msra.mxu0 %v2107
        %2146 = vmatprep.subr.mxu0 0.0
        %2147 = vmatpush1.msra.mxu0 %v2105
        %2148 = vmatprep.subr.mxu0 0.0
        %2149 = vmatpush2.msra.mxu0 0.0
        %2150 = vmatprep.subr.mxu0 0.0
        %2151 = vmatpush2.msra.mxu0 0.0
        %2152 = vmatprep.subr.mxu0 0.0
        %2153 = vmatpush2.msra.mxu0 0.0
        %2154 = vmatprep.subr.mxu0 0.0
        %2155 = vmatpush2.msra.mxu0 0.0
        %2156 = vmatprep.subr.mxu0 0.0
        %2157 = vmatpush2.msra.mxu0 0.0
        %2158 = vmatprep.subr.mxu0 0.0
        %2159 = vmatpush2.msra.mxu0 0.0
        %2160 = vmatprep.subr.mxu0 0.0
        %2161 = vmatpush2.msra.mxu0 0.0
        %2162 = vmatprep.subr.mxu0 0.0
        %2163 = vmatpush2.msra.mxu0 0.0
        %2164 = vmatprep.subr.mxu0 0.0
        %2165 = vmatpush2.msra.mxu0 0.0
        %2166 = vmatprep.subr.mxu0 0.0
        %2167 = vmatpush2.msra.mxu0 0.0
        %2168 = vmatprep.subr.mxu0 0.0
        %2169 = vmatpush2.msra.mxu0 0.0
        %2170 = vmatprep.subr.mxu0 0.0
        %2171 = vmatpush2.msra.mxu0 0.0
        %2172 = vmatprep.subr.mxu0 0.0
        %2173 = vmatpush2.msra.mxu0 0.0
        %2174 = vmatprep.subr.mxu0 0.0
        %2175 = vmatpush2.msra.mxu0 0.0
        %2176 = vmatprep.subr.mxu0 0.0
        %2177 = vmatpush2.msra.mxu0 0.0
        %2178 = vmatprep.subr.mxu0 0.0
        %2179 = vmatpush2.msra.mxu0 0.0
        %2180 = vmatprep.mubr.f32.mxu0 0.0
        %2181 = vmatmul.mubr.f32.gmra.mxu0 %v2111
        %v2182 = vpop.f32.mrf.mxu0
        %v2183 = vadd.f32 0.0, %v2182
        %v2184 = vpop.f32.mrf.mxu0
        %2185 = vmatprep.mubr.f32.mxu0 0.0
        %2186 = vmatmul.mubr.f32.gmra.mxu0 %v2114
        %v2187 = vpop.f32.mrf.mxu0
        %v2188 = vadd.f32 0.0, %v2187
        %v2189 = vpop.f32.mrf.mxu0
        %2190 = vdwg.mxu0
        %2191 = vrot.lane.b32.xlu0 %v1074, 64
        %v2192 = vpop.permute.xlu0 %2191
        %2193 = vrot.lane.b32.xlu0 %v1077, 64
        %v2194 = vpop.permute.xlu0 %2193
        %v2198 = vsel %vm1259, %v2101, 0
        %v2201 = vsel %vm1259, %v2103, 0
        %2203 = vmatprep.subr.mxu0 0.0
        %2204 = vmatpush1.msra.mxu0 0.0
        %2205 = vmatprep.subr.mxu0 0.0
        %2206 = vmatpush1.msra.mxu0 0.0
        %2207 = vmatprep.subr.mxu0 0.0
        %2208 = vmatpush1.msra.mxu0 0.0
        %2209 = vmatprep.subr.mxu0 0.0
        %2210 = vmatpush1.msra.mxu0 0.0
        %2211 = vmatprep.subr.mxu0 0.0
        %2212 = vmatpush1.msra.mxu0 0.0
        %2213 = vmatprep.subr.mxu0 0.0
        %2214 = vmatpush1.msra.mxu0 0.0
        %2215 = vmatprep.subr.mxu0 0.0
        %2216 = vmatpush1.msra.mxu0 0.0
        %2217 = vmatprep.subr.mxu0 0.0
        %2218 = vmatpush1.msra.mxu0 0.0
        %2219 = vmatprep.subr.mxu0 0.0
        %2220 = vmatpush1.msra.mxu0 0.0
        %2221 = vmatprep.subr.mxu0 0.0
        %2222 = vmatpush1.msra.mxu0 0.0
        %2223 = vmatprep.subr.mxu0 0.0
        %2224 = vmatpush1.msra.mxu0 0.0
        %2225 = vmatprep.subr.mxu0 0.0
        %2226 = vmatpush1.msra.mxu0 0.0
        %2227 = vmatprep.subr.mxu0 0.0
        %2228 = vmatpush1.msra.mxu0 0.0
        %2229 = vmatprep.subr.mxu0 0.0
        %2230 = vmatpush1.msra.mxu0 0.0
        %2231 = vmatprep.subr.mxu0 0.0
        %2232 = vmatpush1.msra.mxu0 %v2194
        %2233 = vmatprep.subr.mxu0 0.0
        %2234 = vmatpush1.msra.mxu0 %v2192
        %2235 = vmatprep.subr.mxu0 0.0
        %2236 = vmatpush2.msra.mxu0 0.0
        %2237 = vmatprep.subr.mxu0 0.0
        %2238 = vmatpush2.msra.mxu0 0.0
        %2239 = vmatprep.subr.mxu0 0.0
        %2240 = vmatpush2.msra.mxu0 0.0
        %2241 = vmatprep.subr.mxu0 0.0
        %2242 = vmatpush2.msra.mxu0 0.0
        %2243 = vmatprep.subr.mxu0 0.0
        %2244 = vmatpush2.msra.mxu0 0.0
        %2245 = vmatprep.subr.mxu0 0.0
        %2246 = vmatpush2.msra.mxu0 0.0
        %2247 = vmatprep.subr.mxu0 0.0
        %2248 = vmatpush2.msra.mxu0 0.0
        %2249 = vmatprep.subr.mxu0 0.0
        %2250 = vmatpush2.msra.mxu0 0.0
        %2251 = vmatprep.subr.mxu0 0.0
        %2252 = vmatpush2.msra.mxu0 0.0
        %2253 = vmatprep.subr.mxu0 0.0
        %2254 = vmatpush2.msra.mxu0 0.0
        %2255 = vmatprep.subr.mxu0 0.0
        %2256 = vmatpush2.msra.mxu0 0.0
        %2257 = vmatprep.subr.mxu0 0.0
        %2258 = vmatpush2.msra.mxu0 0.0
        %2259 = vmatprep.subr.mxu0 0.0
        %2260 = vmatpush2.msra.mxu0 0.0
        %2261 = vmatprep.subr.mxu0 0.0
        %2262 = vmatpush2.msra.mxu0 0.0
        %2263 = vmatprep.subr.mxu0 0.0
        %2264 = vmatpush2.msra.mxu0 0.0
        %2265 = vmatprep.subr.mxu0 0.0
        %2266 = vmatpush2.msra.mxu0 0.0
        %2267 = vmatprep.mubr.f32.mxu0 0.0
        %2268 = vmatmul.mubr.f32.gmra.mxu0 %v2198
        %v2269 = vpop.f32.mrf.mxu0
        %v2270 = vadd.f32 0.0, %v2269
        %v2271 = vpop.f32.mrf.mxu0
        %2272 = vmatprep.mubr.f32.mxu0 0.0
        %2273 = vmatmul.mubr.f32.gmra.mxu0 %v2201
        %v2274 = vpop.f32.mrf.mxu0
        %v2275 = vadd.f32 0.0, %v2274
        %v2276 = vpop.f32.mrf.mxu0
        %2277 = vdwg.mxu0
        %2278 = vrot.lane.b32.xlu0 %v1013, 32
        %v2279 = vpop.permute.xlu0 %2278
        %2280 = vrot.lane.b32.xlu0 %v1017, 32
        %v2281 = vpop.permute.xlu0 %2280
        %2282 = vrot.lane.b32.xlu0 %v1015, 32
        %v2283 = vpop.permute.xlu0 %2282
        %2284 = vrot.lane.b32.xlu0 %v1019, 32
        %v2285 = vpop.permute.xlu0 %2284
        %v2286 = vsel %vm1080, %v2279, 0
        %v2288 = vsel %vm1080, %v2281, 0
        %v2290 = vsel %vm1080, %v2283, 0
        %v2292 = vsel %vm1080, %v2285, 0
        %2294 = vmatprep.subr.mxu0 0.0
        %2295 = vmatpush1.xpose.msra.mxu0 0.0
        %2296 = vmatprep.subr.mxu0 0.0
        %2297 = vmatpush1.xpose.msra.mxu0 0.0
        %2298 = vmatprep.subr.mxu0 0.0
        %2299 = vmatpush1.xpose.msra.mxu0 0.0
        %2300 = vmatprep.subr.mxu0 0.0
        %2301 = vmatpush1.xpose.msra.mxu0 0.0
        %2302 = vmatprep.subr.mxu0 0.0
        %2303 = vmatpush1.xpose.msra.mxu0 0.0
        %2304 = vmatprep.subr.mxu0 0.0
        %2305 = vmatpush1.xpose.msra.mxu0 0.0
        %2306 = vmatprep.subr.mxu0 0.0
        %2307 = vmatpush1.xpose.msra.mxu0 0.0
        %2308 = vmatprep.subr.mxu0 0.0
        %2309 = vmatpush1.xpose.msra.mxu0 0.0
        %2310 = vmatprep.subr.mxu0 0.0
        %2311 = vmatpush1.xpose.msra.mxu0 0.0
        %2312 = vmatprep.subr.mxu0 0.0
        %2313 = vmatpush1.xpose.msra.mxu0 0.0
        %2314 = vmatprep.subr.mxu0 0.0
        %2315 = vmatpush1.xpose.msra.mxu0 0.0
        %2316 = vmatprep.subr.mxu0 0.0
        %2317 = vmatpush1.xpose.msra.mxu0 0.0
        %2318 = vmatprep.subr.mxu0 0.0
        %2319 = vmatpush1.xpose.msra.mxu0 0.0
        %2320 = vmatprep.subr.mxu0 0.0
        %2321 = vmatpush1.xpose.msra.mxu0 0.0
        %2322 = vmatprep.subr.mxu0 0.0
        %2323 = vmatpush1.xpose.msra.mxu0 %v2292
        %2324 = vmatprep.subr.mxu0 0.0
        %2325 = vmatpush1.xpose.msra.mxu0 %v2290
        %2326 = vmatprep.subr.mxu0 0.0
        %2327 = vmatpush2.xpose.msra.mxu0 0.0
        %2328 = vmatprep.subr.mxu0 0.0
        %2329 = vmatpush2.xpose.msra.mxu0 0.0
        %2330 = vmatprep.subr.mxu0 0.0
        %2331 = vmatpush2.xpose.msra.mxu0 0.0
        %2332 = vmatprep.subr.mxu0 0.0
        %2333 = vmatpush2.xpose.msra.mxu0 0.0
        %2334 = vmatprep.subr.mxu0 0.0
        %2335 = vmatpush2.xpose.msra.mxu0 0.0
        %2336 = vmatprep.subr.mxu0 0.0
        %2337 = vmatpush2.xpose.msra.mxu0 0.0
        %2338 = vmatprep.subr.mxu0 0.0
        %2339 = vmatpush2.xpose.msra.mxu0 0.0
        %2340 = vmatprep.subr.mxu0 0.0
        %2341 = vmatpush2.xpose.msra.mxu0 0.0
        %2342 = vmatprep.subr.mxu0 0.0
        %2343 = vmatpush2.xpose.msra.mxu0 0.0
        %2344 = vmatprep.subr.mxu0 0.0
        %2345 = vmatpush2.xpose.msra.mxu0 0.0
        %2346 = vmatprep.subr.mxu0 0.0
        %2347 = vmatpush2.xpose.msra.mxu0 0.0
        %2348 = vmatprep.subr.mxu0 0.0
        %2349 = vmatpush2.xpose.msra.mxu0 0.0
        %2350 = vmatprep.subr.mxu0 0.0
        %2351 = vmatpush2.xpose.msra.mxu0 0.0
        %2352 = vmatprep.subr.mxu0 0.0
        %2353 = vmatpush2.xpose.msra.mxu0 0.0
        %2354 = vmatprep.subr.mxu0 0.0
        %2355 = vmatpush2.xpose.msra.mxu0 0.0
        %2356 = vmatprep.subr.mxu0 0.0
        %2357 = vmatpush2.xpose.msra.mxu0 0.0
        %2358 = vmatprep.mubr.f32.mxu0 0.0
        %2359 = vmatmul.mubr.f32.gmra.mxu0 %v2286
        %v2360 = vpop.f32.mrf.mxu0
        %v2361 = vadd.f32 0.0, %v2360
        %v2362 = vpop.f32.mrf.mxu0
        %2363 = vmatprep.mubr.f32.mxu0 0.0
        %2364 = vmatmul.mubr.f32.gmra.mxu0 %v2288
        %v2365 = vpop.f32.mrf.mxu0
        %v2366 = vadd.f32 0.0, %v2365
        %v2367 = vpop.f32.mrf.mxu0
        %2368 = vdwg.mxu0
        %2369 = vrot.lane.b32.xlu0 %v1023, 32
        %v2370 = vpop.permute.xlu0 %2369
        %2371 = vrot.lane.b32.xlu0 %v1027, 32
        %v2372 = vpop.permute.xlu0 %2371
        %2373 = vrot.lane.b32.xlu0 %v1025, 32
        %v2374 = vpop.permute.xlu0 %2373
        %2375 = vrot.lane.b32.xlu0 %v1029, 32
        %v2376 = vpop.permute.xlu0 %2375
        %v2377 = vsel %vm1080, %v2370, 0
        %v2379 = vsel %vm1080, %v2372, 0
        %v2381 = vsel %vm1080, %v2374, 0
        %v2383 = vsel %vm1080, %v2376, 0
        %2385 = vmatprep.subr.mxu0 0.0
        %2386 = vmatpush1.xpose.msra.mxu0 0.0
        %2387 = vmatprep.subr.mxu0 0.0
        %2388 = vmatpush1.xpose.msra.mxu0 0.0
        %2389 = vmatprep.subr.mxu0 0.0
        %2390 = vmatpush1.xpose.msra.mxu0 0.0
        %2391 = vmatprep.subr.mxu0 0.0
        %2392 = vmatpush1.xpose.msra.mxu0 0.0
        %2393 = vmatprep.subr.mxu0 0.0
        %2394 = vmatpush1.xpose.msra.mxu0 0.0
        %2395 = vmatprep.subr.mxu0 0.0
        %2396 = vmatpush1.xpose.msra.mxu0 0.0
        %2397 = vmatprep.subr.mxu0 0.0
        %2398 = vmatpush1.xpose.msra.mxu0 0.0
        %2399 = vmatprep.subr.mxu0 0.0
        %2400 = vmatpush1.xpose.msra.mxu0 0.0
        %2401 = vmatprep.subr.mxu0 0.0
        %2402 = vmatpush1.xpose.msra.mxu0 0.0
        %2403 = vmatprep.subr.mxu0 0.0
        %2404 = vmatpush1.xpose.msra.mxu0 0.0
        %2405 = vmatprep.subr.mxu0 0.0
        %2406 = vmatpush1.xpose.msra.mxu0 0.0
        %2407 = vmatprep.subr.mxu0 0.0
        %2408 = vmatpush1.xpose.msra.mxu0 0.0
        %2409 = vmatprep.subr.mxu0 0.0
        %2410 = vmatpush1.xpose.msra.mxu0 0.0
        %2411 = vmatprep.subr.mxu0 0.0
        %2412 = vmatpush1.xpose.msra.mxu0 0.0
        %2413 = vmatprep.subr.mxu0 0.0
        %2414 = vmatpush1.xpose.msra.mxu0 %v2383
        %2415 = vmatprep.subr.mxu0 0.0
        %2416 = vmatpush1.xpose.msra.mxu0 %v2381
        %2417 = vmatprep.subr.mxu0 0.0
        %2418 = vmatpush2.xpose.msra.mxu0 0.0
        %2419 = vmatprep.subr.mxu0 0.0
        %2420 = vmatpush2.xpose.msra.mxu0 0.0
        %2421 = vmatprep.subr.mxu0 0.0
        %2422 = vmatpush2.xpose.msra.mxu0 0.0
        %2423 = vmatprep.subr.mxu0 0.0
        %2424 = vmatpush2.xpose.msra.mxu0 0.0
        %2425 = vmatprep.subr.mxu0 0.0
        %2426 = vmatpush2.xpose.msra.mxu0 0.0
        %2427 = vmatprep.subr.mxu0 0.0
        %2428 = vmatpush2.xpose.msra.mxu0 0.0
        %2429 = vmatprep.subr.mxu0 0.0
        %2430 = vmatpush2.xpose.msra.mxu0 0.0
        %2431 = vmatprep.subr.mxu0 0.0
        %2432 = vmatpush2.xpose.msra.mxu0 0.0
        %2433 = vmatprep.subr.mxu0 0.0
        %2434 = vmatpush2.xpose.msra.mxu0 0.0
        %2435 = vmatprep.subr.mxu0 0.0
        %2436 = vmatpush2.xpose.msra.mxu0 0.0
        %2437 = vmatprep.subr.mxu0 0.0
        %2438 = vmatpush2.xpose.msra.mxu0 0.0
        %2439 = vmatprep.subr.mxu0 0.0
        %2440 = vmatpush2.xpose.msra.mxu0 0.0
        %2441 = vmatprep.subr.mxu0 0.0
        %2442 = vmatpush2.xpose.msra.mxu0 0.0
        %2443 = vmatprep.subr.mxu0 0.0
        %2444 = vmatpush2.xpose.msra.mxu0 0.0
        %2445 = vmatprep.subr.mxu0 0.0
        %2446 = vmatpush2.xpose.msra.mxu0 0.0
        %2447 = vmatprep.subr.mxu0 0.0
        %2448 = vmatpush2.xpose.msra.mxu0 0.0
        %2449 = vmatprep.mubr.f32.mxu0 0.0
        %2450 = vmatmul.mubr.f32.gmra.mxu0 %v2377
        %v2451 = vpop.f32.mrf.mxu0
        %v2452 = vadd.f32 0.0, %v2451
        %v2453 = vpop.f32.mrf.mxu0
        %2454 = vmatprep.mubr.f32.mxu0 0.0
        %2455 = vmatmul.mubr.f32.gmra.mxu0 %v2379
        %v2456 = vpop.f32.mrf.mxu0
        %v2457 = vadd.f32 0.0, %v2456
        %v2458 = vpop.f32.mrf.mxu0
        %2459 = vdwg.mxu0
        %v2460 = vmul.f32 %v2361, 0.17677669
        %v2461 = vmul.f32 %v2366, 0.17677669
        %v2462 = vmul.f32 %v2452, 0.17677669
        %v2463 = vmul.f32 %v2457, 0.17677669
        %v2464 = vsel %vm1259, %v2460, -inf
        %2465 = vmax.xlane.f32.xlu0 %v2464
        %v2466 = vpop.xlane.xlu0 %2465
        %v2467 = vsel %vm1259, %v2461, -inf
        %2468 = vmax.xlane.f32.xlu0 %v2467
        %v2469 = vpop.xlane.xlu0 %2468
        %v2470 = vsel %vm1259, %v2462, -inf
        %2471 = vmax.xlane.f32.xlu0 %v2470
        %v2472 = vpop.xlane.xlu0 %2471
        %v2473 = vsel %vm1259, %v2463, -inf
        %2474 = vmax.xlane.f32.xlu0 %v2473
        %v2475 = vpop.xlane.xlu0 %2474
        %v2476 = vsub.f32 %v2460, %v2466
        %v2477 = vsub.f32 %v2461, %v2469
        %v2478 = vsub.f32 %v2462, %v2472
        %v2479 = vsub.f32 %v2463, %v2475
        %v2480 = vmul.f32 %v2476, 1.442695
        %v2481 = vpow.pop %v2480
        %v2482 = vmul.f32 %v2477, 1.442695
        %v2483 = vpow.pop %v2482
        %v2484 = vmul.f32 %v2478, 1.442695
        %v2485 = vpow.pop %v2484
        %v2486 = vmul.f32 %v2479, 1.442695
        %v2487 = vpow.pop %v2486
        %v2488 = vsel %vm1259, %v2481, 0.0
        %2489 = vadd.xlane.f32.xlu0 %v2488
        %v2490 = vpop.xlane.xlu0 %2489
        %v2491 = vsel %vm1259, %v2483, 0.0
        %2492 = vadd.xlane.f32.xlu0 %v2491
        %v2493 = vpop.xlane.xlu0 %2492
        %v2494 = vsel %vm1259, %v2485, 0.0
        %2495 = vadd.xlane.f32.xlu0 %v2494
        %v2496 = vpop.xlane.xlu0 %2495
        %v2497 = vsel %vm1259, %v2487, 0.0
        %2498 = vadd.xlane.f32.xlu0 %v2497
        %v2499 = vpop.xlane.xlu0 %2498
        %v2500 = vrcp.pop %v2490
        %v2501 = vmul.f32 %v2481, %v2500
        %v2502 = vrcp.pop %v2493
        %v2503 = vmul.f32 %v2483, %v2502
        %v2504 = vrcp.pop %v2496
        %v2505 = vmul.f32 %v2485, %v2504
        %v2506 = vrcp.pop %v2499
        %v2507 = vmul.f32 %v2487, %v2506
        %2508 = vrot.lane.b32.xlu0 %v1066, 32
        %v2509 = vpop.permute.xlu0 %2508
        %2510 = vrot.lane.b32.xlu0 %v1069, 32
        %v2511 = vpop.permute.xlu0 %2510
        %v2515 = vsel %vm1259, %v2501, 0
        %v2518 = vsel %vm1259, %v2503, 0
        %2520 = vmatprep.subr.mxu0 0.0
        %2521 = vmatpush1.msra.mxu0 0.0
        %2522 = vmatprep.subr.mxu0 0.0
        %2523 = vmatpush1.msra.mxu0 0.0
        %2524 = vmatprep.subr.mxu0 0.0
        %2525 = vmatpush1.msra.mxu0 0.0
        %2526 = vmatprep.subr.mxu0 0.0
        %2527 = vmatpush1.msra.mxu0 0.0
        %2528 = vmatprep.subr.mxu0 0.0
        %2529 = vmatpush1.msra.mxu0 0.0
        %2530 = vmatprep.subr.mxu0 0.0
        %2531 = vmatpush1.msra.mxu0 0.0
        %2532 = vmatprep.subr.mxu0 0.0
        %2533 = vmatpush1.msra.mxu0 0.0
        %2534 = vmatprep.subr.mxu0 0.0
        %2535 = vmatpush1.msra.mxu0 0.0
        %2536 = vmatprep.subr.mxu0 0.0
        %2537 = vmatpush1.msra.mxu0 0.0
        %2538 = vmatprep.subr.mxu0 0.0
        %2539 = vmatpush1.msra.mxu0 0.0
        %2540 = vmatprep.subr.mxu0 0.0
        %2541 = vmatpush1.msra.mxu0 0.0
        %2542 = vmatprep.subr.mxu0 0.0
        %2543 = vmatpush1.msra.mxu0 0.0
        %2544 = vmatprep.subr.mxu0 0.0
        %2545 = vmatpush1.msra.mxu0 0.0
        %2546 = vmatprep.subr.mxu0 0.0
        %2547 = vmatpush1.msra.mxu0 0.0
        %2548 = vmatprep.subr.mxu0 0.0
        %2549 = vmatpush1.msra.mxu0 %v2511
        %2550 = vmatprep.subr.mxu0 0.0
        %2551 = vmatpush1.msra.mxu0 %v2509
        %2552 = vmatprep.subr.mxu0 0.0
        %2553 = vmatpush2.msra.mxu0 0.0
        %2554 = vmatprep.subr.mxu0 0.0
        %2555 = vmatpush2.msra.mxu0 0.0
        %2556 = vmatprep.subr.mxu0 0.0
        %2557 = vmatpush2.msra.mxu0 0.0
        %2558 = vmatprep.subr.mxu0 0.0
        %2559 = vmatpush2.msra.mxu0 0.0
        %2560 = vmatprep.subr.mxu0 0.0
        %2561 = vmatpush2.msra.mxu0 0.0
        %2562 = vmatprep.subr.mxu0 0.0
        %2563 = vmatpush2.msra.mxu0 0.0
        %2564 = vmatprep.subr.mxu0 0.0
        %2565 = vmatpush2.msra.mxu0 0.0
        %2566 = vmatprep.subr.mxu0 0.0
        %2567 = vmatpush2.msra.mxu0 0.0
        %2568 = vmatprep.subr.mxu0 0.0
        %2569 = vmatpush2.msra.mxu0 0.0
        %2570 = vmatprep.subr.mxu0 0.0
        %2571 = vmatpush2.msra.mxu0 0.0
        %2572 = vmatprep.subr.mxu0 0.0
        %2573 = vmatpush2.msra.mxu0 0.0
        %2574 = vmatprep.subr.mxu0 0.0
        %2575 = vmatpush2.msra.mxu0 0.0
        %2576 = vmatprep.subr.mxu0 0.0
        %2577 = vmatpush2.msra.mxu0 0.0
        %2578 = vmatprep.subr.mxu0 0.0
        %2579 = vmatpush2.msra.mxu0 0.0
        %2580 = vmatprep.subr.mxu0 0.0
        %2581 = vmatpush2.msra.mxu0 0.0
        %2582 = vmatprep.subr.mxu0 0.0
        %2583 = vmatpush2.msra.mxu0 0.0
        %2584 = vmatprep.mubr.f32.mxu0 0.0
        %2585 = vmatmul.mubr.f32.gmra.mxu0 %v2515
        %v2586 = vpop.f32.mrf.mxu0
        %v2587 = vadd.f32 0.0, %v2586
        %v2588 = vpop.f32.mrf.mxu0
        %2589 = vmatprep.mubr.f32.mxu0 0.0
        %2590 = vmatmul.mubr.f32.gmra.mxu0 %v2518
        %v2591 = vpop.f32.mrf.mxu0
        %v2592 = vadd.f32 0.0, %v2591
        %v2593 = vpop.f32.mrf.mxu0
        %2594 = vdwg.mxu0
        %2595 = vrot.lane.b32.xlu0 %v1074, 32
        %v2596 = vpop.permute.xlu0 %2595
        %2597 = vrot.lane.b32.xlu0 %v1077, 32
        %v2598 = vpop.permute.xlu0 %2597
        %v2602 = vsel %vm1259, %v2505, 0
        %v2605 = vsel %vm1259, %v2507, 0
        %2607 = vmatprep.subr.mxu0 0.0
        %2608 = vmatpush1.msra.mxu0 0.0
        %2609 = vmatprep.subr.mxu0 0.0
        %2610 = vmatpush1.msra.mxu0 0.0
        %2611 = vmatprep.subr.mxu0 0.0
        %2612 = vmatpush1.msra.mxu0 0.0
        %2613 = vmatprep.subr.mxu0 0.0
        %2614 = vmatpush1.msra.mxu0 0.0
        %2615 = vmatprep.subr.mxu0 0.0
        %2616 = vmatpush1.msra.mxu0 0.0
        %2617 = vmatprep.subr.mxu0 0.0
        %2618 = vmatpush1.msra.mxu0 0.0
        %2619 = vmatprep.subr.mxu0 0.0
        %2620 = vmatpush1.msra.mxu0 0.0
        %2621 = vmatprep.subr.mxu0 0.0
        %2622 = vmatpush1.msra.mxu0 0.0
        %2623 = vmatprep.subr.mxu0 0.0
        %2624 = vmatpush1.msra.mxu0 0.0
        %2625 = vmatprep.subr.mxu0 0.0
        %2626 = vmatpush1.msra.mxu0 0.0
        %2627 = vmatprep.subr.mxu0 0.0
        %2628 = vmatpush1.msra.mxu0 0.0
        %2629 = vmatprep.subr.mxu0 0.0
        %2630 = vmatpush1.msra.mxu0 0.0
        %2631 = vmatprep.subr.mxu0 0.0
        %2632 = vmatpush1.msra.mxu0 0.0
        %2633 = vmatprep.subr.mxu0 0.0
        %2634 = vmatpush1.msra.mxu0 0.0
        %2635 = vmatprep.subr.mxu0 0.0
        %2636 = vmatpush1.msra.mxu0 %v2598
        %2637 = vmatprep.subr.mxu0 0.0
        %2638 = vmatpush1.msra.mxu0 %v2596
        %2639 = vmatprep.subr.mxu0 0.0
        %2640 = vmatpush2.msra.mxu0 0.0
        %2641 = vmatprep.subr.mxu0 0.0
        %2642 = vmatpush2.msra.mxu0 0.0
        %2643 = vmatprep.subr.mxu0 0.0
        %2644 = vmatpush2.msra.mxu0 0.0
        %2645 = vmatprep.subr.mxu0 0.0
        %2646 = vmatpush2.msra.mxu0 0.0
        %2647 = vmatprep.subr.mxu0 0.0
        %2648 = vmatpush2.msra.mxu0 0.0
        %2649 = vmatprep.subr.mxu0 0.0
        %2650 = vmatpush2.msra.mxu0 0.0
        %2651 = vmatprep.subr.mxu0 0.0
        %2652 = vmatpush2.msra.mxu0 0.0
        %2653 = vmatprep.subr.mxu0 0.0
        %2654 = vmatpush2.msra.mxu0 0.0
        %2655 = vmatprep.subr.mxu0 0.0
        %2656 = vmatpush2.msra.mxu0 0.0
        %2657 = vmatprep.subr.mxu0 0.0
        %2658 = vmatpush2.msra.mxu0 0.0
        %2659 = vmatprep.subr.mxu0 0.0
        %2660 = vmatpush2.msra.mxu0 0.0
        %2661 = vmatprep.subr.mxu0 0.0
        %2662 = vmatpush2.msra.mxu0 0.0
        %2663 = vmatprep.subr.mxu0 0.0
        %2664 = vmatpush2.msra.mxu0 0.0
        %2665 = vmatprep.subr.mxu0 0.0
        %2666 = vmatpush2.msra.mxu0 0.0
        %2667 = vmatprep.subr.mxu0 0.0
        %2668 = vmatpush2.msra.mxu0 0.0
        %2669 = vmatprep.subr.mxu0 0.0
        %2670 = vmatpush2.msra.mxu0 0.0
        %2671 = vmatprep.mubr.f32.mxu0 0.0
        %2672 = vmatmul.mubr.f32.gmra.mxu0 %v2602
        %v2673 = vpop.f32.mrf.mxu0
        %v2674 = vadd.f32 0.0, %v2673
        %v2675 = vpop.f32.mrf.mxu0
        %2676 = vmatprep.mubr.f32.mxu0 0.0
        %2677 = vmatmul.mubr.f32.gmra.mxu0 %v2605
        %v2678 = vpop.f32.mrf.mxu0
        %v2679 = vadd.f32 0.0, %v2678
        %v2680 = vpop.f32.mrf.mxu0
        %2681 = vdwg.mxu0
        %2686 = vrot.lane.b32.xlu0 %v1777, 32
        %v2687 = vpop.permute.xlu0 %2686
        %2688 = vrot.lane.b32.xlu0 %v1782, 32
        %v2689 = vpop.permute.xlu0 %2688
        %2690 = vrot.lane.b32.xlu0 %v1866, 32
        %v2691 = vpop.permute.xlu0 %2690
        %2692 = vrot.lane.b32.xlu0 %v1871, 32
        %v2693 = vpop.permute.xlu0 %2692
        %2702 = vrot.lane.b32.xlu0 %v2183, 64
        %v2703 = vpop.permute.xlu0 %2702
        %2704 = vrot.lane.b32.xlu0 %v2188, 64
        %v2705 = vpop.permute.xlu0 %2704
        %2706 = vrot.lane.b32.xlu0 %v2270, 64
        %v2707 = vpop.permute.xlu0 %2706
        %2708 = vrot.lane.b32.xlu0 %v2275, 64
        %v2709 = vpop.permute.xlu0 %2708
        %2718 = vrot.lane.b32.xlu0 %v2587, 96
        %v2719 = vpop.permute.xlu0 %2718
        %2720 = vrot.lane.b32.xlu0 %v2592, 96
        %v2721 = vpop.permute.xlu0 %2720
        %2722 = vrot.lane.b32.xlu0 %v2674, 96
        %v2723 = vpop.permute.xlu0 %2722
        %2724 = vrot.lane.b32.xlu0 %v2679, 96
        %v2725 = vpop.permute.xlu0 %2724
        %v2730 = vsel %vm1080, %v1377, %v2687
        %v2731 = vsel %vm1080, %v1382, %v2689
        %v2732 = vsel %vm1080, %v1458, %v2691
        %v2733 = vsel %vm1080, %v1463, %v2693
        %vm2734 = vcmask 523264
        %v2735 = vsel %vm2734, %v2730, %v2703
        %v2736 = vsel %vm2734, %v2731, %v2705
        %v2737 = vsel %vm2734, %v2732, %v2707
        %v2738 = vsel %vm2734, %v2733, %v2709
        %vm2739 = vcmask 785408
        %v2740 = vsel %vm2739, %v2735, %v2719
        %v2741 = vsel %vm2739, %v2736, %v2721
        %v2742 = vsel %vm2739, %v2737, %v2723
        %v2743 = vsel %vm2739, %v2738, %v2725
        %v2744 = vpack.c.bf16 %v2741, %v2740
        %v2745 = vpack.c.bf16 %v2743, %v2742
        %v2746 = vld [vmem:[%s652] sm:$0xf]
        %v2747 = vld [vmem:[%s652 + $0x4] sm:$0xf]
        %v2748 = vld [vmem:[%s652 + $0x8] sm:$0xf]
        %v2749 = vld [vmem:[%s652 + $0xc] sm:$0xf]
        %v2750 = vld [vmem:[%s652 + $0x10] sm:$0xf]
        %v2751 = vld [vmem:[%s652 + $0x14] sm:$0xf]
        %v2752 = vld [vmem:[%s652 + $0x18] sm:$0xf]
        %v2753 = vld [vmem:[%s652 + $0x1c] sm:$0xf]
        %v2754 = vld [vmem:[%s652 + $0x20] sm:$0xf]
        %v2755 = vld [vmem:[%s652 + $0x24] sm:$0xf]
        %v2756 = vld [vmem:[%s652 + $0x28] sm:$0xf]
        %v2757 = vld [vmem:[%s652 + $0x2c] sm:$0xf]
        %v2758 = vld [vmem:[%s652 + $0x30] sm:$0xf]
        %v2759 = vld [vmem:[%s652 + $0x34] sm:$0xf]
        %v2760 = vld [vmem:[%s652 + $0x38] sm:$0xf]
        %v2761 = vld [vmem:[%s652 + $0x3c] sm:$0xf]
        %v2762 = vld [vmem:[%s755] sm:$0x1]
        %v2764 = vlaneseq
        %v2765 = vshrl.u32 %v2764, 7
        %v2766 = vsub.s32 0, %v2765
        %v2767 = vrot.slane %v2762, %v2766
        %v2785 = vunpack.c.l.b16 %v2746
        %v2786 = vunpack.c.l.b16 %v2747
        %v2787 = vunpack.c.l.b16 %v2748
        %v2788 = vunpack.c.l.b16 %v2749
        %v2789 = vunpack.c.l.b16 %v2750
        %v2790 = vunpack.c.l.b16 %v2751
        %v2791 = vunpack.c.l.b16 %v2752
        %v2792 = vunpack.c.l.b16 %v2753
        %v2793 = vunpack.c.l.b16 %v2754
        %v2794 = vunpack.c.l.b16 %v2755
        %v2795 = vunpack.c.l.b16 %v2756
        %v2796 = vunpack.c.l.b16 %v2757
        %v2797 = vunpack.c.l.b16 %v2758
        %v2798 = vunpack.c.l.b16 %v2759
        %v2799 = vunpack.c.l.b16 %v2760
        %v2800 = vunpack.c.l.b16 %v2761
        %v2801 = vpack.c.b16 %v2786, %v2785
        %v2802 = vpack.c.b16 %v2788, %v2787
        %v2803 = vpack.c.b16 %v2790, %v2789
        %v2804 = vpack.c.b16 %v2792, %v2791
        %v2805 = vpack.c.b16 %v2794, %v2793
        %v2806 = vpack.c.b16 %v2796, %v2795
        %v2807 = vpack.c.b16 %v2798, %v2797
        %v2808 = vpack.c.b16 %v2800, %v2799
        %2817 = vmatprep.subr.bf16.mxu0 0
        %2818 = vmatpush1.bf16.msra.mxu0 %v2808
        %2819 = vmatprep.subr.bf16.mxu0 0
        %2820 = vmatpush1.bf16.msra.mxu0 %v2807
        %2821 = vmatprep.subr.bf16.mxu0 0
        %2822 = vmatpush1.bf16.msra.mxu0 %v2806
        %2823 = vmatprep.subr.bf16.mxu0 0
        %2824 = vmatpush1.bf16.msra.mxu0 %v2805
        %2825 = vmatprep.subr.bf16.mxu0 0
        %2826 = vmatpush1.bf16.msra.mxu0 %v2804
        %2827 = vmatprep.subr.bf16.mxu0 0
        %2828 = vmatpush1.bf16.msra.mxu0 %v2803
        %2829 = vmatprep.subr.bf16.mxu0 0
        %2830 = vmatpush1.bf16.msra.mxu0 %v2802
        %2831 = vmatprep.subr.bf16.mxu0 0
        %2832 = vmatpush1.bf16.msra.mxu0 %v2801
        %2833 = vmatprep.subr.bf16.mxu0 0
        %2834 = vmatpush2.bf16.msra.mxu0 0
        %2835 = vmatprep.subr.bf16.mxu0 0
        %2836 = vmatpush2.bf16.msra.mxu0 0
        %2837 = vmatprep.subr.bf16.mxu0 0
        %2838 = vmatpush2.bf16.msra.mxu0 0
        %2839 = vmatprep.subr.bf16.mxu0 0
        %2840 = vmatpush2.bf16.msra.mxu0 0
        %2841 = vmatprep.subr.bf16.mxu0 0
        %2842 = vmatpush2.bf16.msra.mxu0 0
        %2843 = vmatprep.subr.bf16.mxu0 0
        %2844 = vmatpush2.bf16.msra.mxu0 0
        %2845 = vmatprep.subr.bf16.mxu0 0
        %2846 = vmatpush2.bf16.msra.mxu0 0
        %2847 = vmatprep.subr.bf16.mxu0 0
        %2848 = vmatpush2.bf16.msra.mxu0 0
        %2849 = vmatprep.mubr.bf16.mxu0 0
        %2850 = vmatmul.mubr.bf16.gmra.mxu0 %v2744
        %v2851 = vpop.f32.mrf.mxu0
        %v2852 = vadd.f32 %v2767, %v2851
        %v2853 = vpop.f32.mrf.mxu0
        %v2854 = vpop.f32.mrf.mxu0
        %v2855 = vadd.f32 %v2767, %v2854
        %v2856 = vpop.f32.mrf.mxu0
        %2857 = vmatprep.mubr.bf16.mxu0 0
        %2858 = vmatmul.mubr.bf16.gmra.mxu0 %v2745
        %v2859 = vpop.f32.mrf.mxu0
        %v2860 = vadd.f32 %v2767, %v2859
        %v2861 = vpop.f32.mrf.mxu0
        %v2862 = vpop.f32.mrf.mxu0
        %v2863 = vadd.f32 %v2767, %v2862
        %v2864 = vpop.f32.mrf.mxu0
        %2865 = vdwg.mxu0
        %v2866 = vadd.f32 %v827, %v2852
        %v2867 = vadd.f32 %v828, %v2855
        %v2868 = vadd.f32 %v829, %v2860
        %v2869 = vadd.f32 %v830, %v2863
        %v2870 = vld [vmem:[%s758] sm:$0x1]
        %v2871 = vld [vmem:[%s761] sm:$0x1]
        %2872 = vadd.xlane.f32.xlu0 %v2866
        %v2873 = vpop.xlane.xlu0 %2872
        %2874 = vadd.xlane.f32.xlu0 %v2867
        %v2875 = vpop.xlane.xlu0 %2874
        %2876 = vadd.xlane.f32.xlu0 %v2868
        %v2877 = vpop.xlane.xlu0 %2876
        %2878 = vadd.xlane.f32.xlu0 %v2869
        %v2879 = vpop.xlane.xlu0 %2878
        %v2880 = vrcp.pop 128.0
        %v2881 = vmul.f32 %v2873, %v2880
        %v2882 = vmul.f32 %v2875, %v2880
        %v2883 = vmul.f32 %v2877, %v2880
        %v2884 = vmul.f32 %v2879, %v2880
        %v2885 = vsub.f32 %v2866, %v2881
        %v2886 = vsub.f32 %v2867, %v2882
        %v2887 = vsub.f32 %v2868, %v2883
        %v2888 = vsub.f32 %v2869, %v2884
        %v2889 = vmul.f32 %v2885, %v2885
        %v2890 = vmul.f32 %v2886, %v2886
        %v2891 = vmul.f32 %v2887, %v2887
        %v2892 = vmul.f32 %v2888, %v2888
        %2893 = vadd.xlane.f32.xlu0 %v2889
        %v2894 = vpop.xlane.xlu0 %2893
        %2895 = vadd.xlane.f32.xlu0 %v2890
        %v2896 = vpop.xlane.xlu0 %2895
        %2897 = vadd.xlane.f32.xlu0 %v2891
        %v2898 = vpop.xlane.xlu0 %2897
        %2899 = vadd.xlane.f32.xlu0 %v2892
        %v2900 = vpop.xlane.xlu0 %2899
        %v2901 = vmul.f32 %v2894, %v2880
        %v2902 = vmul.f32 %v2896, %v2880
        %v2903 = vmul.f32 %v2898, %v2880
        %v2904 = vmul.f32 %v2900, %v2880
        %v2905 = vadd.f32 %v2901, 1e-05
        %v2906 = vadd.f32 %v2902, 1e-05
        %v2907 = vadd.f32 %v2903, 1e-05
        %v2908 = vadd.f32 %v2904, 1e-05
        %v2909 = vrsqrt.pop %v2905
        %v2910 = vrsqrt.pop %v2906
        %v2911 = vrsqrt.pop %v2907
        %v2912 = vrsqrt.pop %v2908
        %v2913 = vmul.f32 %v2885, %v2909
        %v2914 = vmul.f32 %v2886, %v2910
        %v2915 = vmul.f32 %v2887, %v2911
        %v2916 = vmul.f32 %v2888, %v2912
        %v2918 = vlaneseq
        %v2919 = vshrl.u32 %v2918, 7
        %v2920 = vsub.s32 0, %v2919
        %v2921 = vrot.slane %v2870, %v2920
        %v2923 = vmul.f32 %v2913, %v2921
        %v2924 = vmul.f32 %v2914, %v2921
        %v2925 = vmul.f32 %v2915, %v2921
        %v2926 = vmul.f32 %v2916, %v2921
        %v2928 = vlaneseq
        %v2929 = vshrl.u32 %v2928, 7
        %v2930 = vsub.s32 0, %v2929
        %v2931 = vrot.slane %v2871, %v2930
        %v2933 = vadd.f32 %v2923, %v2931
        %v2934 = vadd.f32 %v2924, %v2931
        %v2935 = vadd.f32 %v2925, %v2931
        %v2936 = vadd.f32 %v2926, %v2931
        %v2937 = vpack.c.bf16 %v2934, %v2933
        %v2938 = vpack.c.bf16 %v2936, %v2935
        %v2939 = vld [vmem:[%s661] sm:$0xff]
        %v2940 = vld [vmem:[%s661 + $0x8] sm:$0xff]
        %v2941 = vld [vmem:[%s661 + $0x10] sm:$0xff]
        %v2942 = vld [vmem:[%s661 + $0x18] sm:$0xff]
        %v2943 = vld [vmem:[%s661 + $0x20] sm:$0xff]
        %v2944 = vld [vmem:[%s661 + $0x28] sm:$0xff]
        %v2945 = vld [vmem:[%s661 + $0x30] sm:$0xff]
        %v2946 = vld [vmem:[%s661 + $0x38] sm:$0xff]
        %v2947 = vld [vmem:[%s661 + $0x40] sm:$0xff]
        %v2948 = vld [vmem:[%s661 + $0x48] sm:$0xff]
        %v2949 = vld [vmem:[%s661 + $0x50] sm:$0xff]
        %v2950 = vld [vmem:[%s661 + $0x58] sm:$0xff]
        %v2951 = vld [vmem:[%s661 + $0x60] sm:$0xff]
        %v2952 = vld [vmem:[%s661 + $0x68] sm:$0xff]
        %v2953 = vld [vmem:[%s661 + $0x70] sm:$0xff]
        %v2954 = vld [vmem:[%s661 + $0x78] sm:$0xff]
        %v2955 = vld [vmem:[%s765] sm:$0x3]
        %v2957 = vlaneseq
        %v2958 = vshrl.u32 %v2957, 7
        %v2959 = vsub.s32 0, %v2958
        %v2960 = vrot.slane %v2955, %v2959
        %v2961 = vlaneseq
        %v2962 = vshrl.u32 %v2961, 7
        %v2963 = vsub.s32 1, %v2962
        %v2964 = vrot.slane %v2955, %v2963
        %v2983 = vunpack.c.l.b16 %v2939
        %v2984 = vunpack.c.h.b16 %v2939
        %v2985 = vunpack.c.l.b16 %v2940
        %v2986 = vunpack.c.h.b16 %v2940
        %v2987 = vunpack.c.l.b16 %v2941
        %v2988 = vunpack.c.h.b16 %v2941
        %v2989 = vunpack.c.l.b16 %v2942
        %v2990 = vunpack.c.h.b16 %v2942
        %v2991 = vunpack.c.l.b16 %v2943
        %v2992 = vunpack.c.h.b16 %v2943
        %v2993 = vunpack.c.l.b16 %v2944
        %v2994 = vunpack.c.h.b16 %v2944
        %v2995 = vunpack.c.l.b16 %v2945
        %v2996 = vunpack.c.h.b16 %v2945
        %v2997 = vunpack.c.l.b16 %v2946
        %v2998 = vunpack.c.h.b16 %v2946
        %v2999 = vunpack.c.l.b16 %v2947
        %v3000 = vunpack.c.h.b16 %v2947
        %v3001 = vunpack.c.l.b16 %v2948
        %v3002 = vunpack.c.h.b16 %v2948
        %v3003 = vunpack.c.l.b16 %v2949
        %v3004 = vunpack.c.h.b16 %v2949
        %v3005 = vunpack.c.l.b16 %v2950
        %v3006 = vunpack.c.h.b16 %v2950
        %v3007 = vunpack.c.l.b16 %v2951
        %v3008 = vunpack.c.h.b16 %v2951
        %v3009 = vunpack.c.l.b16 %v2952
        %v3010 = vunpack.c.h.b16 %v2952
        %v3011 = vunpack.c.l.b16 %v2953
        %v3012 = vunpack.c.h.b16 %v2953
        %v3013 = vunpack.c.l.b16 %v2954
        %v3014 = vunpack.c.h.b16 %v2954
        %v3015 = vpack.c.b16 %v2985, %v2983
        %v3016 = vpack.c.b16 %v2986, %v2984
        %v3017 = vpack.c.b16 %v2989, %v2987
        %v3018 = vpack.c.b16 %v2990, %v2988
        %v3019 = vpack.c.b16 %v2993, %v2991
        %v3020 = vpack.c.b16 %v2994, %v2992
        %v3021 = vpack.c.b16 %v2997, %v2995
        %v3022 = vpack.c.b16 %v2998, %v2996
        %v3023 = vpack.c.b16 %v3001, %v2999
        %v3024 = vpack.c.b16 %v3002, %v3000
        %v3025 = vpack.c.b16 %v3005, %v3003
        %v3026 = vpack.c.b16 %v3006, %v3004
        %v3027 = vpack.c.b16 %v3009, %v3007
        %v3028 = vpack.c.b16 %v3010, %v3008
        %v3029 = vpack.c.b16 %v3013, %v3011
        %v3030 = vpack.c.b16 %v3014, %v3012
        %3047 = vmatprep.subr.bf16.mxu0 %v3030
        %3048 = vmatpush1.bf16.msra.mxu0 %v3029
        %3049 = vmatprep.subr.bf16.mxu0 %v3028
        %3050 = vmatpush1.bf16.msra.mxu0 %v3027
        %3051 = vmatprep.subr.bf16.mxu0 %v3026
        %3052 = vmatpush1.bf16.msra.mxu0 %v3025
        %3053 = vmatprep.subr.bf16.mxu0 %v3024
        %3054 = vmatpush1.bf16.msra.mxu0 %v3023
        %3055 = vmatprep.subr.bf16.mxu0 %v3022
        %3056 = vmatpush1.bf16.msra.mxu0 %v3021
        %3057 = vmatprep.subr.bf16.mxu0 %v3020
        %3058 = vmatpush1.bf16.msra.mxu0 %v3019
        %3059 = vmatprep.subr.bf16.mxu0 %v3018
        %3060 = vmatpush1.bf16.msra.mxu0 %v3017
        %3061 = vmatprep.subr.bf16.mxu0 %v3016
        %3062 = vmatpush1.bf16.msra.mxu0 %v3015
        %3063 = vmatprep.subr.bf16.mxu0 0
        %3064 = vmatpush2.bf16.msra.mxu0 0
        %3065 = vmatprep.subr.bf16.mxu0 0
        %3066 = vmatpush2.bf16.msra.mxu0 0
        %3067 = vmatprep.subr.bf16.mxu0 0
        %3068 = vmatpush2.bf16.msra.mxu0 0
        %3069 = vmatprep.subr.bf16.mxu0 0
        %3070 = vmatpush2.bf16.msra.mxu0 0
        %3071 = vmatprep.subr.bf16.mxu0 0
        %3072 = vmatpush2.bf16.msra.mxu0 0
        %3073 = vmatprep.subr.bf16.mxu0 0
        %3074 = vmatpush2.bf16.msra.mxu0 0
        %3075 = vmatprep.subr.bf16.mxu0 0
        %3076 = vmatpush2.bf16.msra.mxu0 0
        %3077 = vmatprep.subr.bf16.mxu0 0
        %3078 = vmatpush2.bf16.msra.mxu0 0
        %3079 = vmatprep.mubr.bf16.mxu0 0
        %3080 = vmatmul.mubr.bf16.gmra.mxu0 %v2937
        %v3081 = vpop.f32.mrf.mxu0
        %v3082 = vadd.f32 %v2960, %v3081
        %v3083 = vpop.f32.mrf.mxu0
        %v3084 = vadd.f32 %v2964, %v3083
        %v3085 = vpop.f32.mrf.mxu0
        %v3086 = vadd.f32 %v2960, %v3085
        %v3087 = vpop.f32.mrf.mxu0
        %v3088 = vadd.f32 %v2964, %v3087
        %3089 = vmatprep.mubr.bf16.mxu0 0
        %3090 = vmatmul.mubr.bf16.gmra.mxu0 %v2938
        %v3091 = vpop.f32.mrf.mxu0
        %v3092 = vadd.f32 %v2960, %v3091
        %v3093 = vpop.f32.mrf.mxu0
        %v3094 = vadd.f32 %v2964, %v3093
        %v3095 = vpop.f32.mrf.mxu0
        %v3096 = vadd.f32 %v2960, %v3095
        %v3097 = vpop.f32.mrf.mxu0
        %v3098 = vadd.f32 %v2964, %v3097
        %3099 = vdwg.mxu0
        %v3100 = vmax.f32 %v3082, 0.0
        %v3101 = vmax.f32 %v3084, 0.0
        %v3102 = vmax.f32 %v3086, 0.0
        %v3103 = vmax.f32 %v3088, 0.0
        %v3104 = vmax.f32 %v3092, 0.0
        %v3105 = vmax.f32 %v3094, 0.0
        %v3106 = vmax.f32 %v3096, 0.0
        %v3107 = vmax.f32 %v3098, 0.0
        %v3108 = vpack.c.bf16 %v3102, %v3100
        %v3109 = vpack.c.bf16 %v3103, %v3101
        %v3110 = vpack.c.bf16 %v3106, %v3104
        %v3111 = vpack.c.bf16 %v3107, %v3105
        %v3112 = vld [vmem:[%s670] sm:$0xf]
        %v3113 = vld [vmem:[%s670 + $0x4] sm:$0xf]
        %v3114 = vld [vmem:[%s670 + $0x8] sm:$0xf]
        %v3115 = vld [vmem:[%s670 + $0xc] sm:$0xf]
        %v3116 = vld [vmem:[%s670 + $0x10] sm:$0xf]
        %v3117 = vld [vmem:[%s670 + $0x14] sm:$0xf]
        %v3118 = vld [vmem:[%s670 + $0x18] sm:$0xf]
        %v3119 = vld [vmem:[%s670 + $0x1c] sm:$0xf]
        %v3120 = vld [vmem:[%s670 + $0x20] sm:$0xf]
        %v3121 = vld [vmem:[%s670 + $0x24] sm:$0xf]
        %v3122 = vld [vmem:[%s670 + $0x28] sm:$0xf]
        %v3123 = vld [vmem:[%s670 + $0x2c] sm:$0xf]
        %v3124 = vld [vmem:[%s670 + $0x30] sm:$0xf]
        %v3125 = vld [vmem:[%s670 + $0x34] sm:$0xf]
        %v3126 = vld [vmem:[%s670 + $0x38] sm:$0xf]
        %v3127 = vld [vmem:[%s670 + $0x3c] sm:$0xf]
        %v3128 = vld [vmem:[%s670 + $0x40] sm:$0xf]
        %v3129 = vld [vmem:[%s670 + $0x44] sm:$0xf]
        %v3130 = vld [vmem:[%s670 + $0x48] sm:$0xf]
        %v3131 = vld [vmem:[%s670 + $0x4c] sm:$0xf]
        %v3132 = vld [vmem:[%s670 + $0x50] sm:$0xf]
        %v3133 = vld [vmem:[%s670 + $0x54] sm:$0xf]
        %v3134 = vld [vmem:[%s670 + $0x58] sm:$0xf]
        %v3135 = vld [vmem:[%s670 + $0x5c] sm:$0xf]
        %v3136 = vld [vmem:[%s670 + $0x60] sm:$0xf]
        %v3137 = vld [vmem:[%s670 + $0x64] sm:$0xf]
        %v3138 = vld [vmem:[%s670 + $0x68] sm:$0xf]
        %v3139 = vld [vmem:[%s670 + $0x6c] sm:$0xf]
        %v3140 = vld [vmem:[%s670 + $0x70] sm:$0xf]
        %v3141 = vld [vmem:[%s670 + $0x74] sm:$0xf]
        %v3142 = vld [vmem:[%s670 + $0x78] sm:$0xf]
        %v3143 = vld [vmem:[%s670 + $0x7c] sm:$0xf]
        %v3144 = vld [vmem:[%s768] sm:$0x1]
        %v3146 = vlaneseq
        %v3147 = vshrl.u32 %v3146, 7
        %v3148 = vsub.s32 0, %v3147
        %v3149 = vrot.slane %v3144, %v3148
        %v3183 = vunpack.c.l.b16 %v3112
        %v3184 = vunpack.c.l.b16 %v3113
        %v3185 = vunpack.c.l.b16 %v3114
        %v3186 = vunpack.c.l.b16 %v3115
        %v3187 = vunpack.c.l.b16 %v3116
        %v3188 = vunpack.c.l.b16 %v3117
        %v3189 = vunpack.c.l.b16 %v3118
        %v3190 = vunpack.c.l.b16 %v3119
        %v3191 = vunpack.c.l.b16 %v3120
        %v3192 = vunpack.c.l.b16 %v3121
        %v3193 = vunpack.c.l.b16 %v3122
        %v3194 = vunpack.c.l.b16 %v3123
        %v3195 = vunpack.c.l.b16 %v3124
        %v3196 = vunpack.c.l.b16 %v3125
        %v3197 = vunpack.c.l.b16 %v3126
        %v3198 = vunpack.c.l.b16 %v3127
        %v3199 = vunpack.c.l.b16 %v3128
        %v3200 = vunpack.c.l.b16 %v3129
        %v3201 = vunpack.c.l.b16 %v3130
        %v3202 = vunpack.c.l.b16 %v3131
        %v3203 = vunpack.c.l.b16 %v3132
        %v3204 = vunpack.c.l.b16 %v3133
        %v3205 = vunpack.c.l.b16 %v3134
        %v3206 = vunpack.c.l.b16 %v3135
        %v3207 = vunpack.c.l.b16 %v3136
        %v3208 = vunpack.c.l.b16 %v3137
        %v3209 = vunpack.c.l.b16 %v3138
        %v3210 = vunpack.c.l.b16 %v3139
        %v3211 = vunpack.c.l.b16 %v3140
        %v3212 = vunpack.c.l.b16 %v3141
        %v3213 = vunpack.c.l.b16 %v3142
        %v3214 = vunpack.c.l.b16 %v3143
        %v3215 = vpack.c.b16 %v3184, %v3183
        %v3216 = vpack.c.b16 %v3186, %v3185
        %v3217 = vpack.c.b16 %v3188, %v3187
        %v3218 = vpack.c.b16 %v3190, %v3189
        %v3219 = vpack.c.b16 %v3192, %v3191
        %v3220 = vpack.c.b16 %v3194, %v3193
        %v3221 = vpack.c.b16 %v3196, %v3195
        %v3222 = vpack.c.b16 %v3198, %v3197
        %v3223 = vpack.c.b16 %v3200, %v3199
        %v3224 = vpack.c.b16 %v3202, %v3201
        %v3225 = vpack.c.b16 %v3204, %v3203
        %v3226 = vpack.c.b16 %v3206, %v3205
        %v3227 = vpack.c.b16 %v3208, %v3207
        %v3228 = vpack.c.b16 %v3210, %v3209
        %v3229 = vpack.c.b16 %v3212, %v3211
        %v3230 = vpack.c.b16 %v3214, %v3213
        %3247 = vmatprep.subr.bf16.mxu0 0
        %3248 = vmatpush1.bf16.msra.mxu0 %v3222
        %3249 = vmatprep.subr.bf16.mxu0 0
        %3250 = vmatpush1.bf16.msra.mxu0 %v3221
        %3251 = vmatprep.subr.bf16.mxu0 0
        %3252 = vmatpush1.bf16.msra.mxu0 %v3220
        %3253 = vmatprep.subr.bf16.mxu0 0
        %3254 = vmatpush1.bf16.msra.mxu0 %v3219
        %3255 = vmatprep.subr.bf16.mxu0 0
        %3256 = vmatpush1.bf16.msra.mxu0 %v3218
        %3257 = vmatprep.subr.bf16.mxu0 0
        %3258 = vmatpush1.bf16.msra.mxu0 %v3217
        %3259 = vmatprep.subr.bf16.mxu0 0
        %3260 = vmatpush1.bf16.msra.mxu0 %v3216
        %3261 = vmatprep.subr.bf16.mxu0 0
        %3262 = vmatpush1.bf16.msra.mxu0 %v3215
        %3263 = vmatprep.subr.bf16.mxu0 0
        %3264 = vmatpush2.bf16.msra.mxu0 %v3230
        %3265 = vmatprep.subr.bf16.mxu0 0
        %3266 = vmatpush2.bf16.msra.mxu0 %v3229
        %3267 = vmatprep.subr.bf16.mxu0 0
        %3268 = vmatpush2.bf16.msra.mxu0 %v3228
        %3269 = vmatprep.subr.bf16.mxu0 0
        %3270 = vmatpush2.bf16.msra.mxu0 %v3227
        %3271 = vmatprep.subr.bf16.mxu0 0
        %3272 = vmatpush2.bf16.msra.mxu0 %v3226
        %3273 = vmatprep.subr.bf16.mxu0 0
        %3274 = vmatpush2.bf16.msra.mxu0 %v3225
        %3275 = vmatprep.subr.bf16.mxu0 0
        %3276 = vmatpush2.bf16.msra.mxu0 %v3224
        %3277 = vmatprep.subr.bf16.mxu0 0
        %3278 = vmatpush2.bf16.msra.mxu0 %v3223
        %3279 = vmatprep.mubr.bf16.mxu0 %v3109
        %3280 = vmatmul.mubr.bf16.gmra.mxu0 %v3108
        %v3281 = vpop.f32.mrf.mxu0
        %v3282 = vadd.f32 %v3149, %v3281
        %v3283 = vpop.f32.mrf.mxu0
        %v3284 = vpop.f32.mrf.mxu0
        %v3285 = vadd.f32 %v3149, %v3284
        %v3286 = vpop.f32.mrf.mxu0
        %3287 = vmatprep.mubr.bf16.mxu0 %v3111
        %3288 = vmatmul.mubr.bf16.gmra.mxu0 %v3110
        %v3289 = vpop.f32.mrf.mxu0
        %v3290 = vadd.f32 %v3149, %v3289
        %v3291 = vpop.f32.mrf.mxu0
        %v3292 = vpop.f32.mrf.mxu0
        %v3293 = vadd.f32 %v3149, %v3292
        %v3294 = vpop.f32.mrf.mxu0
        %3295 = vdwg.mxu0
        %v3296 = vadd.f32 %v2933, %v3282
        %v3297 = vadd.f32 %v2934, %v3285
        %v3298 = vadd.f32 %v2935, %v3290
        %v3299 = vadd.f32 %v2936, %v3293
        %v3300 = vld [vmem:[%s771] sm:$0x1]
        %v3301 = vld [vmem:[%s774] sm:$0x1]
        %3302 = vadd.xlane.f32.xlu0 %v3296
        %v3303 = vpop.xlane.xlu0 %3302
        %3304 = vadd.xlane.f32.xlu0 %v3297
        %v3305 = vpop.xlane.xlu0 %3304
        %3306 = vadd.xlane.f32.xlu0 %v3298
        %v3307 = vpop.xlane.xlu0 %3306
        %3308 = vadd.xlane.f32.xlu0 %v3299
        %v3309 = vpop.xlane.xlu0 %3308
        %v3310 = vmul.f32 %v3303, %v2880
        %v3311 = vmul.f32 %v3305, %v2880
        %v3312 = vmul.f32 %v3307, %v2880
        %v3313 = vmul.f32 %v3309, %v2880
        %v3314 = vsub.f32 %v3296, %v3310
        %v3315 = vsub.f32 %v3297, %v3311
        %v3316 = vsub.f32 %v3298, %v3312
        %v3317 = vsub.f32 %v3299, %v3313
        %v3318 = vmul.f32 %v3314, %v3314
        %v3319 = vmul.f32 %v3315, %v3315
        %v3320 = vmul.f32 %v3316, %v3316
        %v3321 = vmul.f32 %v3317, %v3317
        %3322 = vadd.xlane.f32.xlu0 %v3318
        %v3323 = vpop.xlane.xlu0 %3322
        %3324 = vadd.xlane.f32.xlu0 %v3319
        %v3325 = vpop.xlane.xlu0 %3324
        %3326 = vadd.xlane.f32.xlu0 %v3320
        %v3327 = vpop.xlane.xlu0 %3326
        %3328 = vadd.xlane.f32.xlu0 %v3321
        %v3329 = vpop.xlane.xlu0 %3328
        %v3330 = vmul.f32 %v3323, %v2880
        %v3331 = vmul.f32 %v3325, %v2880
        %v3332 = vmul.f32 %v3327, %v2880
        %v3333 = vmul.f32 %v3329, %v2880
        %v3334 = vadd.f32 %v3330, 1e-05
        %v3335 = vadd.f32 %v3331, 1e-05
        %v3336 = vadd.f32 %v3332, 1e-05
        %v3337 = vadd.f32 %v3333, 1e-05
        %v3338 = vrsqrt.pop %v3334
        %v3339 = vrsqrt.pop %v3335
        %v3340 = vrsqrt.pop %v3336
        %v3341 = vrsqrt.pop %v3337
        %v3342 = vmul.f32 %v3314, %v3338
        %v3343 = vmul.f32 %v3315, %v3339
        %v3344 = vmul.f32 %v3316, %v3340
        %v3345 = vmul.f32 %v3317, %v3341
        %v3347 = vlaneseq
        %v3348 = vshrl.u32 %v3347, 7
        %v3349 = vsub.s32 0, %v3348
        %v3350 = vrot.slane %v3300, %v3349
        %v3352 = vmul.f32 %v3342, %v3350
        %v3353 = vmul.f32 %v3343, %v3350
        %v3354 = vmul.f32 %v3344, %v3350
        %v3355 = vmul.f32 %v3345, %v3350
        %v3357 = vlaneseq
        %v3358 = vshrl.u32 %v3357, 7
        %v3359 = vsub.s32 0, %v3358
        %v3360 = vrot.slane %v3301, %v3359
        %v3362 = vadd.f32 %v3352, %v3360
        %v3363 = vadd.f32 %v3353, %v3360
        %v3364 = vadd.f32 %v3354, %v3360
        %v3365 = vadd.f32 %v3355, %v3360
        %3366 = vst [vmem:[#allocation12] sm:$0xff] %v3362
        %3367 = vst [vmem:[#allocation12 + $0x8] sm:$0xff] %v3363
        %3368 = vst [vmem:[#allocation12 + $0x10] sm:$0xff] %v3364
        %3369 = vst [vmem:[#allocation12 + $0x18] sm:$0xff] %v3365
        // Predicated region
        $region109: #{tpu_custom_call.1} parent=75 // pred_check
          %p3370 = pneg %p417
        $region110: #{tpu_custom_call.1} parent=75 // pred_check_branch
          %3372 = sbr.rel (%p3370) target = $region112
        $region111: #{tpu_custom_call.1} parent=75 // pred_region
          %s3373 = smul.u32 2, %s32
          %s3375 = ssub.s32 512, 512
          %3376 = vsyncadd [#allocation4], %s3375
          %s3377 = smul.addr %s3373, 2
          %s3378 = smul.addr %s3377, 128
          %s3379 = scalar_lea.hbm %s14, %s3378
          %s3380 = sshll.u32 [#allocation12], 4
          %s3381 = int_to_ptr.vmem [resolvable:$true] %s3380
          %3386 = dma.vmem_to_hbm [thread:$0]  %s3381, 512, %s3379, [#allocation4], 128, 128, 8
        $region112: #{tpu_custom_call.1} parent=75 // pred_fallthru
          _
        // Predicated region
        $region113: #{tpu_custom_call.1} parent=75 // pred_check
          %p3387 = pneg %p417
        $region114: #{tpu_custom_call.1} parent=75 // pred_check_branch
          %3389 = sbr.rel (%p3387) target = $region116
        $region115: #{tpu_custom_call.1} parent=75 // pred_region
          %3390 = dma.done [#allocation4], 512
        $region116: #{tpu_custom_call.1} parent=75 // pred_fallthru
          _
      $region76: #{tpu_custom_call.1} parent=5 // pred_fallthru
        _
      %p3391 = scmp.le.s32.totalorder 2, %s23
      // Predicated region
      $region117: #{tpu_custom_call.1} parent=5 // pred_check
        %p3392 = pneg %p3391
      $region118: #{tpu_custom_call.1} parent=5 // pred_check_branch
        %3394 = sbr.rel (%p3392) target = $region120
      $region119: #{tpu_custom_call.1} parent=5 // pred_region
        %s3395 = ssub.s32 %s23, 2
      $region120: #{tpu_custom_call.1} parent=5 // pred_fallthru
        _
    $region6: #{tpu_custom_call.1} parent=1 // loop_footer
      %s27 = sadd.s32 1, %s23
    $region7: #{tpu_custom_call.1} parent=1 // loop_footer_branch
      %22 = sbr.rel target = $region3
    $region8: #{tpu_custom_call.1} parent=1 // loop_exit
      _
    %3396 = vsyncpa [#allocation3], 1
    %s3397 = scalar_lea.sflag [#allocation3], 1
    %3398 = vsyncpa %s3397, 1
    %3399 = vsyncpa [#allocation6], 1
    %3400 = vsyncpa [#allocation4], 1
    %s3401 = scalar_lea.sflag [#allocation4], 1
    %3402 = vsyncpa %s3401, 1

</llo_original>
